<compile_context>
chip_gen: v6e
topology: v6e:2x2x1
jax: 0.10.0
libtpu: 0.0.40
codegen_flags: <defaults>
</compile_context>

<pallas_src>
import functools

import jax
import jax.numpy as jnp
from jax.experimental import pallas as pl
from jax.experimental.pallas import tpu as pltpu


# ----------------------------------------------------------------------------
# Small helpers
# ----------------------------------------------------------------------------
def _round_up(x, m):
    return ((x + m - 1) // m) * m


def _vmem_budget_bytes():
    """Per-chip VMEM budget for one conv working set (conservative)."""
    try:
        info = pltpu.get_tpu_info()
        cap = getattr(info, "vmem_capacity_bytes", None)
        if cap:
            return int(cap) // 4           # headroom for double-buffering
    except Exception:
        pass
    return 16 * 1024 * 1024                # fits the default scoped limit everywhere


def _conv_vmem_estimate(th, wp, cin, cout):
    tl = th * wp
    return (2 * tl * cin * 2               # double-buffered input block (bf16)
            + 2 * tl * cout * 2            # double-buffered output block (bf16)
            + tl * cout * 4                # f32 accumulator
            + (tl + 3 * wp + 1) * cin * 2  # assembled halo scratch (bf16)
            + 9 * cin * cout * 2)          # resident weights


def _choose_row_tile(H, Wp, cin, cout):
    """Largest even divisor of H whose working set fits the per-chip budget."""
    if H % 2:
        return H                           # degenerate single tile
    budget = _vmem_budget_bytes()
    divs = [d for d in range(2, H + 1, 2) if H % d == 0]
    fit = [d for d in divs if _conv_vmem_estimate(d, Wp, cin, cout) <= budget]
    return max(fit) if fit else min(divs)


# ----------------------------------------------------------------------------
# Pallas kernel 1: row-tiled fused 3x3 conv + bias + per-channel ReLU on the
# flattened zero-halo layout (B, H*Wp, C).
# ----------------------------------------------------------------------------
def _conv3x3_kernel(prev_ref, x_ref, next_ref, w_ref, bm_ref, cm_ref, o_ref,
                    xbuf, *, Wp):
    """One (batch, row-tile) step.

    prev_ref : (1, Wp, Cin)     flat row above the tile (garbage when r == 0)
    x_ref    : (1, TL, Cin)     TL = TH*Wp flat rows of this tile
    next_ref : (1, 2*Wp, Cin)   two flat rows below (garbage on the last tile)
    w_ref    : (9, Cin, Cout)   3x3 tap weights
    bm_ref   : (2, Cout) f32    row 0 = bias, row 1 = per-channel ReLU mask
    cm_ref   : (TL, 1)  f32     column-validity mask (zeroes the halo columns)
    o_ref    : (1, TL, Cout)    same flat layout as the input
    xbuf     : VMEM (1 + 3*Wp + TL, Cin) bf16  assembled input window
    """
    r = pl.program_id(1)
    nt = pl.num_programs(1)
    TL = x_ref.shape[1]
    cin = x_ref.shape[2]
    cout = o_ref.shape[2]

    # Assemble [corner-shim, row-above, tile, 2-rows-below] in VMEM scratch.
    xbuf[0:1, :] = jnp.zeros((1, cin), jnp.bfloat16)
    xbuf[1:1 + Wp, :] = prev_ref[0]
    xbuf[1 + Wp:1 + Wp + TL, :] = x_ref[0]
    xbuf[1 + Wp + TL:1 + 3 * Wp + TL, :] = next_ref[0]

    @pl.when(r == 0)                       # top image halo is zero
    def _():
        xbuf[1:1 + Wp, :] = jnp.zeros((Wp, cin), jnp.bfloat16)

    @pl.when(r == nt - 1)                  # bottom image halo is zero
    def _():
        xbuf[1 + Wp + TL:1 + 3 * Wp + TL, :] = jnp.zeros((2 * Wp, cin),
                                                         jnp.bfloat16)

    # 9 shifted bf16 MXU matmuls into a tile-sized f32 accumulator.
    # TODO(synk): fold the 9 taps into one K=9*Cin matmul (im2col in VMEM).
    acc = jnp.zeros((TL, cout), jnp.float32)
    for t in range(9):
        dy, dx = divmod(t, 3)
        start = dy * Wp + dx
        acc = acc + jnp.dot(xbuf[start:start + TL, :], w_ref[t],
                            preferred_element_type=jnp.float32)

    acc = acc + bm_ref[0:1, :]                                   # bias
    acc = jnp.where(bm_ref[1:2, :] > 0.5, jnp.maximum(acc, 0.0), acc)
    acc = acc * cm_ref[...]                                      # zero halo cols
    o_ref[0] = acc.astype(o_ref.dtype)


def conv3x3_flat(x_flat, w, bias, relu_mask, *, H, W, Wp, row_tile=None):
    """3x3 same-padding conv on the flat zero-halo layout.

    x_flat: (B, H*Wp, Cin) bf16; flat index y*Wp + px holds interior pixel
            (y, px-1) for px in [1, W]; all other columns are zero.
    w: (3, 3, Cin, Cout); bias, relu_mask: (Cout,)
    Returns (B, H*Wp, Cout) bf16 in the same layout.
    """
    B, L, Cin = x_flat.shape
    assert L == H * Wp and Wp >= W + 2 and Wp % 8 == 0
    Cout = w.shape[-1]
    TH = row_tile if row_tile is not None else _choose_row_tile(H, Wp, Cin, Cout)
    assert H % TH == 0 and (TH % 2 == 0 or H == TH)
    nt = H // TH
    TL = TH * Wp

    x_flat = x_flat.astype(jnp.bfloat16)
    w9 = w.reshape(9, Cin, Cout).astype(jnp.bfloat16)
    bm = jnp.stack([bias.astype(jnp.float32),
                    relu_mask.astype(jnp.float32)], axis=0)      # (2, Cout)
    col = jnp.arange(Wp, dtype=jnp.int32)
    colmask = ((col >= 1) & (col <= W)).astype(jnp.float32)
    colmask = jnp.tile(colmask, TH).reshape(TL, 1)

    prev_spec = pl.BlockSpec(
        (1, Wp, Cin), lambda b, r: (b, jnp.maximum(r * TH - 1, 0), 0))
    main_spec = pl.BlockSpec((1, TL, Cin), lambda b, r: (b, r, 0))
    next_spec = pl.BlockSpec(
        (1, 2 * Wp, Cin),
        lambda b, r: (b, jnp.minimum(r + 1, nt - 1) * (TH // 2), 0))

    cparams = {"dimension_semantics": ("parallel", "parallel")}
    est = _conv_vmem_estimate(TH, Wp, Cin, Cout)
    if est > 24 * 2 ** 20:                 # only for very large forced tiles
        cparams["vmem_limit_bytes"] = int(min(2 * est, 56 * 2 ** 20))

    return pl.pallas_call(
        functools.partial(_conv3x3_kernel, Wp=Wp),
        out_shape=jax.ShapeDtypeStruct((B, L, Cout), jnp.bfloat16),
        grid=(B, nt),
        in_specs=[prev_spec, main_spec, next_spec,
                  pl.BlockSpec((9, Cin, Cout), lambda b, r: (0, 0, 0)),
                  pl.BlockSpec((2, Cout), lambda b, r: (0, 0)),
                  pl.BlockSpec((TL, 1), lambda b, r: (0, 0))],
        out_specs=pl.BlockSpec((1, TL, Cout), lambda b, r: (b, r, 0)),
        scratch_shapes=[pltpu.VMEM((TL + 3 * Wp + 1, Cin), jnp.bfloat16)],
        compiler_params=pltpu.CompilerParams(**cparams),
    )(x_flat, x_flat, x_flat, w9, bm, colmask)


def conv3x3_flat_act(x_flat, wb, *, relu, H, W, Wp, row_tile=None):
    w, b = wb
    cout = w.shape[-1]
    rm = jnp.full((cout,), 1.0 if relu else 0.0, jnp.float32)
    return conv3x3_flat(x_flat, w, b, rm, H=H, W=W, Wp=Wp, row_tile=row_tile)


# Layout conversion (wrapper-side, done once per network, not per layer).
def _nhwc_to_flat(x_nhwc, W, Wp):
    B, H, Wd, C = x_nhwc.shape
    assert Wd == W
    xp = jnp.pad(x_nhwc.astype(jnp.bfloat16),
                 ((0, 0), (0, 0), (1, Wp - W - 1), (0, 0)))
    return xp.reshape(B, H * Wp, C)


def _flat_to_nhwc(y_flat, H, W, Wp):
    B, L, C = y_flat.shape
    return y_flat.reshape(B, H, Wp, C)[:, :, 1:W + 1, :].astype(jnp.float32)


def _flat_to_nchw1(y_flat, H, W, Wp):
    B = y_flat.shape[0]
    img = y_flat[..., 0].reshape(B, H, Wp)[:, :, 1:W + 1]
    return img[:, None, :, :].astype(jnp.float32)


# ----------------------------------------------------------------------------
# Pallas kernels 2/3: recover_scale_shift_depth
#   pass 1: tiled masked reduction over H*W ('arbitrary') with lane-wide
#           (b, 128) partials in VMEM scratch; cross-lane reduce + closed-form
#           2x2 solve once, on the last tile.
#   pass 2: tiled affine apply ('parallel').
# ----------------------------------------------------------------------------
def _ss_reduce_kernel(pred_ref, gt_ref, scale_ref, shift_ref,
                      s_pp, s_p, s_o, s_pg, s_g, *, nb, min_t, max_t):
    t = pl.program_id(0)

    @pl.when(t == 0)
    def _():
        for s in (s_pp, s_p, s_o, s_pg, s_g):
            s[...] = jnp.zeros(s.shape, s.dtype)

    # Lane-wide (1, 128) partial sums per batch row (no per-tile cross-lane
    # reductions in the hot loop).
    for i in range(nb):
        pred_i = pred_ref[i]                            # (TG, 128) f32
        gt_i = gt_ref[i]
        m = jnp.logical_and(gt_i > min_t, gt_i < max_t)
        p = jnp.where(m, pred_i, 0.0)
        o = jnp.where(m, 1.0, 0.0)
        g = jnp.where(m, gt_i, 0.0)
        s_pp[i:i + 1, :] += jnp.sum(p * p, axis=0, keepdims=True)
        s_p[i:i + 1, :] += jnp.sum(p, axis=0, keepdims=True)
        s_o[i:i + 1, :] += jnp.sum(o, axis=0, keepdims=True)
        s_pg[i:i + 1, :] += jnp.sum(p * g, axis=0, keepdims=True)
        s_g[i:i + 1, :] += jnp.sum(g, axis=0, keepdims=True)

    @pl.when(t == pl.num_programs(0) - 1)
    def _():
        # A = [[sum p^2, sum p], [sum p, count]] + 1e-6 I ; B = [sum p*gt, sum gt]
        # Kept in the reference's unnormalised f32 form (cancellation in det is a
        # known concern at very large masked pixel counts).
        a11 = jnp.sum(s_pp[...], axis=-1, keepdims=True) + 1e-6
        a12 = jnp.sum(s_p[...], axis=-1, keepdims=True)
        a22 = jnp.sum(s_o[...], axis=-1, keepdims=True) + 1e-6
        b1 = jnp.sum(s_pg[...], axis=-1, keepdims=True)
        b2 = jnp.sum(s_g[...], axis=-1, keepdims=True)
        det = a11 * a22 - a12 * a12
        inv_det = 1.0 / det
        scale_ref[...] = (a22 * b1 - a12 * b2) * inv_det
        shift_ref[...] = (-a12 * b1 + a11 * b2) * inv_det


def _ss_apply_kernel(pred_ref, scale_ref, shift_ref, out_ref):
    out_ref[...] = pred_ref[...] * scale_ref[...] + shift_ref[...]


def recover_scale_shift_depth_pallas(pred, gt, min_threshold=1e-08,
                                     max_threshold=1e8, *, tile=32768):
    """pred, gt: (B, 1, H, W) f32 -> (B, 1, H, W) f32 (torch semantics)."""
    b, c, h, w = pred.shape
    hw = h * w
    pred2 = pred.reshape(b, hw).astype(jnp.float32)
    gt2 = gt.reshape(b, hw).astype(jnp.float32)

    ng0 = -(-hw // 128)                    # lane groups of 128
    tg_req = max(tile // 128, 1)
    if ng0 <= tg_req:
        TG = ng0
        NG = ng0
    else:
        TG = max((tg_req // 8) * 8, 8)
        NG = -(-ng0 // TG) * TG
    nt = NG // TG
    hwp = NG * 128

    if hwp != hw:
        # padded gt pixels equal min_threshold -> excluded by the strict '>' mask
        pred2 = jnp.pad(pred2, ((0, 0), (0, hwp - hw)))
        gt2 = jnp.pad(gt2, ((0, 0), (0, hwp - hw)),
                      constant_values=float(min_threshold))
    pred3 = pred2.reshape(b, NG, 128)
    gt3 = gt2.reshape(b, NG, 128)

    scale, shift = pl.pallas_call(
        functools.partial(_ss_reduce_kernel, nb=b,
                          min_t=float(min_threshold), max_t=float(max_threshold)),
        out_shape=(jax.ShapeDtypeStruct((b, 1), jnp.float32),
                   jax.ShapeDtypeStruct((b, 1), jnp.float32)),
        grid=(nt,),
        in_specs=[pl.BlockSpec((b, TG, 128), lambda t: (0, t, 0)),
                  pl.BlockSpec((b, TG, 128), lambda t: (0, t, 0))],
        out_specs=(pl.BlockSpec((b, 1), lambda t: (0, 0)),
                   pl.BlockSpec((b, 1), lambda t: (0, 0))),
        scratch_shapes=[pltpu.VMEM((b, 128), jnp.float32)] * 5,
        compiler_params=pltpu.CompilerParams(
            dimension_semantics=("arbitrary",)),
    )(pred3, gt3)

    TA = TG * 128
    # TODO(synk): alias this output onto pred2 (input_output_aliases) or fuse
    # the affine apply into the consumer of the recovered depth.
    out = pl.pallas_call(
        _ss_apply_kernel,
        out_shape=jax.ShapeDtypeStruct((b, hwp), jnp.float32),
        grid=(nt,),
        in_specs=[pl.BlockSpec((b, TA), lambda t: (0, t)),
                  pl.BlockSpec((b, 1), lambda t: (0, 0)),
                  pl.BlockSpec((b, 1), lambda t: (0, 0))],
        out_specs=pl.BlockSpec((b, TA), lambda t: (0, t)),
        compiler_params=pltpu.CompilerParams(
            dimension_semantics=("parallel",)),
    )(pred2, scale, shift)
    return out[:, :hw].reshape(b, c, h, w)


# ----------------------------------------------------------------------------
# Model (synthetic small stand-ins for encoder / Decoder / AuxiNetV2)
# ----------------------------------------------------------------------------
def _init_conv(key, kh, kw, cin, cout):
    kw_, kb_ = jax.random.split(key)
    w = jax.random.normal(kw_, (kh, kw, cin, cout), jnp.float32) * 0.1
    b = jax.random.normal(kb_, (cout,), jnp.float32) * 0.01
    return w, b


class RelDepthModelPallas:
    def __init__(self, key, in_ch=3, hidden=32):
        ks = jax.random.split(key, 6)
        self.p = {}
        self.p["enc1"] = _init_conv(ks[0], 3, 3, in_ch, hidden // 2)   # encoder
        self.p["enc2"] = _init_conv(ks[1], 3, 3, hidden // 2, hidden)
        self.p["dec1"] = _init_conv(ks[2], 3, 3, hidden, hidden)       # decoder -> auxi_input
        self.p["dec2"] = _init_conv(ks[3], 3, 3, hidden, 1)            # decoder -> out_logit
        self.p["aux1"] = _init_conv(ks[4], 3, 3, hidden, hidden // 2)  # AuxiNetV2
        self.p["aux2"] = _init_conv(ks[5], 3, 3, hidden // 2, 1)

    # DepthModel.forward: encoder -> decoder -> (out_logit, auxi_input) -> auxi
    def depth_model(self, x_nchw):
        B, C, H, W = x_nchw.shape
        Wp = max(_round_up(W + 2, 8), 8)
        x_nhwc = jnp.transpose(x_nchw, (0, 2, 3, 1))
        xf = _nhwc_to_flat(x_nhwc, W, Wp)               # one pad for the whole net

        conv = functools.partial(conv3x3_flat_act, H=H, W=W, Wp=Wp)
        f = conv(xf, self.p["enc1"], relu=True)
        lateral = conv(f, self.p["enc2"], relu=True)
        auxi_input = conv(lateral, self.p["dec1"], relu=True)

        # Fused head: aux1 (16ch, ReLU) first and dec2 (1ch, linear) last so the
        # slice feeding aux2 starts at lane 0 (aligned) and shares one read of
        # auxi_input / one pallas_call.
        w_a, b_a = self.p["aux1"]
        w_d, b_d = self.p["dec2"]
        na = w_a.shape[-1]
        w_cat = jnp.concatenate([w_a, w_d], axis=-1)
        b_cat = jnp.concatenate([b_a, b_d], axis=0)
        rmask = jnp.concatenate([jnp.ones((na,), jnp.float32),
                                 jnp.zeros((w_d.shape[-1],), jnp.float32)], axis=0)
        head = conv3x3_flat(auxi_input, w_cat, b_cat, rmask, H=H, W=W, Wp=Wp)
        a = head[..., :na]                    # -> AuxiNetV2 second conv
        logit_flat = head[..., na:na + 1]     # decoder logit (1 channel)

        auxi_flat = conv(a, self.p["aux2"], relu=False)

        out_logit = _flat_to_nchw1(logit_flat, H, W, Wp)
        out_auxi = _flat_to_nchw1(auxi_flat, H, W, Wp)
        return out_logit, out_auxi

    # ModelLoss.criterion with empty cfg.TRAIN.LOSS_MODE and no 'disp' in data:
    # every branch is skipped -> total_loss == 0, total_raw == zeros(B).
    # TODO(synk): PWNPlanesLoss / Edgeguided* / MSGIL_NORM / MEADSTD_TANH /
    # Ranking loss modules are not provided in the source; only the zero-config
    # path and recover_scale_shift_depth are reproduced.
    def criterion(self, pred_logit, auxi, data):
        B = data["depth"].shape[0]
        total_raw = jnp.zeros((B,), jnp.float32)
        loss1 = {"total_loss": jnp.float32(0.0)}
        loss2 = {"total_loss": jnp.float32(0.0)}   # auxi_loss: 'disp' not in data
        loss = dict(loss1)
        loss.update(loss2)
        loss["total_loss"] = loss1["total_loss"] + loss2["total_loss"]
        return loss, total_raw

    def forward(self, data, is_train=True):
        logit, auxi = self.depth_model(data["rgb"])
        if is_train:
            losses_dict = self.criterion(logit, auxi, data)
        else:
            losses_dict = {"total_loss": jnp.float32(0.0)}
        return {"decoder": logit, "auxi": auxi, "losses": losses_dict}

    def inference(self, data):
        depth, _auxi = self.depth_model(data["rgb"])
        return depth - depth.min() + 0.01


# ----------------------------------------------------------------------------
# Pure-JAX references (for correctness checks)
# ----------------------------------------------------------------------------
def _conv3x3_ref(x_nhwc, w, bias, relu_mask):
    xb = x_nhwc.astype(jnp.bfloat16).astype(jnp.float32)
    wb = w.astype(jnp.bfloat16).astype(jnp.float32)
    y = jax.lax.conv_general_dilated(
        xb, wb, window_strides=(1, 1), padding="SAME",
        dimension_numbers=("NHWC", "HWIO", "NHWC"))
    y = y + bias.reshape(1, 1, 1, -1)
    return jnp.where(relu_mask.reshape(1, 1, 1, -1) > 0.5,
                     jnp.maximum(y, 0.0), y)


def _recover_scale_shift_ref(pred, gt, min_t, max_t):
    b, c, h, w = pred.shape
    p = pred.reshape(b, h * w)
    g = gt.reshape(b, h * w)
    mask = (g > min_t) & (g < max_t)
    pm = jnp.where(mask, p, 0.0)
    om = jnp.where(mask, 1.0, 0.0)
    gm = jnp.where(mask, g, 0.0)
    a11 = (pm * pm).sum(-1) + 1e-6
    a12 = pm.sum(-1)
    a22 = om.sum(-1) + 1e-6
    b1 = (pm * gm).sum(-1)
    b2 = gm.sum(-1)
    det = a11 * a22 - a12 * a12
    scale = (a22 * b1 - a12 * b2) / det
    shift = (-a12 * b1 + a11 * b2) / det
    out = p * scale[:, None] + shift[:, None]
    return out.reshape(b, c, h, w)


if __name__ == "__main__":
    key = jax.random.PRNGKey(0)
    k_rgb, k_depth, k_model, k_p, k_g = jax.random.split(key, 5)

    B, C, H, W = 2, 3, 16, 16
    data = {
        "rgb": jax.random.normal(k_rgb, (B, C, H, W), jnp.float32),
        "depth": jax.random.uniform(k_depth, (B, 1, H, W), jnp.float32,
                                    minval=0.1, maxval=5.0),
        "quality_flg": jnp.array([3, 2], jnp.int32),
        "planes": jnp.zeros((B, 1, H, W), jnp.float32),
        "focal_length": jnp.full((B,), 500.0, jnp.float32),
    }

    model = RelDepthModelPallas(k_model)

    # ---- conv kernel checks: single layer at several row tilings ----
    Wp = max(_round_up(W + 2, 8), 8)
    x_nhwc = jnp.transpose(data["rgb"], (0, 2, 3, 1))
    xf = _nhwc_to_flat(x_nhwc, W, Wp)
    w1, b1 = model.p["enc1"]
    rm1 = jnp.ones((w1.shape[-1],), jnp.float32)
    ref1 = _conv3x3_ref(x_nhwc, w1, b1, rm1)
    for rt in (None, 8, 4):
        y = conv3x3_flat(xf, w1, b1, rm1, H=H, W=W, Wp=Wp, row_tile=rt)
        y_d = jax.block_until_ready(_flat_to_nhwc(y, H, W, Wp))
        assert jnp.allclose(y_d, ref1, atol=2e-2, rtol=2e-2), f"conv mismatch rt={rt}"

    # ---- two-layer chain: validates the zero-halo handoff between layers ----
    w2, b2 = model.p["enc2"]
    rm2 = jnp.ones((w2.shape[-1],), jnp.float32)
    y1 = conv3x3_flat(xf, w1, b1, rm1, H=H, W=W, Wp=Wp, row_tile=4)
    y2 = conv3x3_flat(y1, w2, b2, rm2, H=H, W=W, Wp=Wp, row_tile=8)
    y2_d = jax.block_until_ready(_flat_to_nhwc(y2, H, W, Wp))
    mid = ref1.astype(jnp.bfloat16).astype(jnp.float32)   # bf16 inter-layer handoff
    ref2 = _conv3x3_ref(mid, w2, b2, rm2)
    assert jnp.allclose(y2_d, ref2, atol=3e-2, rtol=3e-2), "2-layer chain mismatch"

    # ---- training-style forward (empty LOSS_MODE path) and inference ----
    out = model.forward(data, is_train=True)
    jax.block_until_ready(out["decoder"])
    jax.block_until_ready(out["auxi"])
    assert out["decoder"].shape == (B, 1, H, W)
    assert out["auxi"].shape == (B, 1, H, W)

    pred_out = jax.block_until_ready(model.inference(data))
    assert pred_out.shape == (B, 1, H, W)

    # ---- recover_scale_shift_depth: model outputs (single-tile path) ----
    ss_ref = _recover_scale_shift_ref(out["decoder"], data["depth"], -1e-8, 10.1)
    ss = jax.block_until_ready(
        recover_scale_shift_depth_pallas(out["decoder"], data["depth"],
                                         min_threshold=-1e-8, max_threshold=10.1))
    assert jnp.allclose(ss, ss_ref, atol=1e-3, rtol=1e-3), "scale/shift mismatch"

    # ---- recover_scale_shift_depth: larger synthetic, multi-tile + ragged pad ----
    Hs, Ws = 64, 64
    predL = jax.random.normal(k_p, (2, 1, Hs, Ws), jnp.float32)
    gtL = jax.random.uniform(k_g, (2, 1, Hs, Ws), jnp.float32,
                             minval=0.1, maxval=12.0)   # some pixels exceed max_t
    refL = _recover_scale_shift_ref(predL, gtL, -1e-8, 10.1)
    for t in (32768, 1024, 3072):   # single-tile, multi-tile, multi-tile + padding
        ssL = jax.block_until_ready(
            recover_scale_shift_depth_pallas(predL, gtL, min_threshold=-1e-8,
                                             max_threshold=10.1, tile=t))
        assert jnp.allclose(ssL, refL, atol=2e-3, rtol=2e-3), \
            f"tiled scale/shift mismatch tile={t}"

    print("KERNEL_OK")
</pallas_src>

<mosaic_0001>
module attributes {stable_mosaic.version = 11 : i64} {
  func.func @_conv3x3_kernel(%arg0: i32, %arg1: i32, %arg2: memref<1x24x3xbf16, #tpu.memory_space<vmem>>, %arg3: memref<1x384x3xbf16, #tpu.memory_space<vmem>>, %arg4: memref<1x48x3xbf16, #tpu.memory_space<vmem>>, %arg5: memref<9x3x16xbf16, #tpu.memory_space<vmem>>, %arg6: memref<2x16xf32, #tpu.memory_space<vmem>>, %arg7: memref<384x1xf32, #tpu.memory_space<vmem>>, %arg8: memref<1x384x16xbf16, #tpu.memory_space<vmem>>, %arg9: memref<457x3xbf16, #tpu.memory_space<vmem>>) attributes {dimension_semantics = [#tpu.dimension_semantics<parallel>, #tpu.dimension_semantics<parallel>], iteration_bounds = array<i64: 2, 1>, scalar_prefetch = 0 : i64, scratch_operands = 1 : i64, tpu.core_type = #tpu.core_type<tc>, window_params = [{transform_indices = @transform_0, window_bounds = array<i64: 1, 24, 3>}, {transform_indices = @transform_1, window_bounds = array<i64: 1, 384, 3>}, {transform_indices = @transform_2, window_bounds = array<i64: 1, 48, 3>}, {pipeline_mode = #tpu.pipeline_mode<synchronous>, transform_indices = @transform_3, window_bounds = array<i64: 9, 3, 16>}, {pipeline_mode = #tpu.pipeline_mode<synchronous>, transform_indices = @transform_4, window_bounds = array<i64: 2, 16>}, {pipeline_mode = #tpu.pipeline_mode<synchronous>, transform_indices = @transform_5, window_bounds = array<i64: 384, 1>}, {transform_indices = @transform_6, window_bounds = array<i64: 1, 384, 16>}]} {
    %cst = arith.constant 0.000000e+00 : bf16
    %0 = vector.broadcast %cst : bf16 to vector<1x3xbf16>
    %c0 = arith.constant 0 : index
    %c0_0 = arith.constant 0 : index
    %1 = vector.load %arg9[%c0, %c0_0] : memref<457x3xbf16, #tpu.memory_space<vmem>>, vector<1x3xbf16>
    tpu.vector_store %arg9[%c0, %c0_0], %0 {strides = array<i32>} : memref<457x3xbf16, #tpu.memory_space<vmem>>, vector<1x3xbf16>,
    %c0_1 = arith.constant 0 : index
    %c0_2 = arith.constant 0 : index
    %c0_3 = arith.constant 0 : index
    %2 = vector.load %arg2[%c0_1, %c0_2, %c0_3] : memref<1x24x3xbf16, #tpu.memory_space<vmem>>, vector<1x24x3xbf16>
    %3 = vector.shape_cast %2 : vector<1x24x3xbf16> to vector<24x3xbf16>
    %c1 = arith.constant 1 : index
    %c0_4 = arith.constant 0 : index
    %4 = vector.load %arg9[%c1, %c0_4] : memref<457x3xbf16, #tpu.memory_space<vmem>>, vector<24x3xbf16>
    tpu.vector_store %arg9[%c1, %c0_4], %3 {strides = array<i32>} : memref<457x3xbf16, #tpu.memory_space<vmem>>, vector<24x3xbf16>,
    %c0_5 = arith.constant 0 : index
    %c0_6 = arith.constant 0 : index
    %c0_7 = arith.constant 0 : index
    %5 = vector.load %arg3[%c0_5, %c0_6, %c0_7] : memref<1x384x3xbf16, #tpu.memory_space<vmem>>, vector<1x384x3xbf16>
    %6 = vector.shape_cast %5 : vector<1x384x3xbf16> to vector<384x3xbf16>
    %c25 = arith.constant 25 : index
    %c0_8 = arith.constant 0 : index
    %7 = vector.load %arg9[%c25, %c0_8] : memref<457x3xbf16, #tpu.memory_space<vmem>>, vector<384x3xbf16>
    tpu.vector_store %arg9[%c25, %c0_8], %6 {strides = array<i32>} : memref<457x3xbf16, #tpu.memory_space<vmem>>, vector<384x3xbf16>,
    %c0_9 = arith.constant 0 : index
    %c0_10 = arith.constant 0 : index
    %c0_11 = arith.constant 0 : index
    %8 = vector.load %arg4[%c0_9, %c0_10, %c0_11] : memref<1x48x3xbf16, #tpu.memory_space<vmem>>, vector<1x48x3xbf16>
    %9 = vector.shape_cast %8 : vector<1x48x3xbf16> to vector<48x3xbf16>
    %c409 = arith.constant 409 : index
    %c0_12 = arith.constant 0 : index
    %10 = vector.load %arg9[%c409, %c0_12] : memref<457x3xbf16, #tpu.memory_space<vmem>>, vector<48x3xbf16>
    tpu.vector_store %arg9[%c409, %c0_12], %9 {strides = array<i32>} : memref<457x3xbf16, #tpu.memory_space<vmem>>, vector<48x3xbf16>,
    %c0_i32 = arith.constant 0 : i32
    %11 = arith.cmpi eq, %arg1, %c0_i32 : i32
    %12 = arith.extui %11 : i1 to i32
    %c0_i32_13 = arith.constant 0 : i32
    %13 = arith.cmpi ne, %12, %c0_i32_13 : i32
    scf.if %13 {
      %cst_70 = arith.constant 0.000000e+00 : bf16
      %81 = vector.broadcast %cst_70 : bf16 to vector<24x3xbf16>
      %c1_71 = arith.constant 1 : index
      %c0_72 = arith.constant 0 : index
      %82 = vector.load %arg9[%c1_71, %c0_72] : memref<457x3xbf16, #tpu.memory_space<vmem>>, vector<24x3xbf16>
      tpu.vector_store %arg9[%c1_71, %c0_72], %81 {strides = array<i32>} : memref<457x3xbf16, #tpu.memory_space<vmem>>, vector<24x3xbf16>,
    } else {
    }
    %c0_i32_14 = arith.constant 0 : i32
    %14 = arith.cmpi eq, %arg1, %c0_i32_14 : i32
    %15 = arith.extui %14 : i1 to i32
    %c0_i32_15 = arith.constant 0 : i32
    %16 = arith.cmpi ne, %15, %c0_i32_15 : i32
    scf.if %16 {
      %cst_70 = arith.constant 0.000000e+00 : bf16
      %81 = vector.broadcast %cst_70 : bf16 to vector<48x3xbf16>
      %c409_71 = arith.constant 409 : index
      %c0_72 = arith.constant 0 : index
      %82 = vector.load %arg9[%c409_71, %c0_72] : memref<457x3xbf16, #tpu.memory_space<vmem>>, vector<48x3xbf16>
      tpu.vector_store %arg9[%c409_71, %c0_72], %81 {strides = array<i32>} : memref<457x3xbf16, #tpu.memory_space<vmem>>, vector<48x3xbf16>,
    } else {
    }
    %cst_16 = arith.constant 0.000000e+00 : f32
    %17 = vector.broadcast %cst_16 : f32 to vector<384x16xf32>
    %c0_17 = arith.constant 0 : index
    %c0_18 = arith.constant 0 : index
    %18 = vector.load %arg9[%c0_17, %c0_18] : memref<457x3xbf16, #tpu.memory_space<vmem>>, vector<384x3xbf16>
    %c0_19 = arith.constant 0 : index
    %c0_20 = arith.constant 0 : index
    %c0_21 = arith.constant 0 : index
    %19 = vector.load %arg5[%c0_19, %c0_20, %c0_21] : memref<9x3x16xbf16, #tpu.memory_space<vmem>>, vector<1x3x16xbf16>
    %20 = vector.shape_cast %19 : vector<1x3x16xbf16> to vector<3x16xbf16>
    %cst_22 = arith.constant dense<0.000000e+00> : vector<384x16xf32>
    %21 = tpu.matmul %18, %20, %cst_22 {dimension_numbers = #tpu.dot_dimension_numbers<[1], [0], [0], [1], [0, 0, 1, 1], [], []>} : vector<384x3xbf16>, vector<3x16xbf16>, vector<384x16xf32> -> vector<384x16xf32>
    %22 = arith.addf %17, %21 : vector<384x16xf32>
    %c1_23 = arith.constant 1 : index
    %c0_24 = arith.constant 0 : index
    %23 = vector.load %arg9[%c1_23, %c0_24] : memref<457x3xbf16, #tpu.memory_space<vmem>>, vector<384x3xbf16>
    %c1_25 = arith.constant 1 : index
    %c0_26 = arith.constant 0 : index
    %c0_27 = arith.constant 0 : index
    %24 = vector.load %arg5[%c1_25, %c0_26, %c0_27] : memref<9x3x16xbf16, #tpu.memory_space<vmem>>, vector<1x3x16xbf16>
    %25 = vector.shape_cast %24 : vector<1x3x16xbf16> to vector<3x16xbf16>
    %cst_28 = arith.constant dense<0.000000e+00> : vector<384x16xf32>
    %26 = tpu.matmul %23, %25, %cst_28 {dimension_numbers = #tpu.dot_dimension_numbers<[1], [0], [0], [1], [0, 0, 1, 1], [], []>} : vector<384x3xbf16>, vector<3x16xbf16>, vector<384x16xf32> -> vector<384x16xf32>
    %27 = arith.addf %22, %26 : vector<384x16xf32>
    %c2 = arith.constant 2 : index
    %c0_29 = arith.constant 0 : index
    %28 = vector.load %arg9[%c2, %c0_29] : memref<457x3xbf16, #tpu.memory_space<vmem>>, vector<384x3xbf16>
    %c2_30 = arith.constant 2 : index
    %c0_31 = arith.constant 0 : index
    %c0_32 = arith.constant 0 : index
    %29 = vector.load %arg5[%c2_30, %c0_31, %c0_32] : memref<9x3x16xbf16, #tpu.memory_space<vmem>>, vector<1x3x16xbf16>
    %30 = vector.shape_cast %29 : vector<1x3x16xbf16> to vector<3x16xbf16>
    %cst_33 = arith.constant dense<0.000000e+00> : vector<384x16xf32>
    %31 = tpu.matmul %28, %30, %cst_33 {dimension_numbers = #tpu.dot_dimension_numbers<[1], [0], [0], [1], [0, 0, 1, 1], [], []>} : vector<384x3xbf16>, vector<3x16xbf16>, vector<384x16xf32> -> vector<384x16xf32>
    %32 = arith.addf %27, %31 : vector<384x16xf32>
    %c24 = arith.constant 24 : index
    %c0_34 = arith.constant 0 : index
    %33 = vector.load %arg9[%c24, %c0_34] : memref<457x3xbf16, #tpu.memory_space<vmem>>, vector<384x3xbf16>
    %c3 = arith.constant 3 : index
    %c0_35 = arith.constant 0 : index
    %c0_36 = arith.constant 0 : index
    %34 = vector.load %arg5[%c3, %c0_35, %c0_36] : memref<9x3x16xbf16, #tpu.memory_space<vmem>>, vector<1x3x16xbf16>
    %35 = vector.shape_cast %34 : vector<1x3x16xbf16> to vector<3x16xbf16>
    %cst_37 = arith.constant dense<0.000000e+00> : vector<384x16xf32>
    %36 = tpu.matmul %33, %35, %cst_37 {dimension_numbers = #tpu.dot_dimension_numbers<[1], [0], [0], [1], [0, 0, 1, 1], [], []>} : vector<384x3xbf16>, vector<3x16xbf16>, vector<384x16xf32> -> vector<384x16xf32>
    %37 = arith.addf %32, %36 : vector<384x16xf32>
    %c25_38 = arith.constant 25 : index
    %c0_39 = arith.constant 0 : index
    %38 = vector.load %arg9[%c25_38, %c0_39] : memref<457x3xbf16, #tpu.memory_space<vmem>>, vector<384x3xbf16>
    %c4 = arith.constant 4 : index
    %c0_40 = arith.constant 0 : index
    %c0_41 = arith.constant 0 : index
    %39 = vector.load %arg5[%c4, %c0_40, %c0_41] : memref<9x3x16xbf16, #tpu.memory_space<vmem>>, vector<1x3x16xbf16>
    %40 = vector.shape_cast %39 : vector<1x3x16xbf16> to vector<3x16xbf16>
    %cst_42 = arith.constant dense<0.000000e+00> : vector<384x16xf32>
    %41 = tpu.matmul %38, %40, %cst_42 {dimension_numbers = #tpu.dot_dimension_numbers<[1], [0], [0], [1], [0, 0, 1, 1], [], []>} : vector<384x3xbf16>, vector<3x16xbf16>, vector<384x16xf32> -> vector<384x16xf32>
    %42 = arith.addf %37, %41 : vector<384x16xf32>
    %c26 = arith.constant 26 : index
    %c0_43 = arith.constant 0 : index
    %43 = vector.load %arg9[%c26, %c0_43] : memref<457x3xbf16, #tpu.memory_space<vmem>>, vector<384x3xbf16>
    %c5 = arith.constant 5 : index
    %c0_44 = arith.constant 0 : index
    %c0_45 = arith.constant 0 : index
    %44 = vector.load %arg5[%c5, %c0_44, %c0_45] : memref<9x3x16xbf16, #tpu.memory_space<vmem>>, vector<1x3x16xbf16>
    %45 = vector.shape_cast %44 : vector<1x3x16xbf16> to vector<3x16xbf16>
    %cst_46 = arith.constant dense<0.000000e+00> : vector<384x16xf32>
    %46 = tpu.matmul %43, %45, %cst_46 {dimension_numbers = #tpu.dot_dimension_numbers<[1], [0], [0], [1], [0, 0, 1, 1], [], []>} : vector<384x3xbf16>, vector<3x16xbf16>, vector<384x16xf32> -> vector<384x16xf32>
    %47 = arith.addf %42, %46 : vector<384x16xf32>
    %c48 = arith.constant 48 : index
    %c0_47 = arith.constant 0 : index
    %48 = vector.load %arg9[%c48, %c0_47] : memref<457x3xbf16, #tpu.memory_space<vmem>>, vector<384x3xbf16>
    %c6 = arith.constant 6 : index
    %c0_48 = arith.constant 0 : index
    %c0_49 = arith.constant 0 : index
    %49 = vector.load %arg5[%c6, %c0_48, %c0_49] : memref<9x3x16xbf16, #tpu.memory_space<vmem>>, vector<1x3x16xbf16>
    %50 = vector.shape_cast %49 : vector<1x3x16xbf16> to vector<3x16xbf16>
    %cst_50 = arith.constant dense<0.000000e+00> : vector<384x16xf32>
    %51 = tpu.matmul %48, %50, %cst_50 {dimension_numbers = #tpu.dot_dimension_numbers<[1], [0], [0], [1], [0, 0, 1, 1], [], []>} : vector<384x3xbf16>, vector<3x16xbf16>, vector<384x16xf32> -> vector<384x16xf32>
    %52 = arith.addf %47, %51 : vector<384x16xf32>
    %c49 = arith.constant 49 : index
    %c0_51 = arith.constant 0 : index
    %53 = vector.load %arg9[%c49, %c0_51] : memref<457x3xbf16, #tpu.memory_space<vmem>>, vector<384x3xbf16>
    %c7 = arith.constant 7 : index
    %c0_52 = arith.constant 0 : index
    %c0_53 = arith.constant 0 : index
    %54 = vector.load %arg5[%c7, %c0_52, %c0_53] : memref<9x3x16xbf16, #tpu.memory_space<vmem>>, vector<1x3x16xbf16>
    %55 = vector.shape_cast %54 : vector<1x3x16xbf16> to vector<3x16xbf16>
    %cst_54 = arith.constant dense<0.000000e+00> : vector<384x16xf32>
    %56 = tpu.matmul %53, %55, %cst_54 {dimension_numbers = #tpu.dot_dimension_numbers<[1], [0], [0], [1], [0, 0, 1, 1], [], []>} : vector<384x3xbf16>, vector<3x16xbf16>, vector<384x16xf32> -> vector<384x16xf32>
    %57 = arith.addf %52, %56 : vector<384x16xf32>
    %c50 = arith.constant 50 : index
    %c0_55 = arith.constant 0 : index
    %58 = vector.load %arg9[%c50, %c0_55] : memref<457x3xbf16, #tpu.memory_space<vmem>>, vector<384x3xbf16>
    %c8 = arith.constant 8 : index
    %c0_56 = arith.constant 0 : index
    %c0_57 = arith.constant 0 : index
    %59 = vector.load %arg5[%c8, %c0_56, %c0_57] : memref<9x3x16xbf16, #tpu.memory_space<vmem>>, vector<1x3x16xbf16>
    %60 = vector.shape_cast %59 : vector<1x3x16xbf16> to vector<3x16xbf16>
    %cst_58 = arith.constant dense<0.000000e+00> : vector<384x16xf32>
    %61 = tpu.matmul %58, %60, %cst_58 {dimension_numbers = #tpu.dot_dimension_numbers<[1], [0], [0], [1], [0, 0, 1, 1], [], []>} : vector<384x3xbf16>, vector<3x16xbf16>, vector<384x16xf32> -> vector<384x16xf32>
    %62 = arith.addf %57, %61 : vector<384x16xf32>
    %c0_59 = arith.constant 0 : index
    %c0_60 = arith.constant 0 : index
    %63 = vector.load %arg6[%c0_59, %c0_60] : memref<2x16xf32, #tpu.memory_space<vmem>>, vector<1x16xf32>
    %64 = vector.broadcast %63 : vector<1x16xf32> to vector<384x16xf32>
    %65 = arith.addf %62, %64 : vector<384x16xf32>
    %c1_61 = arith.constant 1 : index
    %c0_62 = arith.constant 0 : index
    %66 = vector.load %arg6[%c1_61, %c0_62] : memref<2x16xf32, #tpu.memory_space<vmem>>, vector<1x16xf32>
    %cst_63 = arith.constant 5.000000e-01 : f32
    %67 = vector.broadcast %cst_63 : f32 to vector<1x16xf32>
    %68 = arith.cmpf ogt, %66, %67 : vector<1x16xf32>
    %cst_64 = arith.constant 0.000000e+00 : f32
    %69 = vector.broadcast %cst_64 : f32 to vector<384x16xf32>
    %70 = arith.maximumf %65, %69 : vector<384x16xf32>
    %71 = vector.shape_cast %68 : vector<1x16xi1> to vector<1x16xi1>
    %72 = vector.broadcast %71 : vector<1x16xi1> to vector<384x16xi1>
    %73 = arith.select %72, %70, %65 : vector<384x16xi1>, vector<384x16xf32>
    %c0_65 = arith.constant 0 : index
    %c0_66 = arith.constant 0 : index
    %74 = vector.load %arg7[%c0_65, %c0_66] : memref<384x1xf32, #tpu.memory_space<vmem>>, vector<384x1xf32>
    %75 = vector.broadcast %74 : vector<384x1xf32> to vector<384x16xf32>
    %76 = arith.mulf %73, %75 : vector<384x16xf32>
    %77 = arith.truncf %76 : vector<384x16xf32> to vector<384x16xbf16>
    %c0_67 = arith.constant 0 : index
    %c0_68 = arith.constant 0 : index
    %c0_69 = arith.constant 0 : index
    %78 = vector.load %arg8[%c0_67, %c0_68, %c0_69] : memref<1x384x16xbf16, #tpu.memory_space<vmem>>, vector<1x384x16xbf16>
    %79 = vector.shape_cast %78 : vector<1x384x16xbf16> to vector<384x16xbf16>
    %80 = vector.shape_cast %77 : vector<384x16xbf16> to vector<1x384x16xbf16>
    tpu.vector_store %arg8[%c0_67, %c0_68, %c0_69], %80 {strides = array<i32>} : memref<1x384x16xbf16, #tpu.memory_space<vmem>>, vector<1x384x16xbf16>,
    return
  }
  func.func @transform_0(%arg0: i32, %arg1: i32) -> (i32, i32, i32) {
    %c16_i32 = arith.constant 16 : i32
    %0 = arith.muli %arg1, %c16_i32 : i32
    %c1_i32 = arith.constant 1 : i32
    %1 = arith.subi %0, %c1_i32 : i32
    %c0_i32 = arith.constant 0 : i32
    %2 = arith.maxsi %1, %c0_i32 : i32
    %c0_i32_0 = arith.constant 0 : i32
    %c0_i32_1 = arith.constant 0 : i32
    return %arg0, %2, %c0_i32_0 : i32, i32, i32
  }
  func.func @transform_1(%arg0: i32, %arg1: i32) -> (i32, i32, i32) {
    %c0_i32 = arith.constant 0 : i32
    %c0_i32_0 = arith.constant 0 : i32
    return %arg0, %arg1, %c0_i32 : i32, i32, i32
  }
  func.func @transform_2(%arg0: i32, %arg1: i32) -> (i32, i32, i32) {
    %c1_i32 = arith.constant 1 : i32
    %0 = arith.addi %arg1, %c1_i32 : i32
    %c0_i32 = arith.constant 0 : i32
    %1 = arith.minsi %0, %c0_i32 : i32
    %c8_i32 = arith.constant 8 : i32
    %2 = arith.muli %1, %c8_i32 : i32
    %c0_i32_0 = arith.constant 0 : i32
    %c0_i32_1 = arith.constant 0 : i32
    return %arg0, %2, %c0_i32_0 : i32, i32, i32
  }
  func.func @transform_3(%arg0: i32, %arg1: i32) -> (i32, i32, i32) {
    %c0_i32 = arith.constant 0 : i32
    %c0_i32_0 = arith.constant 0 : i32
    %c0_i32_1 = arith.constant 0 : i32
    %c0_i32_2 = arith.constant 0 : i32
    return %c0_i32, %c0_i32_0, %c0_i32_1 : i32, i32, i32
  }
  func.func @transform_4(%arg0: i32, %arg1: i32) -> (i32, i32) {
    %c0_i32 = arith.constant 0 : i32
    %c0_i32_0 = arith.constant 0 : i32
    %c0_i32_1 = arith.constant 0 : i32
    return %c0_i32, %c0_i32_0 : i32, i32
  }
  func.func @transform_5(%arg0: i32, %arg1: i32) -> (i32, i32) {
    %c0_i32 = arith.constant 0 : i32
    %c0_i32_0 = arith.constant 0 : i32
    %c0_i32_1 = arith.constant 0 : i32
    return %c0_i32, %c0_i32_0 : i32, i32
  }
  func.func @transform_6(%arg0: i32, %arg1: i32) -> (i32, i32, i32) {
    %c0_i32 = arith.constant 0 : i32
    %c0_i32_0 = arith.constant 0 : i32
    return %arg0, %arg1, %c0_i32 : i32, i32, i32
  }
}

</mosaic_0001>

<llo_original>
// kernel: tpu_custom_call.1
$region0: #{tpu_custom_call.1}
  #allocation0 [shape = 'u32[]', space=smem, size = 0x4, offset = 0x4, fixed_abs, tag = 'smem constant byte address 0x4 - core index']
  #allocation1 [shape = 'u32[144,128]{1,0:T(1,128)}', space=vmem, size = 0x12000, scoped, tag = 'internal scratch']
  #allocation2 [shape = 'bf16[457,3]{1,0:T(8,128)(2,1)}', space=vmem, size = 0x1d000, scoped, tag = 'scratch operand']
  %s0 = inlined_call_operand.vmem [shape: bf16[2,384,3], index: 0, kind: input, shape index: {}]
  %s1 = inlined_call_operand.vmem [shape: bf16[2,384,3], index: 1, kind: input, shape index: {}]
  %s2 = inlined_call_operand.vmem [shape: bf16[2,384,3], index: 2, kind: input, shape index: {}]
  %s3 = inlined_call_operand.vmem [shape: bf16[9,3,16], index: 3, kind: input, shape index: {}]
  %s4 = inlined_call_operand.vmem [shape: f32[2,16], index: 4, kind: input, shape index: {}]
  %s5 = inlined_call_operand.vmem [shape: f32[384,1], index: 5, kind: input, shape index: {}]
  %s6 = inlined_call_operand.vmem [shape: bf16[2,384,16], index: 6, kind: output, shape index: {}]
  %s7 = sld [smem:[#allocation0]]
  $region61: #{tpu_custom_call.1} parent=0
    _
  %s9 = ssub.s32 1, %s7
  %s10 = scalar_select 0, %s9, %s7
  loop: start=0, step=1, limit=4
  $region2: #{tpu_custom_call.1} parent=0 // loop_pre_header
    _
  $region3: #{tpu_custom_call.1} parent=0 // loop_header
    %s12 = sphi 0, %s16
    %p13 = scmp.ge.s32.totalorder %s12, 4
    %s19 = sphi 0, %s31
    %s20 = sphi 0, %s27
    %s21 = sphi 0, %s19
    %s22 = sphi 0, %s20
    %s23 = sphi 0, %s21
    %s24 = sphi 0, %s22
    %s44 = sphi 0, %s46
    %s47 = sphi 0, %s44
    %s48 = sphi 0, %s47
    %s64 = sphi 0, %s48
    %s72 = sphi 0, %s74
    %s75 = sphi 0, %s72
    %s76 = sphi 0, %s75
    %s92 = sphi 0, %s76
    %s108 = sphi 0, %s110
    %s111 = sphi 0, %s108
    %s112 = sphi 0, %s111
    %s128 = sphi 0, %s112
    %s132 = sphi 0, %s132
    %s134 = sphi 0, %s132
    %s135 = sphi 0, %s134
    %s149 = sphi 0, %s135
    %s153 = sphi 0, %s153
    %s155 = sphi 0, %s153
    %s156 = sphi 0, %s155
    %s170 = sphi 0, %s156
    %s174 = sphi 0, %s174
    %s176 = sphi 0, %s174
    %s177 = sphi 0, %s176
    %s191 = sphi 0, %s177
    %s199 = sphi 0, %s201
    %s202 = sphi 0, %s199
    %s203 = sphi 0, %s202
    %s219 = sphi 0, %s203
  $region4: #{tpu_custom_call.1} parent=0 // loop_header_branch
    %15 = sbr.rel (%p13) target = $region8
  $region5: #{tpu_custom_call.1} parent=0 // loop_body
    %s17 = ssub.s32 %s12, 1
    %s18 = ssub.s32 %s12, 2
    %s25 = sadd.s32 1, %s20
    %p26 = scmp.ge.s32.totalorder %s25, 1
    %s27 = scalar_select %p26, 0, %s25
    %s28 = sadd.s32 1, %s19
    %s29 = scalar_select %p26, %s28, %s19
    %p30 = scmp.ge.s32.totalorder %s29, 2
    %s31 = scalar_select %p30, 0, %s29
    %s32 = smul.u32 %s20, 16
    %s33 = ssub.s32 %s32, 1
    %p34 = scmp.gt.s32.totalorder %s33, 0
    %s35 = scalar_select %p34, %s33, 0
    %s36 = smul.u32 %s27, 16
    %s37 = ssub.s32 %s36, 1
    %p38 = scmp.gt.s32.totalorder %s37, 0
    %s39 = scalar_select %p38, %s37, 0
    %s40 = ssub.s32 %s19, %s31
    %s41 = ssub.s32 %s35, %s39
    %s42 = sor.u32 %s40, %s41
    %p43 = scmp.eq.s32.totalorder %s42, 0
    %s45 = sadd.s32 %s44, 1
    %s46 = scalar_select %p43, %s44, %s45
    %p49 = pneg %p43
    %p50 = scmp.eq.s32.totalorder %s12, 1
    %p51 = por %p49, %p50
    %p52 = scmp.ne.s32.totalorder %s44, %s47
    %p53 = scmp.eq.s32.totalorder %s12, 0
    %p54 = por %p52, %p53
    %p55 = scmp.ne.s32.totalorder %s44, %s47
    %p56 = scmp.eq.s32.totalorder %s17, 1
    %p57 = por %p55, %p56
    %p58 = scmp.ne.s32.totalorder %s47, %s48
    %p59 = scmp.eq.s32.totalorder %s17, 0
    %p60 = por %p58, %p59
    %p61 = scmp.ne.s32.totalorder %s47, %s48
    %p62 = scmp.eq.s32.totalorder %s18, 1
    %p63 = por %p61, %p62
    %p65 = scmp.ne.s32.totalorder %s48, %s64
    %p66 = scmp.eq.s32.totalorder %s18, 0
    %p67 = por %p65, %p66
    %s68 = ssub.s32 %s19, %s31
    %s69 = ssub.s32 %s20, %s27
    %s70 = sor.u32 %s68, %s69
    %p71 = scmp.eq.s32.totalorder %s70, 0
    %s73 = sadd.s32 %s72, 1
    %s74 = scalar_select %p71, %s72, %s73
    %p77 = pneg %p71
    %p78 = scmp.eq.s32.totalorder %s12, 1
    %p79 = por %p77, %p78
    %p80 = scmp.ne.s32.totalorder %s72, %s75
    %p81 = scmp.eq.s32.totalorder %s12, 0
    %p82 = por %p80, %p81
    %p83 = scmp.ne.s32.totalorder %s72, %s75
    %p84 = scmp.eq.s32.totalorder %s17, 1
    %p85 = por %p83, %p84
    %p86 = scmp.ne.s32.totalorder %s75, %s76
    %p87 = scmp.eq.s32.totalorder %s17, 0
    %p88 = por %p86, %p87
    %p89 = scmp.ne.s32.totalorder %s75, %s76
    %p90 = scmp.eq.s32.totalorder %s18, 1
    %p91 = por %p89, %p90
    %p93 = scmp.ne.s32.totalorder %s76, %s92
    %p94 = scmp.eq.s32.totalorder %s18, 0
    %p95 = por %p93, %p94
    %s96 = sadd.s32 %s20, 1
    %p97 = scmp.lt.s32.totalorder %s96, 0
    %s98 = scalar_select %p97, %s96, 0
    %s99 = smul.u32 %s98, 8
    %s100 = sadd.s32 %s27, 1
    %p101 = scmp.lt.s32.totalorder %s100, 0
    %s102 = scalar_select %p101, %s100, 0
    %s103 = smul.u32 %s102, 8
    %s104 = ssub.s32 %s19, %s31
    %s105 = ssub.s32 %s99, %s103
    %s106 = sor.u32 %s104, %s105
    %p107 = scmp.eq.s32.totalorder %s106, 0
    %s109 = sadd.s32 %s108, 1
    %s110 = scalar_select %p107, %s108, %s109
    %p113 = pneg %p107
    %p114 = scmp.eq.s32.totalorder %s12, 1
    %p115 = por %p113, %p114
    %p116 = scmp.ne.s32.totalorder %s108, %s111
    %p117 = scmp.eq.s32.totalorder %s12, 0
    %p118 = por %p116, %p117
    %p119 = scmp.ne.s32.totalorder %s108, %s111
    %p120 = scmp.eq.s32.totalorder %s17, 1
    %p121 = por %p119, %p120
    %p122 = scmp.ne.s32.totalorder %s111, %s112
    %p123 = scmp.eq.s32.totalorder %s17, 0
    %p124 = por %p122, %p123
    %p125 = scmp.ne.s32.totalorder %s111, %s112
    %p126 = scmp.eq.s32.totalorder %s18, 1
    %p127 = por %p125, %p126
    %p129 = scmp.ne.s32.totalorder %s112, %s128
    %p130 = scmp.eq.s32.totalorder %s18, 0
    %p131 = por %p129, %p130
    %s133 = sadd.s32 %s132, 1
    %p136 = scmp.eq.s32.totalorder %s12, 1
    %p137 = scmp.ne.s32.totalorder %s132, %s134
    %p138 = scmp.eq.s32.totalorder %s12, 0
    %p139 = por %p137, %p138
    %p140 = scmp.ne.s32.totalorder %s132, %s134
    %p141 = scmp.eq.s32.totalorder %s17, 1
    %p142 = por %p140, %p141
    %p143 = scmp.ne.s32.totalorder %s134, %s135
    %p144 = scmp.eq.s32.totalorder %s17, 0
    %p145 = por %p143, %p144
    %p146 = scmp.ne.s32.totalorder %s134, %s135
    %p147 = scmp.eq.s32.totalorder %s18, 1
    %p148 = por %p146, %p147
    %p150 = scmp.ne.s32.totalorder %s135, %s149
    %p151 = scmp.eq.s32.totalorder %s18, 0
    %p152 = por %p150, %p151
    %s154 = sadd.s32 %s153, 1
    %p157 = scmp.eq.s32.totalorder %s12, 1
    %p158 = scmp.ne.s32.totalorder %s153, %s155
    %p159 = scmp.eq.s32.totalorder %s12, 0
    %p160 = por %p158, %p159
    %p161 = scmp.ne.s32.totalorder %s153, %s155
    %p162 = scmp.eq.s32.totalorder %s17, 1
    %p163 = por %p161, %p162
    %p164 = scmp.ne.s32.totalorder %s155, %s156
    %p165 = scmp.eq.s32.totalorder %s17, 0
    %p166 = por %p164, %p165
    %p167 = scmp.ne.s32.totalorder %s155, %s156
    %p168 = scmp.eq.s32.totalorder %s18, 1
    %p169 = por %p167, %p168
    %p171 = scmp.ne.s32.totalorder %s156, %s170
    %p172 = scmp.eq.s32.totalorder %s18, 0
    %p173 = por %p171, %p172
    %s175 = sadd.s32 %s174, 1
    %p178 = scmp.eq.s32.totalorder %s12, 1
    %p179 = scmp.ne.s32.totalorder %s174, %s176
    %p180 = scmp.eq.s32.totalorder %s12, 0
    %p181 = por %p179, %p180
    %p182 = scmp.ne.s32.totalorder %s174, %s176
    %p183 = scmp.eq.s32.totalorder %s17, 1
    %p184 = por %p182, %p183
    %p185 = scmp.ne.s32.totalorder %s176, %s177
    %p186 = scmp.eq.s32.totalorder %s17, 0
    %p187 = por %p185, %p186
    %p188 = scmp.ne.s32.totalorder %s176, %s177
    %p189 = scmp.eq.s32.totalorder %s18, 1
    %p190 = por %p188, %p189
    %p192 = scmp.ne.s32.totalorder %s177, %s191
    %p193 = scmp.eq.s32.totalorder %s18, 0
    %p194 = por %p192, %p193
    %s195 = ssub.s32 %s19, %s31
    %s196 = ssub.s32 %s20, %s27
    %s197 = sor.u32 %s195, %s196
    %p198 = scmp.eq.s32.totalorder %s197, 0
    %s200 = sadd.s32 %s199, 1
    %s201 = scalar_select %p198, %s199, %s200
    %p204 = pneg %p198
    %p205 = scmp.eq.s32.totalorder %s12, 1
    %p206 = por %p204, %p205
    %p207 = scmp.ne.s32.totalorder %s199, %s202
    %p208 = scmp.eq.s32.totalorder %s12, 0
    %p209 = por %p207, %p208
    %p210 = scmp.ne.s32.totalorder %s199, %s202
    %p211 = scmp.eq.s32.totalorder %s17, 1
    %p212 = por %p210, %p211
    %p213 = scmp.ne.s32.totalorder %s202, %s203
    %p214 = scmp.eq.s32.totalorder %s17, 0
    %p215 = por %p213, %p214
    %p216 = scmp.ne.s32.totalorder %s202, %s203
    %p217 = scmp.eq.s32.totalorder %s18, 1
    %p218 = por %p216, %p217
    %p220 = scmp.ne.s32.totalorder %s203, %s219
    %p221 = scmp.eq.s32.totalorder %s18, 0
    %p222 = por %p220, %p221
    %p223 = scmp.le.s32.totalorder 1, %s12
    %p224 = scmp.lt.s32.totalorder %s12, 3
    %p225 = pnand %p223, %p224
    %p226 = pneg %p225
    // Predicated region
    $region9: #{tpu_custom_call.1} parent=5 // pred_check
      _
    $region10: #{tpu_custom_call.1} parent=5 // pred_check_branch
      %228 = sbr.rel (%p225) target = $region12
    $region11: #{tpu_custom_call.1} parent=5 // pred_region
      %s229 = ssub.s32 %s12, 1
      // Predicated region
      $region13: #{tpu_custom_call.1} parent=11 // pred_check
        %p230 = pneg %p145
      $region14: #{tpu_custom_call.1} parent=11 // pred_check_branch
        %232 = sbr.rel (%p230) target = $region16
      $region15: #{tpu_custom_call.1} parent=11 // pred_region
        _
      $region16: #{tpu_custom_call.1} parent=11 // pred_fallthru
        _
      // Predicated region
      $region17: #{tpu_custom_call.1} parent=11 // pred_check
        %p233 = pneg %p166
      $region18: #{tpu_custom_call.1} parent=11 // pred_check_branch
        %235 = sbr.rel (%p233) target = $region20
      $region19: #{tpu_custom_call.1} parent=11 // pred_region
        _
      $region20: #{tpu_custom_call.1} parent=11 // pred_fallthru
        _
      // Predicated region
      $region21: #{tpu_custom_call.1} parent=11 // pred_check
        %p236 = pneg %p187
      $region22: #{tpu_custom_call.1} parent=11 // pred_check_branch
        %238 = sbr.rel (%p236) target = $region24
      $region23: #{tpu_custom_call.1} parent=11 // pred_region
        _
      $region24: #{tpu_custom_call.1} parent=11 // pred_fallthru
        _
    $region12: #{tpu_custom_call.1} parent=5 // pred_fallthru
      _
    %p239 = scmp.lt.s32.totalorder %s12, 2
    // Predicated region
    $region25: #{tpu_custom_call.1} parent=5 // pred_check
      %p240 = pneg %p239
    $region26: #{tpu_custom_call.1} parent=5 // pred_check_branch
      %242 = sbr.rel (%p240) target = $region28
    $region27: #{tpu_custom_call.1} parent=5 // pred_region
      // Predicated region
      $region29: #{tpu_custom_call.1} parent=27 // pred_check
        %p243 = pneg %p54
      $region30: #{tpu_custom_call.1} parent=27 // pred_check_branch
        %245 = sbr.rel (%p243) target = $region32
      $region31: #{tpu_custom_call.1} parent=27 // pred_region
        %s246 = smul.u32 %s20, 16
        %s247 = ssub.s32 %s246, 1
        %p248 = scmp.gt.s32.totalorder %s247, 0
        %s249 = scalar_select %p248, %s247, 0
        %s250 = smul.u32 3, %s249
        %p251 = scmp.lt.s32.totalorder %s19, 1
        %s252 = scalar_select %p251, %s19, 1
        %p253 = scmp.lt.s32.totalorder %s250, 47
        %s254 = scalar_select %p253, %s250, 47
        %s255 = smul.addr %s252, 48
        %s256 = sadd.s32 %s254, %s255
        %s257 = smul.addr %s256, 4
        %s258 = scalar_lea.vmem %s0, %s257
        %s259 = smul.u32 %s20, 16
        %s260 = ssub.s32 %s259, 1
        %p261 = scmp.gt.s32.totalorder %s260, 0
        %s262 = scalar_select %p261, %s260, 0
        %s263 = smul.u32 3, %s262
      $region32: #{tpu_custom_call.1} parent=27 // pred_fallthru
        _
      // Predicated region
      $region33: #{tpu_custom_call.1} parent=27 // pred_check
        %p264 = pneg %p82
      $region34: #{tpu_custom_call.1} parent=27 // pred_check_branch
        %266 = sbr.rel (%p264) target = $region36
      $region35: #{tpu_custom_call.1} parent=27 // pred_region
        %s267 = smul.u32 48, %s20
        %p268 = scmp.lt.s32.totalorder %s19, 1
        %s269 = scalar_select %p268, %s19, 1
        %p270 = scmp.lt.s32.totalorder %s267, 47
        %s271 = scalar_select %p270, %s267, 47
        %s272 = smul.addr %s269, 48
        %s273 = sadd.s32 %s271, %s272
        %s274 = smul.addr %s273, 4
        %s275 = scalar_lea.vmem %s1, %s274
        %s276 = smul.u32 48, %s20
      $region36: #{tpu_custom_call.1} parent=27 // pred_fallthru
        _
      // Predicated region
      $region37: #{tpu_custom_call.1} parent=27 // pred_check
        %p277 = pneg %p118
      $region38: #{tpu_custom_call.1} parent=27 // pred_check_branch
        %279 = sbr.rel (%p277) target = $region40
      $region39: #{tpu_custom_call.1} parent=27 // pred_region
        %s280 = sadd.s32 %s20, 1
        %p281 = scmp.lt.s32.totalorder %s280, 0
        %s282 = scalar_select %p281, %s280, 0
        %s283 = smul.u32 %s282, 8
        %s284 = smul.u32 6, %s283
        %p285 = scmp.lt.s32.totalorder %s19, 1
        %s286 = scalar_select %p285, %s19, 1
        %p287 = scmp.lt.s32.totalorder %s284, 47
        %s288 = scalar_select %p287, %s284, 47
        %s289 = smul.addr %s286, 48
        %s290 = sadd.s32 %s288, %s289
        %s291 = smul.addr %s290, 4
        %s292 = scalar_lea.vmem %s2, %s291
        %s293 = sadd.s32 %s20, 1
        %p294 = scmp.lt.s32.totalorder %s293, 0
        %s295 = scalar_select %p294, %s293, 0
        %s296 = smul.u32 %s295, 8
        %s297 = smul.u32 6, %s296
      $region40: #{tpu_custom_call.1} parent=27 // pred_fallthru
        _
    $region28: #{tpu_custom_call.1} parent=5 // pred_fallthru
      _
    %p298 = scmp.le.s32.totalorder 1, %s12
    %p299 = scmp.lt.s32.totalorder %s12, 3
    %p300 = pnand %p298, %p299
    %p301 = pneg %p300
    // Predicated region
    $region41: #{tpu_custom_call.1} parent=5 // pred_check
      _
    $region42: #{tpu_custom_call.1} parent=5 // pred_check_branch
      %303 = sbr.rel (%p300) target = $region44
    $region43: #{tpu_custom_call.1} parent=5 // pred_region
      %s304 = ssub.s32 %s12, 1
      %s305 = smul.u32 %s22, 16
      %s306 = ssub.s32 %s305, 1
      %p307 = scmp.gt.s32.totalorder %s306, 0
      %s308 = scalar_select %p307, %s306, 0
      %s309 = smul.u32 3, %s308
      %p310 = scmp.lt.s32.totalorder %s21, 1
      %s311 = scalar_select %p310, %s21, 1
      %p312 = scmp.lt.s32.totalorder %s309, 47
      %s313 = scalar_select %p312, %s309, 47
      %s314 = smul.addr %s311, 48
      %s315 = sadd.s32 %s313, %s314
      %s316 = smul.addr %s315, 4
      %s317 = scalar_lea.vmem %s0, %s316
      %p318 = pneg %p60
      %p319 = pneg %p57
      %s320 = smul.u32 48, %s22
      %p321 = scmp.lt.s32.totalorder %s21, 1
      %s322 = scalar_select %p321, %s21, 1
      %p323 = scmp.lt.s32.totalorder %s320, 47
      %s324 = scalar_select %p323, %s320, 47
      %s325 = smul.addr %s322, 48
      %s326 = sadd.s32 %s324, %s325
      %s327 = smul.addr %s326, 4
      %s328 = scalar_lea.vmem %s1, %s327
      %p329 = pneg %p88
      %p330 = pneg %p85
      %s331 = sadd.s32 %s22, 1
      %p332 = scmp.lt.s32.totalorder %s331, 0
      %s333 = scalar_select %p332, %s331, 0
      %s334 = smul.u32 %s333, 8
      %s335 = smul.u32 6, %s334
      %p336 = scmp.lt.s32.totalorder %s21, 1
      %s337 = scalar_select %p336, %s21, 1
      %p338 = scmp.lt.s32.totalorder %s335, 47
      %s339 = scalar_select %p338, %s335, 47
      %s340 = smul.addr %s337, 48
      %s341 = sadd.s32 %s339, %s340
      %s342 = smul.addr %s341, 4
      %s343 = scalar_lea.vmem %s2, %s342
      %p344 = pneg %p124
      %p345 = pneg %p121
      %p346 = pneg %p145
      %p347 = pneg %p142
      %p348 = pneg %p166
      %p349 = pneg %p163
      %p350 = pneg %p187
      %p351 = pneg %p184
      %p352 = pneg %p215
      %p353 = pneg %p212
      %s354 = smul.u32 48, %s22
      %p355 = scmp.lt.s32.totalorder %s21, 1
      %s356 = scalar_select %p355, %s21, 1
      %p357 = scmp.lt.s32.totalorder %s354, 47
      %s358 = scalar_select %p357, %s354, 47
      %s359 = smul.addr %s356, 48
      %s360 = sadd.s32 %s358, %s359
      %s361 = smul.addr %s360, 4
      %s362 = scalar_lea.vmem %s6, %s361
      %s363 = smul.u32 %s22, 16
      %s364 = ssub.s32 %s363, 1
      %p365 = scmp.gt.s32.totalorder %s364, 0
      %s366 = scalar_select %p365, %s364, 0
      %s367 = smul.u32 3, %s366
      %p368 = scmp.lt.s32.totalorder %s21, 1
      %s369 = scalar_select %p368, %s21, 1
      %p370 = scmp.lt.s32.totalorder %s367, 47
      %s371 = scalar_select %p370, %s367, 47
      %s372 = smul.addr %s369, 48
      %s373 = sadd.s32 %s371, %s372
      %s374 = smul.addr %s373, 4
      %s375 = scalar_lea.vmem %s0, %s374
      %s376 = smul.u32 %s22, 16
      %s377 = ssub.s32 %s376, 1
      %p378 = scmp.gt.s32.totalorder %s377, 0
      %s379 = scalar_select %p378, %s377, 0
      %s380 = smul.u32 3, %s379
      %s381 = smul.u32 48, %s22
      %p382 = scmp.lt.s32.totalorder %s21, 1
      %s383 = scalar_select %p382, %s21, 1
      %p384 = scmp.lt.s32.totalorder %s381, 47
      %s385 = scalar_select %p384, %s381, 47
      %s386 = smul.addr %s383, 48
      %s387 = sadd.s32 %s385, %s386
      %s388 = smul.addr %s387, 4
      %s389 = scalar_lea.vmem %s1, %s388
      %s390 = smul.u32 48, %s22
      %s391 = sadd.s32 %s22, 1
      %p392 = scmp.lt.s32.totalorder %s391, 0
      %s393 = scalar_select %p392, %s391, 0
      %s394 = smul.u32 %s393, 8
      %s395 = smul.u32 6, %s394
      %p396 = scmp.lt.s32.totalorder %s21, 1
      %s397 = scalar_select %p396, %s21, 1
      %p398 = scmp.lt.s32.totalorder %s395, 47
      %s399 = scalar_select %p398, %s395, 47
      %s400 = smul.addr %s397, 48
      %s401 = sadd.s32 %s399, %s400
      %s402 = smul.addr %s401, 4
      %s403 = scalar_lea.vmem %s2, %s402
      %s404 = sadd.s32 %s22, 1
      %p405 = scmp.lt.s32.totalorder %s404, 0
      %s406 = scalar_select %p405, %s404, 0
      %s407 = smul.u32 %s406, 8
      %s408 = smul.u32 6, %s407
      %s409 = smul.u32 48, %s22
      %p410 = scmp.lt.s32.totalorder %s21, 1
      %s411 = scalar_select %p410, %s21, 1
      %p412 = scmp.lt.s32.totalorder %s409, 47
      %s413 = scalar_select %p412, %s409, 47
      %s414 = smul.addr %s411, 48
      %s415 = sadd.s32 %s413, %s414
      %s416 = smul.addr %s415, 4
      %s417 = scalar_lea.vmem %s6, %s416
      %s418 = smul.u32 48, %s22
      %vm420 = vcmask 16384
      %vm421 = vsmask.f32 256
      %vm422 = vmand %vm420, %vm421
      %v423 = vld [vmem:[#allocation2] sm:$0x1]
      %v424 = vsel %vm422, 0, %v423
      %425 = vst [vmem:[#allocation2] sm:$0x1] %v424
      %v426 = vld [vmem:[%s375] sm:$0xf]
      %v427 = vld [vmem:[%s375 + $0x4] sm:$0xf]
      %v428 = vld [vmem:[%s375 + $0x8] sm:$0xf]
      %vm429 = vsmask.f32 4368
      %vm430 = vmor %vm421, %vm429
      %v432 = vshrl.u32 %v426, 16
      %v434 = vrot.slane %v432, 7
      %v435 = vshll.u32 %v426, 16
      %v437 = vor.u32 %v434, %v435
      %v438 = vrot.slane %v434, 4
      %v440 = vshrl.u32 %v427, 16
      %v442 = vrot.slane %v440, 7
      %v443 = vshll.u32 %v427, 16
      %v445 = vor.u32 %v442, %v443
      %v446 = vsel %vm430, %v438, %v445
      %v447 = vrot.slane %v442, 4
      %v449 = vshrl.u32 %v428, 16
      %v451 = vrot.slane %v449, 7
      %v452 = vshll.u32 %v428, 16
      %v454 = vor.u32 %v451, %v452
      %v455 = vsel %vm430, %v447, %v454
      %v456 = vrot.slane %v451, 4
      %vm461 = vcmask 19456
      %vm462 = vsmask.f32 7938
      %vm463 = vmand %vm461, %vm462
      %v464 = vld [vmem:[#allocation2] sm:$0xf]
      %v465 = vsel %vm463, %v437, %v464
      %466 = vst [vmem:[#allocation2] sm:$0xf] %v465
      %vm467 = vcmask 19456
      %468 = vst.msk [vmem:[#allocation2 + $0x4] sm:$0xf] %vm467, %v446
      %469 = vst.msk [vmem:[#allocation2 + $0x8] sm:$0xf] %vm467, %v455
      %v470 = vld [vmem:[#allocation2 + $0xc] sm:$0x1]
      %v471 = vsel %vm422, %v456, %v470
      %472 = vst [vmem:[#allocation2 + $0xc] sm:$0x1] %v471
      %v473 = vld [vmem:[%s389] sm:$0xf]
      %v474 = vld [vmem:[%s389 + $0x4] sm:$0xf]
      %v475 = vld [vmem:[%s389 + $0x8] sm:$0xf]
      %v476 = vld [vmem:[%s389 + $0xc] sm:$0xf]
      %v477 = vld [vmem:[%s389 + $0x10] sm:$0xf]
      %v478 = vld [vmem:[%s389 + $0x14] sm:$0xf]
      %v479 = vld [vmem:[%s389 + $0x18] sm:$0xf]
      %v480 = vld [vmem:[%s389 + $0x1c] sm:$0xf]
      %v481 = vld [vmem:[%s389 + $0x20] sm:$0xf]
      %v482 = vld [vmem:[%s389 + $0x24] sm:$0xf]
      %v483 = vld [vmem:[%s389 + $0x28] sm:$0xf]
      %v484 = vld [vmem:[%s389 + $0x2c] sm:$0xf]
      %v485 = vld [vmem:[%s389 + $0x30] sm:$0xf]
      %v486 = vld [vmem:[%s389 + $0x34] sm:$0xf]
      %v487 = vld [vmem:[%s389 + $0x38] sm:$0xf]
      %v488 = vld [vmem:[%s389 + $0x3c] sm:$0xf]
      %v489 = vld [vmem:[%s389 + $0x40] sm:$0xf]
      %v490 = vld [vmem:[%s389 + $0x44] sm:$0xf]
      %v491 = vld [vmem:[%s389 + $0x48] sm:$0xf]
      %v492 = vld [vmem:[%s389 + $0x4c] sm:$0xf]
      %v493 = vld [vmem:[%s389 + $0x50] sm:$0xf]
      %v494 = vld [vmem:[%s389 + $0x54] sm:$0xf]
      %v495 = vld [vmem:[%s389 + $0x58] sm:$0xf]
      %v496 = vld [vmem:[%s389 + $0x5c] sm:$0xf]
      %v497 = vld [vmem:[%s389 + $0x60] sm:$0xf]
      %v498 = vld [vmem:[%s389 + $0x64] sm:$0xf]
      %v499 = vld [vmem:[%s389 + $0x68] sm:$0xf]
      %v500 = vld [vmem:[%s389 + $0x6c] sm:$0xf]
      %v501 = vld [vmem:[%s389 + $0x70] sm:$0xf]
      %v502 = vld [vmem:[%s389 + $0x74] sm:$0xf]
      %v503 = vld [vmem:[%s389 + $0x78] sm:$0xf]
      %v504 = vld [vmem:[%s389 + $0x7c] sm:$0xf]
      %v505 = vld [vmem:[%s389 + $0x80] sm:$0xf]
      %v506 = vld [vmem:[%s389 + $0x84] sm:$0xf]
      %v507 = vld [vmem:[%s389 + $0x88] sm:$0xf]
      %v508 = vld [vmem:[%s389 + $0x8c] sm:$0xf]
      %v509 = vld [vmem:[%s389 + $0x90] sm:$0xf]
      %v510 = vld [vmem:[%s389 + $0x94] sm:$0xf]
      %v511 = vld [vmem:[%s389 + $0x98] sm:$0xf]
      %v512 = vld [vmem:[%s389 + $0x9c] sm:$0xf]
      %v513 = vld [vmem:[%s389 + $0xa0] sm:$0xf]
      %v514 = vld [vmem:[%s389 + $0xa4] sm:$0xf]
      %v515 = vld [vmem:[%s389 + $0xa8] sm:$0xf]
      %v516 = vld [vmem:[%s389 + $0xac] sm:$0xf]
      %v517 = vld [vmem:[%s389 + $0xb0] sm:$0xf]
      %v518 = vld [vmem:[%s389 + $0xb4] sm:$0xf]
      %v519 = vld [vmem:[%s389 + $0xb8] sm:$0xf]
      %v520 = vld [vmem:[%s389 + $0xbc] sm:$0xf]
      %v522 = vshrl.u32 %v473, 16
      %v524 = vrot.slane %v522, 7
      %v525 = vshll.u32 %v473, 16
      %v527 = vor.u32 %v524, %v525
      %v528 = vrot.slane %v524, 4
      %v530 = vshrl.u32 %v474, 16
      %v532 = vrot.slane %v530, 7
      %v533 = vshll.u32 %v474, 16
      %v535 = vor.u32 %v532, %v533
      %v536 = vsel %vm430, %v528, %v535
      %v537 = vrot.slane %v532, 4
      %v539 = vshrl.u32 %v475, 16
      %v541 = vrot.slane %v539, 7
      %v542 = vshll.u32 %v475, 16
      %v544 = vor.u32 %v541, %v542
      %v545 = vsel %vm430, %v537, %v544
      %v546 = vrot.slane %v541, 4
      %v548 = vshrl.u32 %v476, 16
      %v550 = vrot.slane %v548, 7
      %v551 = vshll.u32 %v476, 16
      %v553 = vor.u32 %v550, %v551
      %v554 = vsel %vm430, %v546, %v553
      %v555 = vrot.slane %v550, 4
      %v557 = vshrl.u32 %v477, 16
      %v559 = vrot.slane %v557, 7
      %v560 = vshll.u32 %v477, 16
      %v562 = vor.u32 %v559, %v560
      %v563 = vsel %vm430, %v555, %v562
      %v564 = vrot.slane %v559, 4
      %v566 = vshrl.u32 %v478, 16
      %v568 = vrot.slane %v566, 7
      %v569 = vshll.u32 %v478, 16
      %v571 = vor.u32 %v568, %v569
      %v572 = vsel %vm430, %v564, %v571
      %v573 = vrot.slane %v568, 4
      %v575 = vshrl.u32 %v479, 16
      %v577 = vrot.slane %v575, 7
      %v578 = vshll.u32 %v479, 16
      %v580 = vor.u32 %v577, %v578
      %v581 = vsel %vm430, %v573, %v580
      %v582 = vrot.slane %v577, 4
      %v584 = vshrl.u32 %v480, 16
      %v586 = vrot.slane %v584, 7
      %v587 = vshll.u32 %v480, 16
      %v589 = vor.u32 %v586, %v587
      %v590 = vsel %vm430, %v582, %v589
      %v591 = vrot.slane %v586, 4
      %v593 = vshrl.u32 %v481, 16
      %v595 = vrot.slane %v593, 7
      %v596 = vshll.u32 %v481, 16
      %v598 = vor.u32 %v595, %v596
      %v599 = vsel %vm430, %v591, %v598
      %v600 = vrot.slane %v595, 4
      %v602 = vshrl.u32 %v482, 16
      %v604 = vrot.slane %v602, 7
      %v605 = vshll.u32 %v482, 16
      %v607 = vor.u32 %v604, %v605
      %v608 = vsel %vm430, %v600, %v607
      %v609 = vrot.slane %v604, 4
      %v611 = vshrl.u32 %v483, 16
      %v613 = vrot.slane %v611, 7
      %v614 = vshll.u32 %v483, 16
      %v616 = vor.u32 %v613, %v614
      %v617 = vsel %vm430, %v609, %v616
      %v618 = vrot.slane %v613, 4
      %v620 = vshrl.u32 %v484, 16
      %v622 = vrot.slane %v620, 7
      %v623 = vshll.u32 %v484, 16
      %v625 = vor.u32 %v622, %v623
      %v626 = vsel %vm430, %v618, %v625
      %v627 = vrot.slane %v622, 4
      %v629 = vshrl.u32 %v485, 16
      %v631 = vrot.slane %v629, 7
      %v632 = vshll.u32 %v485, 16
      %v634 = vor.u32 %v631, %v632
      %v635 = vsel %vm430, %v627, %v634
      %v636 = vrot.slane %v631, 4
      %v638 = vshrl.u32 %v486, 16
      %v640 = vrot.slane %v638, 7
      %v641 = vshll.u32 %v486, 16
      %v643 = vor.u32 %v640, %v641
      %v644 = vsel %vm430, %v636, %v643
      %v645 = vrot.slane %v640, 4
      %v647 = vshrl.u32 %v487, 16
      %v649 = vrot.slane %v647, 7
      %v650 = vshll.u32 %v487, 16
      %v652 = vor.u32 %v649, %v650
      %v653 = vsel %vm430, %v645, %v652
      %v654 = vrot.slane %v649, 4
      %v656 = vshrl.u32 %v488, 16
      %v658 = vrot.slane %v656, 7
      %v659 = vshll.u32 %v488, 16
      %v661 = vor.u32 %v658, %v659
      %v662 = vsel %vm430, %v654, %v661
      %v663 = vrot.slane %v658, 4
      %v665 = vshrl.u32 %v489, 16
      %v667 = vrot.slane %v665, 7
      %v668 = vshll.u32 %v489, 16
      %v670 = vor.u32 %v667, %v668
      %v671 = vsel %vm430, %v663, %v670
      %v672 = vrot.slane %v667, 4
      %v674 = vshrl.u32 %v490, 16
      %v676 = vrot.slane %v674, 7
      %v677 = vshll.u32 %v490, 16
      %v679 = vor.u32 %v676, %v677
      %v680 = vsel %vm430, %v672, %v679
      %v681 = vrot.slane %v676, 4
      %v683 = vshrl.u32 %v491, 16
      %v685 = vrot.slane %v683, 7
      %v686 = vshll.u32 %v491, 16
      %v688 = vor.u32 %v685, %v686
      %v689 = vsel %vm430, %v681, %v688
      %v690 = vrot.slane %v685, 4
      %v692 = vshrl.u32 %v492, 16
      %v694 = vrot.slane %v692, 7
      %v695 = vshll.u32 %v492, 16
      %v697 = vor.u32 %v694, %v695
      %v698 = vsel %vm430, %v690, %v697
      %v699 = vrot.slane %v694, 4
      %v701 = vshrl.u32 %v493, 16
      %v703 = vrot.slane %v701, 7
      %v704 = vshll.u32 %v493, 16
      %v706 = vor.u32 %v703, %v704
      %v707 = vsel %vm430, %v699, %v706
      %v708 = vrot.slane %v703, 4
      %v710 = vshrl.u32 %v494, 16
      %v712 = vrot.slane %v710, 7
      %v713 = vshll.u32 %v494, 16
      %v715 = vor.u32 %v712, %v713
      %v716 = vsel %vm430, %v708, %v715
      %v717 = vrot.slane %v712, 4
      %v719 = vshrl.u32 %v495, 16
      %v721 = vrot.slane %v719, 7
      %v722 = vshll.u32 %v495, 16
      %v724 = vor.u32 %v721, %v722
      %v725 = vsel %vm430, %v717, %v724
      %v726 = vrot.slane %v721, 4
      %v728 = vshrl.u32 %v496, 16
      %v730 = vrot.slane %v728, 7
      %v731 = vshll.u32 %v496, 16
      %v733 = vor.u32 %v730, %v731
      %v734 = vsel %vm430, %v726, %v733
      %v735 = vrot.slane %v730, 4
      %v737 = vshrl.u32 %v497, 16
      %v739 = vrot.slane %v737, 7
      %v740 = vshll.u32 %v497, 16
      %v742 = vor.u32 %v739, %v740
      %v743 = vsel %vm430, %v735, %v742
      %v744 = vrot.slane %v739, 4
      %v746 = vshrl.u32 %v498, 16
      %v748 = vrot.slane %v746, 7
      %v749 = vshll.u32 %v498, 16
      %v751 = vor.u32 %v748, %v749
      %v752 = vsel %vm430, %v744, %v751
      %v753 = vrot.slane %v748, 4
      %v755 = vshrl.u32 %v499, 16
      %v757 = vrot.slane %v755, 7
      %v758 = vshll.u32 %v499, 16
      %v760 = vor.u32 %v757, %v758
      %v761 = vsel %vm430, %v753, %v760
      %v762 = vrot.slane %v757, 4
      %v764 = vshrl.u32 %v500, 16
      %v766 = vrot.slane %v764, 7
      %v767 = vshll.u32 %v500, 16
      %v769 = vor.u32 %v766, %v767
      %v770 = vsel %vm430, %v762, %v769
      %v771 = vrot.slane %v766, 4
      %v773 = vshrl.u32 %v501, 16
      %v775 = vrot.slane %v773, 7
      %v776 = vshll.u32 %v501, 16
      %v778 = vor.u32 %v775, %v776
      %v779 = vsel %vm430, %v771, %v778
      %v780 = vrot.slane %v775, 4
      %v782 = vshrl.u32 %v502, 16
      %v784 = vrot.slane %v782, 7
      %v785 = vshll.u32 %v502, 16
      %v787 = vor.u32 %v784, %v785
      %v788 = vsel %vm430, %v780, %v787
      %v789 = vrot.slane %v784, 4
      %v791 = vshrl.u32 %v503, 16
      %v793 = vrot.slane %v791, 7
      %v794 = vshll.u32 %v503, 16
      %v796 = vor.u32 %v793, %v794
      %v797 = vsel %vm430, %v789, %v796
      %v798 = vrot.slane %v793, 4
      %v800 = vshrl.u32 %v504, 16
      %v802 = vrot.slane %v800, 7
      %v803 = vshll.u32 %v504, 16
      %v805 = vor.u32 %v802, %v803
      %v806 = vsel %vm430, %v798, %v805
      %v807 = vrot.slane %v802, 4
      %v809 = vshrl.u32 %v505, 16
      %v811 = vrot.slane %v809, 7
      %v812 = vshll.u32 %v505, 16
      %v814 = vor.u32 %v811, %v812
      %v815 = vsel %vm430, %v807, %v814
      %v816 = vrot.slane %v811, 4
      %v818 = vshrl.u32 %v506, 16
      %v820 = vrot.slane %v818, 7
      %v821 = vshll.u32 %v506, 16
      %v823 = vor.u32 %v820, %v821
      %v824 = vsel %vm430, %v816, %v823
      %v825 = vrot.slane %v820, 4
      %v827 = vshrl.u32 %v507, 16
      %v829 = vrot.slane %v827, 7
      %v830 = vshll.u32 %v507, 16
      %v832 = vor.u32 %v829, %v830
      %v833 = vsel %vm430, %v825, %v832
      %v834 = vrot.slane %v829, 4
      %v836 = vshrl.u32 %v508, 16
      %v838 = vrot.slane %v836, 7
      %v839 = vshll.u32 %v508, 16
      %v841 = vor.u32 %v838, %v839
      %v842 = vsel %vm430, %v834, %v841
      %v843 = vrot.slane %v838, 4
      %v845 = vshrl.u32 %v509, 16
      %v847 = vrot.slane %v845, 7
      %v848 = vshll.u32 %v509, 16
      %v850 = vor.u32 %v847, %v848
      %v851 = vsel %vm430, %v843, %v850
      %v852 = vrot.slane %v847, 4
      %v854 = vshrl.u32 %v510, 16
      %v856 = vrot.slane %v854, 7
      %v857 = vshll.u32 %v510, 16
      %v859 = vor.u32 %v856, %v857
      %v860 = vsel %vm430, %v852, %v859
      %v861 = vrot.slane %v856, 4
      %v863 = vshrl.u32 %v511, 16
      %v865 = vrot.slane %v863, 7
      %v866 = vshll.u32 %v511, 16
      %v868 = vor.u32 %v865, %v866
      %v869 = vsel %vm430, %v861, %v868
      %v870 = vrot.slane %v865, 4
      %v872 = vshrl.u32 %v512, 16
      %v874 = vrot.slane %v872, 7
      %v875 = vshll.u32 %v512, 16
      %v877 = vor.u32 %v874, %v875
      %v878 = vsel %vm430, %v870, %v877
      %v879 = vrot.slane %v874, 4
      %v881 = vshrl.u32 %v513, 16
      %v883 = vrot.slane %v881, 7
      %v884 = vshll.u32 %v513, 16
      %v886 = vor.u32 %v883, %v884
      %v887 = vsel %vm430, %v879, %v886
      %v888 = vrot.slane %v883, 4
      %v890 = vshrl.u32 %v514, 16
      %v892 = vrot.slane %v890, 7
      %v893 = vshll.u32 %v514, 16
      %v895 = vor.u32 %v892, %v893
      %v896 = vsel %vm430, %v888, %v895
      %v897 = vrot.slane %v892, 4
      %v899 = vshrl.u32 %v515, 16
      %v901 = vrot.slane %v899, 7
      %v902 = vshll.u32 %v515, 16
      %v904 = vor.u32 %v901, %v902
      %v905 = vsel %vm430, %v897, %v904
      %v906 = vrot.slane %v901, 4
      %v908 = vshrl.u32 %v516, 16
      %v910 = vrot.slane %v908, 7
      %v911 = vshll.u32 %v516, 16
      %v913 = vor.u32 %v910, %v911
      %v914 = vsel %vm430, %v906, %v913
      %v915 = vrot.slane %v910, 4
      %v917 = vshrl.u32 %v517, 16
      %v919 = vrot.slane %v917, 7
      %v920 = vshll.u32 %v517, 16
      %v922 = vor.u32 %v919, %v920
      %v923 = vsel %vm430, %v915, %v922
      %v924 = vrot.slane %v919, 4
      %v926 = vshrl.u32 %v518, 16
      %v928 = vrot.slane %v926, 7
      %v929 = vshll.u32 %v518, 16
      %v931 = vor.u32 %v928, %v929
      %v932 = vsel %vm430, %v924, %v931
      %v933 = vrot.slane %v928, 4
      %v935 = vshrl.u32 %v519, 16
      %v937 = vrot.slane %v935, 7
      %v938 = vshll.u32 %v519, 16
      %v940 = vor.u32 %v937, %v938
      %v941 = vsel %vm430, %v933, %v940
      %v942 = vrot.slane %v937, 4
      %v944 = vshrl.u32 %v520, 16
      %v946 = vrot.slane %v944, 7
      %v947 = vshll.u32 %v520, 16
      %v949 = vor.u32 %v946, %v947
      %v950 = vsel %vm430, %v942, %v949
      %v951 = vrot.slane %v946, 4
      %v1001 = vld [vmem:[#allocation2 + $0xc] sm:$0xf]
      %v1002 = vsel %vm463, %v527, %v1001
      %1003 = vst [vmem:[#allocation2 + $0xc] sm:$0xf] %v1002
      %1004 = vst.msk [vmem:[#allocation2 + $0x10] sm:$0xf] %vm467, %v536
      %1005 = vst.msk [vmem:[#allocation2 + $0x14] sm:$0xf] %vm467, %v545
      %1006 = vst.msk [vmem:[#allocation2 + $0x18] sm:$0xf] %vm467, %v554
      %1007 = vst.msk [vmem:[#allocation2 + $0x1c] sm:$0xf] %vm467, %v563
      %1008 = vst.msk [vmem:[#allocation2 + $0x20] sm:$0xf] %vm467, %v572
      %1009 = vst.msk [vmem:[#allocation2 + $0x24] sm:$0xf] %vm467, %v581
      %1010 = vst.msk [vmem:[#allocation2 + $0x28] sm:$0xf] %vm467, %v590
      %1011 = vst.msk [vmem:[#allocation2 + $0x2c] sm:$0xf] %vm467, %v599
      %1012 = vst.msk [vmem:[#allocation2 + $0x30] sm:$0xf] %vm467, %v608
      %1013 = vst.msk [vmem:[#allocation2 + $0x34] sm:$0xf] %vm467, %v617
      %1014 = vst.msk [vmem:[#allocation2 + $0x38] sm:$0xf] %vm467, %v626
      %1015 = vst.msk [vmem:[#allocation2 + $0x3c] sm:$0xf] %vm467, %v635
      %1016 = vst.msk [vmem:[#allocation2 + $0x40] sm:$0xf] %vm467, %v644
      %1017 = vst.msk [vmem:[#allocation2 + $0x44] sm:$0xf] %vm467, %v653
      %1018 = vst.msk [vmem:[#allocation2 + $0x48] sm:$0xf] %vm467, %v662
      %1019 = vst.msk [vmem:[#allocation2 + $0x4c] sm:$0xf] %vm467, %v671
      %1020 = vst.msk [vmem:[#allocation2 + $0x50] sm:$0xf] %vm467, %v680
      %1021 = vst.msk [vmem:[#allocation2 + $0x54] sm:$0xf] %vm467, %v689
      %1022 = vst.msk [vmem:[#allocation2 + $0x58] sm:$0xf] %vm467, %v698
      %1023 = vst.msk [vmem:[#allocation2 + $0x5c] sm:$0xf] %vm467, %v707
      %1024 = vst.msk [vmem:[#allocation2 + $0x60] sm:$0xf] %vm467, %v716
      %1025 = vst.msk [vmem:[#allocation2 + $0x64] sm:$0xf] %vm467, %v725
      %1026 = vst.msk [vmem:[#allocation2 + $0x68] sm:$0xf] %vm467, %v734
      %1027 = vst.msk [vmem:[#allocation2 + $0x6c] sm:$0xf] %vm467, %v743
      %1028 = vst.msk [vmem:[#allocation2 + $0x70] sm:$0xf] %vm467, %v752
      %1029 = vst.msk [vmem:[#allocation2 + $0x74] sm:$0xf] %vm467, %v761
      %1030 = vst.msk [vmem:[#allocation2 + $0x78] sm:$0xf] %vm467, %v770
      %1031 = vst.msk [vmem:[#allocation2 + $0x7c] sm:$0xf] %vm467, %v779
      %1032 = vst.msk [vmem:[#allocation2 + $0x80] sm:$0xf] %vm467, %v788
      %1033 = vst.msk [vmem:[#allocation2 + $0x84] sm:$0xf] %vm467, %v797
      %1034 = vst.msk [vmem:[#allocation2 + $0x88] sm:$0xf] %vm467, %v806
      %1035 = vst.msk [vmem:[#allocation2 + $0x8c] sm:$0xf] %vm467, %v815
      %1036 = vst.msk [vmem:[#allocation2 + $0x90] sm:$0xf] %vm467, %v824
      %1037 = vst.msk [vmem:[#allocation2 + $0x94] sm:$0xf] %vm467, %v833
      %1038 = vst.msk [vmem:[#allocation2 + $0x98] sm:$0xf] %vm467, %v842
      %1039 = vst.msk [vmem:[#allocation2 + $0x9c] sm:$0xf] %vm467, %v851
      %1040 = vst.msk [vmem:[#allocation2 + $0xa0] sm:$0xf] %vm467, %v860
      %1041 = vst.msk [vmem:[#allocation2 + $0xa4] sm:$0xf] %vm467, %v869
      %1042 = vst.msk [vmem:[#allocation2 + $0xa8] sm:$0xf] %vm467, %v878
      %1043 = vst.msk [vmem:[#allocation2 + $0xac] sm:$0xf] %vm467, %v887
      %1044 = vst.msk [vmem:[#allocation2 + $0xb0] sm:$0xf] %vm467, %v896
      %1045 = vst.msk [vmem:[#allocation2 + $0xb4] sm:$0xf] %vm467, %v905
      %1046 = vst.msk [vmem:[#allocation2 + $0xb8] sm:$0xf] %vm467, %v914
      %1047 = vst.msk [vmem:[#allocation2 + $0xbc] sm:$0xf] %vm467, %v923
      %1048 = vst.msk [vmem:[#allocation2 + $0xc0] sm:$0xf] %vm467, %v932
      %1049 = vst.msk [vmem:[#allocation2 + $0xc4] sm:$0xf] %vm467, %v941
      %1050 = vst.msk [vmem:[#allocation2 + $0xc8] sm:$0xf] %vm467, %v950
      %v1051 = vld [vmem:[#allocation2 + $0xcc] sm:$0x1]
      %v1052 = vsel %vm422, %v951, %v1051
      %1053 = vst [vmem:[#allocation2 + $0xcc] sm:$0x1] %v1052
      %v1054 = vld [vmem:[%s403] sm:$0xf]
      %v1055 = vld [vmem:[%s403 + $0x4] sm:$0xf]
      %v1056 = vld [vmem:[%s403 + $0x8] sm:$0xf]
      %v1057 = vld [vmem:[%s403 + $0xc] sm:$0xf]
      %v1058 = vld [vmem:[%s403 + $0x10] sm:$0xf]
      %v1059 = vld [vmem:[%s403 + $0x14] sm:$0xf]
      %v1061 = vshrl.u32 %v1054, 16
      %v1063 = vrot.slane %v1061, 7
      %v1064 = vshll.u32 %v1054, 16
      %v1066 = vor.u32 %v1063, %v1064
      %v1067 = vrot.slane %v1063, 4
      %v1069 = vshrl.u32 %v1055, 16
      %v1071 = vrot.slane %v1069, 7
      %v1072 = vshll.u32 %v1055, 16
      %v1074 = vor.u32 %v1071, %v1072
      %v1075 = vsel %vm430, %v1067, %v1074
      %v1076 = vrot.slane %v1071, 4
      %v1078 = vshrl.u32 %v1056, 16
      %v1080 = vrot.slane %v1078, 7
      %v1081 = vshll.u32 %v1056, 16
      %v1083 = vor.u32 %v1080, %v1081
      %v1084 = vsel %vm430, %v1076, %v1083
      %v1085 = vrot.slane %v1080, 4
      %v1087 = vshrl.u32 %v1057, 16
      %v1089 = vrot.slane %v1087, 7
      %v1090 = vshll.u32 %v1057, 16
      %v1092 = vor.u32 %v1089, %v1090
      %v1093 = vsel %vm430, %v1085, %v1092
      %v1094 = vrot.slane %v1089, 4
      %v1096 = vshrl.u32 %v1058, 16
      %v1098 = vrot.slane %v1096, 7
      %v1099 = vshll.u32 %v1058, 16
      %v1101 = vor.u32 %v1098, %v1099
      %v1102 = vsel %vm430, %v1094, %v1101
      %v1103 = vrot.slane %v1098, 4
      %v1105 = vshrl.u32 %v1059, 16
      %v1107 = vrot.slane %v1105, 7
      %v1108 = vshll.u32 %v1059, 16
      %v1110 = vor.u32 %v1107, %v1108
      %v1111 = vsel %vm430, %v1103, %v1110
      %v1112 = vrot.slane %v1107, 4
      %v1120 = vld [vmem:[#allocation2 + $0xcc] sm:$0xf]
      %v1121 = vsel %vm463, %v1066, %v1120
      %1122 = vst [vmem:[#allocation2 + $0xcc] sm:$0xf] %v1121
      %1123 = vst.msk [vmem:[#allocation2 + $0xd0] sm:$0xf] %vm467, %v1075
      %1124 = vst.msk [vmem:[#allocation2 + $0xd4] sm:$0xf] %vm467, %v1084
      %1125 = vst.msk [vmem:[#allocation2 + $0xd8] sm:$0xf] %vm467, %v1093
      %1126 = vst.msk [vmem:[#allocation2 + $0xdc] sm:$0xf] %vm467, %v1102
      %1127 = vst.msk [vmem:[#allocation2 + $0xe0] sm:$0xf] %vm467, %v1111
      %v1128 = vld [vmem:[#allocation2 + $0xe4] sm:$0x1]
      %v1129 = vsel %vm422, %v1112, %v1128
      %1130 = vst [vmem:[#allocation2 + $0xe4] sm:$0x1] %v1129
      %p1131 = scmp.eq.s32.totalorder %s22, 0
      // Predicated region
      $region45: #{tpu_custom_call.1} parent=43 // pred_check
        %p1132 = pneg %p1131
      $region46: #{tpu_custom_call.1} parent=43 // pred_check_branch
        %1134 = sbr.rel (%p1132) target = $region48
      $region47: #{tpu_custom_call.1} parent=43 // pred_region
        %v1135 = vld [vmem:[#allocation2] sm:$0xf]
        %v1136 = vsel %vm463, 0, %v1135
        %1137 = vst [vmem:[#allocation2] sm:$0xf] %v1136
        %1138 = vst.msk [vmem:[#allocation2 + $0x4] sm:$0xf] %vm467, 0
        %1139 = vst.msk [vmem:[#allocation2 + $0x8] sm:$0xf] %vm467, 0
        %v1140 = vld [vmem:[#allocation2 + $0xc] sm:$0x1]
        %v1141 = vsel %vm422, 0, %v1140
        %1142 = vst [vmem:[#allocation2 + $0xc] sm:$0x1] %v1141
        %v1143 = vld [vmem:[#allocation2 + $0xcc] sm:$0xf]
        %v1144 = vsel %vm463, 0, %v1143
        %1145 = vst [vmem:[#allocation2 + $0xcc] sm:$0xf] %v1144
        %1146 = vst.msk [vmem:[#allocation2 + $0xd0] sm:$0xf] %vm467, 0
        %1147 = vst.msk [vmem:[#allocation2 + $0xd4] sm:$0xf] %vm467, 0
        %1148 = vst.msk [vmem:[#allocation2 + $0xd8] sm:$0xf] %vm467, 0
        %1149 = vst.msk [vmem:[#allocation2 + $0xdc] sm:$0xf] %vm467, 0
        %1150 = vst.msk [vmem:[#allocation2 + $0xe0] sm:$0xf] %vm467, 0
        %v1151 = vld [vmem:[#allocation2 + $0xe4] sm:$0x1]
        %v1152 = vsel %vm422, 0, %v1151
        %1153 = vst [vmem:[#allocation2 + $0xe4] sm:$0x1] %v1152
      $region48: #{tpu_custom_call.1} parent=43 // pred_fallthru
        _
      %v1154 = vld [vmem:[#allocation2] sm:$0xf]
      %v1155 = vld [vmem:[#allocation2 + $0x4] sm:$0xf]
      %v1156 = vld [vmem:[#allocation2 + $0x8] sm:$0xf]
      %v1157 = vld [vmem:[#allocation2 + $0xc] sm:$0xf]
      %v1158 = vld [vmem:[#allocation2 + $0x10] sm:$0xf]
      %v1159 = vld [vmem:[#allocation2 + $0x14] sm:$0xf]
      %v1160 = vld [vmem:[#allocation2 + $0x18] sm:$0xf]
      %v1161 = vld [vmem:[#allocation2 + $0x1c] sm:$0xf]
      %v1162 = vld [vmem:[#allocation2 + $0x20] sm:$0xf]
      %v1163 = vld [vmem:[#allocation2 + $0x24] sm:$0xf]
      %v1164 = vld [vmem:[#allocation2 + $0x28] sm:$0xf]
      %v1165 = vld [vmem:[#allocation2 + $0x2c] sm:$0xf]
      %v1166 = vld [vmem:[#allocation2 + $0x30] sm:$0xf]
      %v1167 = vld [vmem:[#allocation2 + $0x34] sm:$0xf]
      %v1168 = vld [vmem:[#allocation2 + $0x38] sm:$0xf]
      %v1169 = vld [vmem:[#allocation2 + $0x3c] sm:$0xf]
      %v1170 = vld [vmem:[#allocation2 + $0x40] sm:$0xf]
      %v1171 = vld [vmem:[#allocation2 + $0x44] sm:$0xf]
      %v1172 = vld [vmem:[#allocation2 + $0x48] sm:$0xf]
      %v1173 = vld [vmem:[#allocation2 + $0x4c] sm:$0xf]
      %v1174 = vld [vmem:[#allocation2 + $0x50] sm:$0xf]
      %v1175 = vld [vmem:[#allocation2 + $0x54] sm:$0xf]
      %v1176 = vld [vmem:[#allocation2 + $0x58] sm:$0xf]
      %v1177 = vld [vmem:[#allocation2 + $0x5c] sm:$0xf]
      %v1178 = vld [vmem:[#allocation2 + $0x60] sm:$0xf]
      %v1179 = vld [vmem:[#allocation2 + $0x64] sm:$0xf]
      %v1180 = vld [vmem:[#allocation2 + $0x68] sm:$0xf]
      %v1181 = vld [vmem:[#allocation2 + $0x6c] sm:$0xf]
      %v1182 = vld [vmem:[#allocation2 + $0x70] sm:$0xf]
      %v1183 = vld [vmem:[#allocation2 + $0x74] sm:$0xf]
      %v1184 = vld [vmem:[#allocation2 + $0x78] sm:$0xf]
      %v1185 = vld [vmem:[#allocation2 + $0x7c] sm:$0xf]
      %v1186 = vld [vmem:[#allocation2 + $0x80] sm:$0xf]
      %v1187 = vld [vmem:[#allocation2 + $0x84] sm:$0xf]
      %v1188 = vld [vmem:[#allocation2 + $0x88] sm:$0xf]
      %v1189 = vld [vmem:[#allocation2 + $0x8c] sm:$0xf]
      %v1190 = vld [vmem:[#allocation2 + $0x90] sm:$0xf]
      %v1191 = vld [vmem:[#allocation2 + $0x94] sm:$0xf]
      %v1192 = vld [vmem:[#allocation2 + $0x98] sm:$0xf]
      %v1193 = vld [vmem:[#allocation2 + $0x9c] sm:$0xf]
      %v1194 = vld [vmem:[#allocation2 + $0xa0] sm:$0xf]
      %v1195 = vld [vmem:[#allocation2 + $0xa4] sm:$0xf]
      %v1196 = vld [vmem:[#allocation2 + $0xa8] sm:$0xf]
      %v1197 = vld [vmem:[#allocation2 + $0xac] sm:$0xf]
      %v1198 = vld [vmem:[#allocation2 + $0xb0] sm:$0xf]
      %v1199 = vld [vmem:[#allocation2 + $0xb4] sm:$0xf]
      %v1200 = vld [vmem:[#allocation2 + $0xb8] sm:$0xf]
      %v1201 = vld [vmem:[#allocation2 + $0xbc] sm:$0xf]
      %v1202 = vld [vmem:[%s3] sm:$0x3]
      %v1203 = vld [vmem:[#allocation2 + $0xc0] sm:$0x1]
      %s1204 = scalar_lea.vmem %s3, 2
      %v1205 = vld [vmem:[%s1204] sm:$0x3]
      %v1255 = vunpack.c.l.b16 %v1154
      %v1256 = vunpack.c.l.b16 %v1155
      %v1257 = vunpack.c.l.b16 %v1156
      %v1258 = vunpack.c.l.b16 %v1157
      %v1259 = vunpack.c.l.b16 %v1158
      %v1260 = vunpack.c.l.b16 %v1159
      %v1261 = vunpack.c.l.b16 %v1160
      %v1262 = vunpack.c.l.b16 %v1161
      %v1263 = vunpack.c.l.b16 %v1162
      %v1264 = vunpack.c.l.b16 %v1163
      %v1265 = vunpack.c.l.b16 %v1164
      %v1266 = vunpack.c.l.b16 %v1165
      %v1267 = vunpack.c.l.b16 %v1166
      %v1268 = vunpack.c.l.b16 %v1167
      %v1269 = vunpack.c.l.b16 %v1168
      %v1270 = vunpack.c.l.b16 %v1169
      %v1271 = vunpack.c.l.b16 %v1170
      %v1272 = vunpack.c.l.b16 %v1171
      %v1273 = vunpack.c.l.b16 %v1172
      %v1274 = vunpack.c.l.b16 %v1173
      %v1275 = vunpack.c.l.b16 %v1174
      %v1276 = vunpack.c.l.b16 %v1175
      %v1277 = vunpack.c.l.b16 %v1176
      %v1278 = vunpack.c.l.b16 %v1177
      %v1279 = vunpack.c.l.b16 %v1178
      %v1280 = vunpack.c.l.b16 %v1179
      %v1281 = vunpack.c.l.b16 %v1180
      %v1282 = vunpack.c.l.b16 %v1181
      %v1283 = vunpack.c.l.b16 %v1182
      %v1284 = vunpack.c.l.b16 %v1183
      %v1285 = vunpack.c.l.b16 %v1184
      %v1286 = vunpack.c.l.b16 %v1185
      %v1287 = vunpack.c.l.b16 %v1186
      %v1288 = vunpack.c.l.b16 %v1187
      %v1289 = vunpack.c.l.b16 %v1188
      %v1290 = vunpack.c.l.b16 %v1189
      %v1291 = vunpack.c.l.b16 %v1190
      %v1292 = vunpack.c.l.b16 %v1191
      %v1293 = vunpack.c.l.b16 %v1192
      %v1294 = vunpack.c.l.b16 %v1193
      %v1295 = vunpack.c.l.b16 %v1194
      %v1296 = vunpack.c.l.b16 %v1195
      %v1297 = vunpack.c.l.b16 %v1196
      %v1298 = vunpack.c.l.b16 %v1197
      %v1299 = vunpack.c.l.b16 %v1198
      %v1300 = vunpack.c.l.b16 %v1199
      %v1301 = vunpack.c.l.b16 %v1200
      %v1302 = vunpack.c.l.b16 %v1201
      %v1303 = vunpack.c.l.b16 %v1203
      %v1304 = vpack.c.b16 %v1256, %v1255
      %v1305 = vpack.c.b16 %v1258, %v1257
      %v1306 = vpack.c.b16 %v1260, %v1259
      %v1307 = vpack.c.b16 %v1262, %v1261
      %v1308 = vpack.c.b16 %v1264, %v1263
      %v1309 = vpack.c.b16 %v1266, %v1265
      %v1310 = vpack.c.b16 %v1268, %v1267
      %v1311 = vpack.c.b16 %v1270, %v1269
      %v1312 = vpack.c.b16 %v1272, %v1271
      %v1313 = vpack.c.b16 %v1274, %v1273
      %v1314 = vpack.c.b16 %v1276, %v1275
      %v1315 = vpack.c.b16 %v1278, %v1277
      %v1316 = vpack.c.b16 %v1280, %v1279
      %v1317 = vpack.c.b16 %v1282, %v1281
      %v1318 = vpack.c.b16 %v1284, %v1283
      %v1319 = vpack.c.b16 %v1286, %v1285
      %v1320 = vpack.c.b16 %v1288, %v1287
      %v1321 = vpack.c.b16 %v1290, %v1289
      %v1322 = vpack.c.b16 %v1292, %v1291
      %v1323 = vpack.c.b16 %v1294, %v1293
      %v1324 = vpack.c.b16 %v1296, %v1295
      %v1325 = vpack.c.b16 %v1298, %v1297
      %v1326 = vpack.c.b16 %v1300, %v1299
      %v1327 = vpack.c.b16 %v1302, %v1301
      %v1328 = vpack.c.b16 %v1303, %v1303
      %vm1329 = vsmask.f32 7424
      %v1331 = vshrl.u32 %v1304, 16
      %v1333 = vshll.u32 %v1304, 16
      %v1335 = vrot.slane %v1333, 1
      %v1336 = vor.u32 %v1331, %v1335
      %v1338 = vshll.u32 %v1305, 16
      %v1340 = vrot.slane %v1338, 1
      %v1341 = vsel %vm1329, %v1336, %v1340
      %v1342 = vshrl.u32 %v1305, 16
      %v1344 = vor.u32 %v1342, %v1340
      %v1346 = vshll.u32 %v1306, 16
      %v1348 = vrot.slane %v1346, 1
      %v1349 = vsel %vm1329, %v1344, %v1348
      %v1350 = vshrl.u32 %v1306, 16
      %v1352 = vor.u32 %v1350, %v1348
      %v1354 = vshll.u32 %v1307, 16
      %v1356 = vrot.slane %v1354, 1
      %v1357 = vsel %vm1329, %v1352, %v1356
      %v1358 = vshrl.u32 %v1307, 16
      %v1360 = vor.u32 %v1358, %v1356
      %v1362 = vshll.u32 %v1308, 16
      %v1364 = vrot.slane %v1362, 1
      %v1365 = vsel %vm1329, %v1360, %v1364
      %v1366 = vshrl.u32 %v1308, 16
      %v1368 = vor.u32 %v1366, %v1364
      %v1370 = vshll.u32 %v1309, 16
      %v1372 = vrot.slane %v1370, 1
      %v1373 = vsel %vm1329, %v1368, %v1372
      %v1374 = vshrl.u32 %v1309, 16
      %v1376 = vor.u32 %v1374, %v1372
      %v1378 = vshll.u32 %v1310, 16
      %v1380 = vrot.slane %v1378, 1
      %v1381 = vsel %vm1329, %v1376, %v1380
      %v1382 = vshrl.u32 %v1310, 16
      %v1384 = vor.u32 %v1382, %v1380
      %v1386 = vshll.u32 %v1311, 16
      %v1388 = vrot.slane %v1386, 1
      %v1389 = vsel %vm1329, %v1384, %v1388
      %v1390 = vshrl.u32 %v1311, 16
      %v1392 = vor.u32 %v1390, %v1388
      %v1394 = vshll.u32 %v1312, 16
      %v1396 = vrot.slane %v1394, 1
      %v1397 = vsel %vm1329, %v1392, %v1396
      %v1398 = vshrl.u32 %v1312, 16
      %v1400 = vor.u32 %v1398, %v1396
      %v1402 = vshll.u32 %v1313, 16
      %v1404 = vrot.slane %v1402, 1
      %v1405 = vsel %vm1329, %v1400, %v1404
      %v1406 = vshrl.u32 %v1313, 16
      %v1408 = vor.u32 %v1406, %v1404
      %v1410 = vshll.u32 %v1314, 16
      %v1412 = vrot.slane %v1410, 1
      %v1413 = vsel %vm1329, %v1408, %v1412
      %v1414 = vshrl.u32 %v1314, 16
      %v1416 = vor.u32 %v1414, %v1412
      %v1418 = vshll.u32 %v1315, 16
      %v1420 = vrot.slane %v1418, 1
      %v1421 = vsel %vm1329, %v1416, %v1420
      %v1422 = vshrl.u32 %v1315, 16
      %v1424 = vor.u32 %v1422, %v1420
      %v1426 = vshll.u32 %v1316, 16
      %v1428 = vrot.slane %v1426, 1
      %v1429 = vsel %vm1329, %v1424, %v1428
      %v1430 = vshrl.u32 %v1316, 16
      %v1432 = vor.u32 %v1430, %v1428
      %v1434 = vshll.u32 %v1317, 16
      %v1436 = vrot.slane %v1434, 1
      %v1437 = vsel %vm1329, %v1432, %v1436
      %v1438 = vshrl.u32 %v1317, 16
      %v1440 = vor.u32 %v1438, %v1436
      %v1442 = vshll.u32 %v1318, 16
      %v1444 = vrot.slane %v1442, 1
      %v1445 = vsel %vm1329, %v1440, %v1444
      %v1446 = vshrl.u32 %v1318, 16
      %v1448 = vor.u32 %v1446, %v1444
      %v1450 = vshll.u32 %v1319, 16
      %v1452 = vrot.slane %v1450, 1
      %v1453 = vsel %vm1329, %v1448, %v1452
      %v1454 = vshrl.u32 %v1319, 16
      %v1456 = vor.u32 %v1454, %v1452
      %v1458 = vshll.u32 %v1320, 16
      %v1460 = vrot.slane %v1458, 1
      %v1461 = vsel %vm1329, %v1456, %v1460
      %v1462 = vshrl.u32 %v1320, 16
      %v1464 = vor.u32 %v1462, %v1460
      %v1466 = vshll.u32 %v1321, 16
      %v1468 = vrot.slane %v1466, 1
      %v1469 = vsel %vm1329, %v1464, %v1468
      %v1470 = vshrl.u32 %v1321, 16
      %v1472 = vor.u32 %v1470, %v1468
      %v1474 = vshll.u32 %v1322, 16
      %v1476 = vrot.slane %v1474, 1
      %v1477 = vsel %vm1329, %v1472, %v1476
      %v1478 = vshrl.u32 %v1322, 16
      %v1480 = vor.u32 %v1478, %v1476
      %v1482 = vshll.u32 %v1323, 16
      %v1484 = vrot.slane %v1482, 1
      %v1485 = vsel %vm1329, %v1480, %v1484
      %v1486 = vshrl.u32 %v1323, 16
      %v1488 = vor.u32 %v1486, %v1484
      %v1490 = vshll.u32 %v1324, 16
      %v1492 = vrot.slane %v1490, 1
      %v1493 = vsel %vm1329, %v1488, %v1492
      %v1494 = vshrl.u32 %v1324, 16
      %v1496 = vor.u32 %v1494, %v1492
      %v1498 = vshll.u32 %v1325, 16
      %v1500 = vrot.slane %v1498, 1
      %v1501 = vsel %vm1329, %v1496, %v1500
      %v1502 = vshrl.u32 %v1325, 16
      %v1504 = vor.u32 %v1502, %v1500
      %v1506 = vshll.u32 %v1326, 16
      %v1508 = vrot.slane %v1506, 1
      %v1509 = vsel %vm1329, %v1504, %v1508
      %v1510 = vshrl.u32 %v1326, 16
      %v1512 = vor.u32 %v1510, %v1508
      %v1514 = vshll.u32 %v1327, 16
      %v1516 = vrot.slane %v1514, 1
      %v1517 = vsel %vm1329, %v1512, %v1516
      %v1518 = vshrl.u32 %v1327, 16
      %v1520 = vor.u32 %v1518, %v1516
      %v1522 = vshll.u32 %v1328, 16
      %v1524 = vrot.slane %v1522, 1
      %v1525 = vsel %vm1329, %v1520, %v1524
      %vm1526 = vcmask 23552
      %v1528 = vsel %vm1526, %v1341, 0
      %v1531 = vsel %vm1526, %v1349, 0
      %v1534 = vsel %vm1526, %v1357, 0
      %v1537 = vsel %vm1526, %v1365, 0
      %v1540 = vsel %vm1526, %v1373, 0
      %v1543 = vsel %vm1526, %v1381, 0
      %v1546 = vsel %vm1526, %v1389, 0
      %v1549 = vsel %vm1526, %v1397, 0
      %v1552 = vsel %vm1526, %v1405, 0
      %v1555 = vsel %vm1526, %v1413, 0
      %v1558 = vsel %vm1526, %v1421, 0
      %v1561 = vsel %vm1526, %v1429, 0
      %v1564 = vsel %vm1526, %v1437, 0
      %v1567 = vsel %vm1526, %v1445, 0
      %v1570 = vsel %vm1526, %v1453, 0
      %v1573 = vsel %vm1526, %v1461, 0
      %v1576 = vsel %vm1526, %v1469, 0
      %v1579 = vsel %vm1526, %v1477, 0
      %v1582 = vsel %vm1526, %v1485, 0
      %v1585 = vsel %vm1526, %v1493, 0
      %v1588 = vsel %vm1526, %v1501, 0
      %v1591 = vsel %vm1526, %v1509, 0
      %v1594 = vsel %vm1526, %v1517, 0
      %v1597 = vsel %vm1526, %v1525, 0
      %vm1599 = vcmask 1040384
      %vm1600 = vcmask 1041408
      %v1601 = vsel %vm1599, 4294967295, 65535
      %v1602 = vsel %vm1600, %v1601, 0
      %v1604 = vand.u32 %v1205, %v1602
      %1606 = vmatprep.subr.bf16.mxu0 0
      %1607 = vmatpush1.bf16.msra.mxu0 0
      %1608 = vmatprep.subr.bf16.mxu0 0
      %1609 = vmatpush1.bf16.msra.mxu0 0
      %1610 = vmatprep.subr.bf16.mxu0 0
      %1611 = vmatpush1.bf16.msra.mxu0 0
      %1612 = vmatprep.subr.bf16.mxu0 0
      %1613 = vmatpush1.bf16.msra.mxu0 0
      %1614 = vmatprep.subr.bf16.mxu0 0
      %1615 = vmatpush1.bf16.msra.mxu0 0
      %1616 = vmatprep.subr.bf16.mxu0 0
      %1617 = vmatpush1.bf16.msra.mxu0 0
      %1618 = vmatprep.subr.bf16.mxu0 0
      %1619 = vmatpush1.bf16.msra.mxu0 0
      %1620 = vmatprep.subr.bf16.mxu0 0
      %1621 = vmatpush1.bf16.msra.mxu0 %v1604
      %1622 = vmatprep.subr.bf16.mxu0 0
      %1623 = vmatpush2.bf16.msra.mxu0 0
      %1624 = vmatprep.subr.bf16.mxu0 0
      %1625 = vmatpush2.bf16.msra.mxu0 0
      %1626 = vmatprep.subr.bf16.mxu0 0
      %1627 = vmatpush2.bf16.msra.mxu0 0
      %1628 = vmatprep.subr.bf16.mxu0 0
      %1629 = vmatpush2.bf16.msra.mxu0 0
      %1630 = vmatprep.subr.bf16.mxu0 0
      %1631 = vmatpush2.bf16.msra.mxu0 0
      %1632 = vmatprep.subr.bf16.mxu0 0
      %1633 = vmatpush2.bf16.msra.mxu0 0
      %1634 = vmatprep.subr.bf16.mxu0 0
      %1635 = vmatpush2.bf16.msra.mxu0 0
      %1636 = vmatprep.subr.bf16.mxu0 0
      %1637 = vmatpush2.bf16.msra.mxu0 0
      %1638 = vmatprep.mubr.bf16.mxu0 0
      %1639 = vmatmul.mubr.bf16.gmra.mxu0 %v1528
      %v1640 = vpop.f32.mrf.mxu0
      %v1641 = vadd.f32 0.0, %v1640
      %v1642 = vpop.f32.mrf.mxu0
      %v1643 = vpop.f32.mrf.mxu0
      %v1644 = vadd.f32 0.0, %v1643
      %v1645 = vpop.f32.mrf.mxu0
      %1646 = vmatprep.mubr.bf16.mxu0 0
      %1647 = vmatmul.mubr.bf16.gmra.mxu0 %v1531
      %v1648 = vpop.f32.mrf.mxu0
      %v1649 = vadd.f32 0.0, %v1648
      %v1650 = vpop.f32.mrf.mxu0
      %v1651 = vpop.f32.mrf.mxu0
      %v1652 = vadd.f32 0.0, %v1651
      %v1653 = vpop.f32.mrf.mxu0
      %1654 = vmatprep.mubr.bf16.mxu0 0
      %1655 = vmatmul.mubr.bf16.gmra.mxu0 %v1534
      %v1656 = vpop.f32.mrf.mxu0
      %v1657 = vadd.f32 0.0, %v1656
      %v1658 = vpop.f32.mrf.mxu0
      %v1659 = vpop.f32.mrf.mxu0
      %v1660 = vadd.f32 0.0, %v1659
      %v1661 = vpop.f32.mrf.mxu0
      %1662 = vmatprep.mubr.bf16.mxu0 0
      %1663 = vmatmul.mubr.bf16.gmra.mxu0 %v1537
      %v1664 = vpop.f32.mrf.mxu0
      %v1665 = vadd.f32 0.0, %v1664
      %v1666 = vpop.f32.mrf.mxu0
      %v1667 = vpop.f32.mrf.mxu0
      %v1668 = vadd.f32 0.0, %v1667
      %v1669 = vpop.f32.mrf.mxu0
      %1670 = vmatprep.mubr.bf16.mxu0 0
      %1671 = vmatmul.mubr.bf16.gmra.mxu0 %v1540
      %v1672 = vpop.f32.mrf.mxu0
      %v1673 = vadd.f32 0.0, %v1672
      %v1674 = vpop.f32.mrf.mxu0
      %v1675 = vpop.f32.mrf.mxu0
      %v1676 = vadd.f32 0.0, %v1675
      %v1677 = vpop.f32.mrf.mxu0
      %1678 = vmatprep.mubr.bf16.mxu0 0
      %1679 = vmatmul.mubr.bf16.gmra.mxu0 %v1543
      %v1680 = vpop.f32.mrf.mxu0
      %v1681 = vadd.f32 0.0, %v1680
      %v1682 = vpop.f32.mrf.mxu0
      %v1683 = vpop.f32.mrf.mxu0
      %v1684 = vadd.f32 0.0, %v1683
      %v1685 = vpop.f32.mrf.mxu0
      %1686 = vmatprep.mubr.bf16.mxu0 0
      %1687 = vmatmul.mubr.bf16.gmra.mxu0 %v1546
      %v1688 = vpop.f32.mrf.mxu0
      %v1689 = vadd.f32 0.0, %v1688
      %v1690 = vpop.f32.mrf.mxu0
      %v1691 = vpop.f32.mrf.mxu0
      %v1692 = vadd.f32 0.0, %v1691
      %v1693 = vpop.f32.mrf.mxu0
      %1694 = vmatprep.mubr.bf16.mxu0 0
      %1695 = vmatmul.mubr.bf16.gmra.mxu0 %v1549
      %v1696 = vpop.f32.mrf.mxu0
      %v1697 = vadd.f32 0.0, %v1696
      %v1698 = vpop.f32.mrf.mxu0
      %v1699 = vpop.f32.mrf.mxu0
      %v1700 = vadd.f32 0.0, %v1699
      %v1701 = vpop.f32.mrf.mxu0
      %1702 = vmatprep.mubr.bf16.mxu0 0
      %1703 = vmatmul.mubr.bf16.gmra.mxu0 %v1552
      %v1704 = vpop.f32.mrf.mxu0
      %v1705 = vadd.f32 0.0, %v1704
      %v1706 = vpop.f32.mrf.mxu0
      %v1707 = vpop.f32.mrf.mxu0
      %v1708 = vadd.f32 0.0, %v1707
      %v1709 = vpop.f32.mrf.mxu0
      %1710 = vmatprep.mubr.bf16.mxu0 0
      %1711 = vmatmul.mubr.bf16.gmra.mxu0 %v1555
      %v1712 = vpop.f32.mrf.mxu0
      %v1713 = vadd.f32 0.0, %v1712
      %v1714 = vpop.f32.mrf.mxu0
      %v1715 = vpop.f32.mrf.mxu0
      %v1716 = vadd.f32 0.0, %v1715
      %v1717 = vpop.f32.mrf.mxu0
      %1718 = vmatprep.mubr.bf16.mxu0 0
      %1719 = vmatmul.mubr.bf16.gmra.mxu0 %v1558
      %v1720 = vpop.f32.mrf.mxu0
      %v1721 = vadd.f32 0.0, %v1720
      %v1722 = vpop.f32.mrf.mxu0
      %v1723 = vpop.f32.mrf.mxu0
      %v1724 = vadd.f32 0.0, %v1723
      %v1725 = vpop.f32.mrf.mxu0
      %1726 = vmatprep.mubr.bf16.mxu0 0
      %1727 = vmatmul.mubr.bf16.gmra.mxu0 %v1561
      %v1728 = vpop.f32.mrf.mxu0
      %v1729 = vadd.f32 0.0, %v1728
      %v1730 = vpop.f32.mrf.mxu0
      %v1731 = vpop.f32.mrf.mxu0
      %v1732 = vadd.f32 0.0, %v1731
      %v1733 = vpop.f32.mrf.mxu0
      %1734 = vmatprep.mubr.bf16.mxu0 0
      %1735 = vmatmul.mubr.bf16.gmra.mxu0 %v1564
      %v1736 = vpop.f32.mrf.mxu0
      %v1737 = vadd.f32 0.0, %v1736
      %v1738 = vpop.f32.mrf.mxu0
      %v1739 = vpop.f32.mrf.mxu0
      %v1740 = vadd.f32 0.0, %v1739
      %v1741 = vpop.f32.mrf.mxu0
      %1742 = vmatprep.mubr.bf16.mxu0 0
      %1743 = vmatmul.mubr.bf16.gmra.mxu0 %v1567
      %v1744 = vpop.f32.mrf.mxu0
      %v1745 = vadd.f32 0.0, %v1744
      %v1746 = vpop.f32.mrf.mxu0
      %v1747 = vpop.f32.mrf.mxu0
      %v1748 = vadd.f32 0.0, %v1747
      %v1749 = vpop.f32.mrf.mxu0
      %1750 = vmatprep.mubr.bf16.mxu0 0
      %1751 = vmatmul.mubr.bf16.gmra.mxu0 %v1570
      %v1752 = vpop.f32.mrf.mxu0
      %v1753 = vadd.f32 0.0, %v1752
      %v1754 = vpop.f32.mrf.mxu0
      %v1755 = vpop.f32.mrf.mxu0
      %v1756 = vadd.f32 0.0, %v1755
      %v1757 = vpop.f32.mrf.mxu0
      %1758 = vmatprep.mubr.bf16.mxu0 0
      %1759 = vmatmul.mubr.bf16.gmra.mxu0 %v1573
      %v1760 = vpop.f32.mrf.mxu0
      %v1761 = vadd.f32 0.0, %v1760
      %v1762 = vpop.f32.mrf.mxu0
      %v1763 = vpop.f32.mrf.mxu0
      %v1764 = vadd.f32 0.0, %v1763
      %v1765 = vpop.f32.mrf.mxu0
      %1766 = vmatprep.mubr.bf16.mxu0 0
      %1767 = vmatmul.mubr.bf16.gmra.mxu0 %v1576
      %v1768 = vpop.f32.mrf.mxu0
      %v1769 = vadd.f32 0.0, %v1768
      %v1770 = vpop.f32.mrf.mxu0
      %v1771 = vpop.f32.mrf.mxu0
      %v1772 = vadd.f32 0.0, %v1771
      %v1773 = vpop.f32.mrf.mxu0
      %1774 = vmatprep.mubr.bf16.mxu0 0
      %1775 = vmatmul.mubr.bf16.gmra.mxu0 %v1579
      %v1776 = vpop.f32.mrf.mxu0
      %v1777 = vadd.f32 0.0, %v1776
      %v1778 = vpop.f32.mrf.mxu0
      %v1779 = vpop.f32.mrf.mxu0
      %v1780 = vadd.f32 0.0, %v1779
      %v1781 = vpop.f32.mrf.mxu0
      %1782 = vmatprep.mubr.bf16.mxu0 0
      %1783 = vmatmul.mubr.bf16.gmra.mxu0 %v1582
      %v1784 = vpop.f32.mrf.mxu0
      %v1785 = vadd.f32 0.0, %v1784
      %v1786 = vpop.f32.mrf.mxu0
      %v1787 = vpop.f32.mrf.mxu0
      %v1788 = vadd.f32 0.0, %v1787
      %v1789 = vpop.f32.mrf.mxu0
      %1790 = vmatprep.mubr.bf16.mxu0 0
      %1791 = vmatmul.mubr.bf16.gmra.mxu0 %v1585
      %v1792 = vpop.f32.mrf.mxu0
      %v1793 = vadd.f32 0.0, %v1792
      %v1794 = vpop.f32.mrf.mxu0
      %v1795 = vpop.f32.mrf.mxu0
      %v1796 = vadd.f32 0.0, %v1795
      %v1797 = vpop.f32.mrf.mxu0
      %1798 = vmatprep.mubr.bf16.mxu0 0
      %1799 = vmatmul.mubr.bf16.gmra.mxu0 %v1588
      %v1800 = vpop.f32.mrf.mxu0
      %v1801 = vadd.f32 0.0, %v1800
      %v1802 = vpop.f32.mrf.mxu0
      %v1803 = vpop.f32.mrf.mxu0
      %v1804 = vadd.f32 0.0, %v1803
      %v1805 = vpop.f32.mrf.mxu0
      %1806 = vmatprep.mubr.bf16.mxu0 0
      %1807 = vmatmul.mubr.bf16.gmra.mxu0 %v1591
      %v1808 = vpop.f32.mrf.mxu0
      %v1809 = vadd.f32 0.0, %v1808
      %v1810 = vpop.f32.mrf.mxu0
      %v1811 = vpop.f32.mrf.mxu0
      %v1812 = vadd.f32 0.0, %v1811
      %v1813 = vpop.f32.mrf.mxu0
      %1814 = vmatprep.mubr.bf16.mxu0 0
      %1815 = vmatmul.mubr.bf16.gmra.mxu0 %v1594
      %v1816 = vpop.f32.mrf.mxu0
      %v1817 = vadd.f32 0.0, %v1816
      %v1818 = vpop.f32.mrf.mxu0
      %v1819 = vpop.f32.mrf.mxu0
      %v1820 = vadd.f32 0.0, %v1819
      %v1821 = vpop.f32.mrf.mxu0
      %1822 = vmatprep.mubr.bf16.mxu0 0
      %1823 = vmatmul.mubr.bf16.gmra.mxu0 %v1597
      %v1824 = vpop.f32.mrf.mxu0
      %v1825 = vadd.f32 0.0, %v1824
      %v1826 = vpop.f32.mrf.mxu0
      %v1827 = vpop.f32.mrf.mxu0
      %v1828 = vadd.f32 0.0, %v1827
      %v1829 = vpop.f32.mrf.mxu0
      %1830 = vdwg.mxu0
      %v1831 = vsel %vm1526, %v1304, 0
      %v1833 = vsel %vm1526, %v1305, 0
      %v1835 = vsel %vm1526, %v1306, 0
      %v1837 = vsel %vm1526, %v1307, 0
      %v1839 = vsel %vm1526, %v1308, 0
      %v1841 = vsel %vm1526, %v1309, 0
      %v1843 = vsel %vm1526, %v1310, 0
      %v1845 = vsel %vm1526, %v1311, 0
      %v1847 = vsel %vm1526, %v1312, 0
      %v1849 = vsel %vm1526, %v1313, 0
      %v1851 = vsel %vm1526, %v1314, 0
      %v1853 = vsel %vm1526, %v1315, 0
      %v1855 = vsel %vm1526, %v1316, 0
      %v1857 = vsel %vm1526, %v1317, 0
      %v1859 = vsel %vm1526, %v1318, 0
      %v1861 = vsel %vm1526, %v1319, 0
      %v1863 = vsel %vm1526, %v1320, 0
      %v1865 = vsel %vm1526, %v1321, 0
      %v1867 = vsel %vm1526, %v1322, 0
      %v1869 = vsel %vm1526, %v1323, 0
      %v1871 = vsel %vm1526, %v1324, 0
      %v1873 = vsel %vm1526, %v1325, 0
      %v1875 = vsel %vm1526, %v1326, 0
      %v1877 = vsel %vm1526, %v1327, 0
      %v1880 = vand.u32 %v1202, %v1602
      %1882 = vmatprep.subr.bf16.mxu0 0
      %1883 = vmatpush1.bf16.msra.mxu0 0
      %1884 = vmatprep.subr.bf16.mxu0 0
      %1885 = vmatpush1.bf16.msra.mxu0 0
      %1886 = vmatprep.subr.bf16.mxu0 0
      %1887 = vmatpush1.bf16.msra.mxu0 0
      %1888 = vmatprep.subr.bf16.mxu0 0
      %1889 = vmatpush1.bf16.msra.mxu0 0
      %1890 = vmatprep.subr.bf16.mxu0 0
      %1891 = vmatpush1.bf16.msra.mxu0 0
      %1892 = vmatprep.subr.bf16.mxu0 0
      %1893 = vmatpush1.bf16.msra.mxu0 0
      %1894 = vmatprep.subr.bf16.mxu0 0
      %1895 = vmatpush1.bf16.msra.mxu0 0
      %1896 = vmatprep.subr.bf16.mxu0 0
      %1897 = vmatpush1.bf16.msra.mxu0 %v1880
      %1898 = vmatprep.subr.bf16.mxu0 0
      %1899 = vmatpush2.bf16.msra.mxu0 0
      %1900 = vmatprep.subr.bf16.mxu0 0
      %1901 = vmatpush2.bf16.msra.mxu0 0
      %1902 = vmatprep.subr.bf16.mxu0 0
      %1903 = vmatpush2.bf16.msra.mxu0 0
      %1904 = vmatprep.subr.bf16.mxu0 0
      %1905 = vmatpush2.bf16.msra.mxu0 0
      %1906 = vmatprep.subr.bf16.mxu0 0
      %1907 = vmatpush2.bf16.msra.mxu0 0
      %1908 = vmatprep.subr.bf16.mxu0 0
      %1909 = vmatpush2.bf16.msra.mxu0 0
      %1910 = vmatprep.subr.bf16.mxu0 0
      %1911 = vmatpush2.bf16.msra.mxu0 0
      %1912 = vmatprep.subr.bf16.mxu0 0
      %1913 = vmatpush2.bf16.msra.mxu0 0
      %1914 = vmatprep.mubr.bf16.mxu0 0
      %1915 = vmatmul.mubr.bf16.gmra.mxu0 %v1831
      %v1916 = vpop.f32.mrf.mxu0
      %v1917 = vadd.f32 %v1641, %v1916
      %v1918 = vpop.f32.mrf.mxu0
      %v1919 = vpop.f32.mrf.mxu0
      %v1920 = vadd.f32 %v1644, %v1919
      %v1921 = vpop.f32.mrf.mxu0
      %1922 = vmatprep.mubr.bf16.mxu0 0
      %1923 = vmatmul.mubr.bf16.gmra.mxu0 %v1833
      %v1924 = vpop.f32.mrf.mxu0
      %v1925 = vadd.f32 %v1649, %v1924
      %v1926 = vpop.f32.mrf.mxu0
      %v1927 = vpop.f32.mrf.mxu0
      %v1928 = vadd.f32 %v1652, %v1927
      %v1929 = vpop.f32.mrf.mxu0
      %1930 = vmatprep.mubr.bf16.mxu0 0
      %1931 = vmatmul.mubr.bf16.gmra.mxu0 %v1835
      %v1932 = vpop.f32.mrf.mxu0
      %v1933 = vadd.f32 %v1657, %v1932
      %v1934 = vpop.f32.mrf.mxu0
      %v1935 = vpop.f32.mrf.mxu0
      %v1936 = vadd.f32 %v1660, %v1935
      %v1937 = vpop.f32.mrf.mxu0
      %1938 = vmatprep.mubr.bf16.mxu0 0
      %1939 = vmatmul.mubr.bf16.gmra.mxu0 %v1837
      %v1940 = vpop.f32.mrf.mxu0
      %v1941 = vadd.f32 %v1665, %v1940
      %v1942 = vpop.f32.mrf.mxu0
      %v1943 = vpop.f32.mrf.mxu0
      %v1944 = vadd.f32 %v1668, %v1943
      %v1945 = vpop.f32.mrf.mxu0
      %1946 = vmatprep.mubr.bf16.mxu0 0
      %1947 = vmatmul.mubr.bf16.gmra.mxu0 %v1839
      %v1948 = vpop.f32.mrf.mxu0
      %v1949 = vadd.f32 %v1673, %v1948
      %v1950 = vpop.f32.mrf.mxu0
      %v1951 = vpop.f32.mrf.mxu0
      %v1952 = vadd.f32 %v1676, %v1951
      %v1953 = vpop.f32.mrf.mxu0
      %1954 = vmatprep.mubr.bf16.mxu0 0
      %1955 = vmatmul.mubr.bf16.gmra.mxu0 %v1841
      %v1956 = vpop.f32.mrf.mxu0
      %v1957 = vadd.f32 %v1681, %v1956
      %v1958 = vpop.f32.mrf.mxu0
      %v1959 = vpop.f32.mrf.mxu0
      %v1960 = vadd.f32 %v1684, %v1959
      %v1961 = vpop.f32.mrf.mxu0
      %1962 = vmatprep.mubr.bf16.mxu0 0
      %1963 = vmatmul.mubr.bf16.gmra.mxu0 %v1843
      %v1964 = vpop.f32.mrf.mxu0
      %v1965 = vadd.f32 %v1689, %v1964
      %v1966 = vpop.f32.mrf.mxu0
      %v1967 = vpop.f32.mrf.mxu0
      %v1968 = vadd.f32 %v1692, %v1967
      %v1969 = vpop.f32.mrf.mxu0
      %1970 = vmatprep.mubr.bf16.mxu0 0
      %1971 = vmatmul.mubr.bf16.gmra.mxu0 %v1845
      %v1972 = vpop.f32.mrf.mxu0
      %v1973 = vadd.f32 %v1697, %v1972
      %v1974 = vpop.f32.mrf.mxu0
      %v1975 = vpop.f32.mrf.mxu0
      %v1976 = vadd.f32 %v1700, %v1975
      %v1977 = vpop.f32.mrf.mxu0
      %1978 = vmatprep.mubr.bf16.mxu0 0
      %1979 = vmatmul.mubr.bf16.gmra.mxu0 %v1847
      %v1980 = vpop.f32.mrf.mxu0
      %v1981 = vadd.f32 %v1705, %v1980
      %v1982 = vpop.f32.mrf.mxu0
      %v1983 = vpop.f32.mrf.mxu0
      %v1984 = vadd.f32 %v1708, %v1983
      %v1985 = vpop.f32.mrf.mxu0
      %1986 = vmatprep.mubr.bf16.mxu0 0
      %1987 = vmatmul.mubr.bf16.gmra.mxu0 %v1849
      %v1988 = vpop.f32.mrf.mxu0
      %v1989 = vadd.f32 %v1713, %v1988
      %v1990 = vpop.f32.mrf.mxu0
      %v1991 = vpop.f32.mrf.mxu0
      %v1992 = vadd.f32 %v1716, %v1991
      %v1993 = vpop.f32.mrf.mxu0
      %1994 = vmatprep.mubr.bf16.mxu0 0
      %1995 = vmatmul.mubr.bf16.gmra.mxu0 %v1851
      %v1996 = vpop.f32.mrf.mxu0
      %v1997 = vadd.f32 %v1721, %v1996
      %v1998 = vpop.f32.mrf.mxu0
      %v1999 = vpop.f32.mrf.mxu0
      %v2000 = vadd.f32 %v1724, %v1999
      %v2001 = vpop.f32.mrf.mxu0
      %2002 = vmatprep.mubr.bf16.mxu0 0
      %2003 = vmatmul.mubr.bf16.gmra.mxu0 %v1853
      %v2004 = vpop.f32.mrf.mxu0
      %v2005 = vadd.f32 %v1729, %v2004
      %v2006 = vpop.f32.mrf.mxu0
      %v2007 = vpop.f32.mrf.mxu0
      %v2008 = vadd.f32 %v1732, %v2007
      %v2009 = vpop.f32.mrf.mxu0
      %2010 = vmatprep.mubr.bf16.mxu0 0
      %2011 = vmatmul.mubr.bf16.gmra.mxu0 %v1855
      %v2012 = vpop.f32.mrf.mxu0
      %v2013 = vadd.f32 %v1737, %v2012
      %v2014 = vpop.f32.mrf.mxu0
      %v2015 = vpop.f32.mrf.mxu0
      %v2016 = vadd.f32 %v1740, %v2015
      %v2017 = vpop.f32.mrf.mxu0
      %2018 = vmatprep.mubr.bf16.mxu0 0
      %2019 = vmatmul.mubr.bf16.gmra.mxu0 %v1857
      %v2020 = vpop.f32.mrf.mxu0
      %v2021 = vadd.f32 %v1745, %v2020
      %v2022 = vpop.f32.mrf.mxu0
      %v2023 = vpop.f32.mrf.mxu0
      %v2024 = vadd.f32 %v1748, %v2023
      %v2025 = vpop.f32.mrf.mxu0
      %2026 = vmatprep.mubr.bf16.mxu0 0
      %2027 = vmatmul.mubr.bf16.gmra.mxu0 %v1859
      %v2028 = vpop.f32.mrf.mxu0
      %v2029 = vadd.f32 %v1753, %v2028
      %v2030 = vpop.f32.mrf.mxu0
      %v2031 = vpop.f32.mrf.mxu0
      %v2032 = vadd.f32 %v1756, %v2031
      %v2033 = vpop.f32.mrf.mxu0
      %2034 = vmatprep.mubr.bf16.mxu0 0
      %2035 = vmatmul.mubr.bf16.gmra.mxu0 %v1861
      %v2036 = vpop.f32.mrf.mxu0
      %v2037 = vadd.f32 %v1761, %v2036
      %v2038 = vpop.f32.mrf.mxu0
      %v2039 = vpop.f32.mrf.mxu0
      %v2040 = vadd.f32 %v1764, %v2039
      %v2041 = vpop.f32.mrf.mxu0
      %2042 = vmatprep.mubr.bf16.mxu0 0
      %2043 = vmatmul.mubr.bf16.gmra.mxu0 %v1863
      %v2044 = vpop.f32.mrf.mxu0
      %v2045 = vadd.f32 %v1769, %v2044
      %v2046 = vpop.f32.mrf.mxu0
      %v2047 = vpop.f32.mrf.mxu0
      %v2048 = vadd.f32 %v1772, %v2047
      %v2049 = vpop.f32.mrf.mxu0
      %2050 = vmatprep.mubr.bf16.mxu0 0
      %2051 = vmatmul.mubr.bf16.gmra.mxu0 %v1865
      %v2052 = vpop.f32.mrf.mxu0
      %v2053 = vadd.f32 %v1777, %v2052
      %v2054 = vpop.f32.mrf.mxu0
      %v2055 = vpop.f32.mrf.mxu0
      %v2056 = vadd.f32 %v1780, %v2055
      %v2057 = vpop.f32.mrf.mxu0
      %2058 = vmatprep.mubr.bf16.mxu0 0
      %2059 = vmatmul.mubr.bf16.gmra.mxu0 %v1867
      %v2060 = vpop.f32.mrf.mxu0
      %v2061 = vadd.f32 %v1785, %v2060
      %v2062 = vpop.f32.mrf.mxu0
      %v2063 = vpop.f32.mrf.mxu0
      %v2064 = vadd.f32 %v1788, %v2063
      %v2065 = vpop.f32.mrf.mxu0
      %2066 = vmatprep.mubr.bf16.mxu0 0
      %2067 = vmatmul.mubr.bf16.gmra.mxu0 %v1869
      %v2068 = vpop.f32.mrf.mxu0
      %v2069 = vadd.f32 %v1793, %v2068
      %v2070 = vpop.f32.mrf.mxu0
      %v2071 = vpop.f32.mrf.mxu0
      %v2072 = vadd.f32 %v1796, %v2071
      %v2073 = vpop.f32.mrf.mxu0
      %2074 = vmatprep.mubr.bf16.mxu0 0
      %2075 = vmatmul.mubr.bf16.gmra.mxu0 %v1871
      %v2076 = vpop.f32.mrf.mxu0
      %v2077 = vadd.f32 %v1801, %v2076
      %v2078 = vpop.f32.mrf.mxu0
      %v2079 = vpop.f32.mrf.mxu0
      %v2080 = vadd.f32 %v1804, %v2079
      %v2081 = vpop.f32.mrf.mxu0
      %2082 = vmatprep.mubr.bf16.mxu0 0
      %2083 = vmatmul.mubr.bf16.gmra.mxu0 %v1873
      %v2084 = vpop.f32.mrf.mxu0
      %v2085 = vadd.f32 %v1809, %v2084
      %v2086 = vpop.f32.mrf.mxu0
      %v2087 = vpop.f32.mrf.mxu0
      %v2088 = vadd.f32 %v1812, %v2087
      %v2089 = vpop.f32.mrf.mxu0
      %2090 = vmatprep.mubr.bf16.mxu0 0
      %2091 = vmatmul.mubr.bf16.gmra.mxu0 %v1875
      %v2092 = vpop.f32.mrf.mxu0
      %v2093 = vadd.f32 %v1817, %v2092
      %v2094 = vpop.f32.mrf.mxu0
      %v2095 = vpop.f32.mrf.mxu0
      %v2096 = vadd.f32 %v1820, %v2095
      %v2097 = vpop.f32.mrf.mxu0
      %2098 = vmatprep.mubr.bf16.mxu0 0
      %2099 = vmatmul.mubr.bf16.gmra.mxu0 %v1877
      %v2100 = vpop.f32.mrf.mxu0
      %v2101 = vadd.f32 %v1825, %v2100
      %v2102 = vpop.f32.mrf.mxu0
      %v2103 = vpop.f32.mrf.mxu0
      %v2104 = vadd.f32 %v1828, %v2103
      %v2105 = vpop.f32.mrf.mxu0
      %2106 = vdwg.mxu0
      %v2107 = vld [vmem:[#allocation2] sm:$0xe]
      %s2108 = scalar_lea.vmem %s3, 4
      %v2109 = vld [vmem:[%s2108] sm:$0x3]
      %v2111 = vunpack.c.l.b16 %v2107
      %v2112 = vpack.c.b16 %v1256, %v2111
      %vm2113 = vcmask 1046528
      %v2114 = vrot.slane %v2112, 1
      %v2115 = vrot.slane %v1305, 1
      %v2116 = vsel %vm2113, %v2114, %v2115
      %v2117 = vrot.slane %v1306, 1
      %v2118 = vsel %vm2113, %v2115, %v2117
      %v2119 = vrot.slane %v1307, 1
      %v2120 = vsel %vm2113, %v2117, %v2119
      %v2121 = vrot.slane %v1308, 1
      %v2122 = vsel %vm2113, %v2119, %v2121
      %v2123 = vrot.slane %v1309, 1
      %v2124 = vsel %vm2113, %v2121, %v2123
      %v2125 = vrot.slane %v1310, 1
      %v2126 = vsel %vm2113, %v2123, %v2125
      %v2127 = vrot.slane %v1311, 1
      %v2128 = vsel %vm2113, %v2125, %v2127
      %v2129 = vrot.slane %v1312, 1
      %v2130 = vsel %vm2113, %v2127, %v2129
      %v2131 = vrot.slane %v1313, 1
      %v2132 = vsel %vm2113, %v2129, %v2131
      %v2133 = vrot.slane %v1314, 1
      %v2134 = vsel %vm2113, %v2131, %v2133
      %v2135 = vrot.slane %v1315, 1
      %v2136 = vsel %vm2113, %v2133, %v2135
      %v2137 = vrot.slane %v1316, 1
      %v2138 = vsel %vm2113, %v2135, %v2137
      %v2139 = vrot.slane %v1317, 1
      %v2140 = vsel %vm2113, %v2137, %v2139
      %v2141 = vrot.slane %v1318, 1
      %v2142 = vsel %vm2113, %v2139, %v2141
      %v2143 = vrot.slane %v1319, 1
      %v2144 = vsel %vm2113, %v2141, %v2143
      %v2145 = vrot.slane %v1320, 1
      %v2146 = vsel %vm2113, %v2143, %v2145
      %v2147 = vrot.slane %v1321, 1
      %v2148 = vsel %vm2113, %v2145, %v2147
      %v2149 = vrot.slane %v1322, 1
      %v2150 = vsel %vm2113, %v2147, %v2149
      %v2151 = vrot.slane %v1323, 1
      %v2152 = vsel %vm2113, %v2149, %v2151
      %v2153 = vrot.slane %v1324, 1
      %v2154 = vsel %vm2113, %v2151, %v2153
      %v2155 = vrot.slane %v1325, 1
      %v2156 = vsel %vm2113, %v2153, %v2155
      %v2157 = vrot.slane %v1326, 1
      %v2158 = vsel %vm2113, %v2155, %v2157
      %v2159 = vrot.slane %v1327, 1
      %v2160 = vsel %vm2113, %v2157, %v2159
      %v2161 = vrot.slane %v1328, 1
      %v2162 = vsel %vm2113, %v2159, %v2161
      %v2164 = vsel %vm1526, %v2116, 0
      %v2167 = vsel %vm1526, %v2118, 0
      %v2170 = vsel %vm1526, %v2120, 0
      %v2173 = vsel %vm1526, %v2122, 0
      %v2176 = vsel %vm1526, %v2124, 0
      %v2179 = vsel %vm1526, %v2126, 0
      %v2182 = vsel %vm1526, %v2128, 0
      %v2185 = vsel %vm1526, %v2130, 0
      %v2188 = vsel %vm1526, %v2132, 0
      %v2191 = vsel %vm1526, %v2134, 0
      %v2194 = vsel %vm1526, %v2136, 0
      %v2197 = vsel %vm1526, %v2138, 0
      %v2200 = vsel %vm1526, %v2140, 0
      %v2203 = vsel %vm1526, %v2142, 0
      %v2206 = vsel %vm1526, %v2144, 0
      %v2209 = vsel %vm1526, %v2146, 0
      %v2212 = vsel %vm1526, %v2148, 0
      %v2215 = vsel %vm1526, %v2150, 0
      %v2218 = vsel %vm1526, %v2152, 0
      %v2221 = vsel %vm1526, %v2154, 0
      %v2224 = vsel %vm1526, %v2156, 0
      %v2227 = vsel %vm1526, %v2158, 0
      %v2230 = vsel %vm1526, %v2160, 0
      %v2233 = vsel %vm1526, %v2162, 0
      %v2236 = vand.u32 %v2109, %v1602
      %2238 = vmatprep.subr.bf16.mxu0 0
      %2239 = vmatpush1.bf16.msra.mxu0 0
      %2240 = vmatprep.subr.bf16.mxu0 0
      %2241 = vmatpush1.bf16.msra.mxu0 0
      %2242 = vmatprep.subr.bf16.mxu0 0
      %2243 = vmatpush1.bf16.msra.mxu0 0
      %2244 = vmatprep.subr.bf16.mxu0 0
      %2245 = vmatpush1.bf16.msra.mxu0 0
      %2246 = vmatprep.subr.bf16.mxu0 0
      %2247 = vmatpush1.bf16.msra.mxu0 0
      %2248 = vmatprep.subr.bf16.mxu0 0
      %2249 = vmatpush1.bf16.msra.mxu0 0
      %2250 = vmatprep.subr.bf16.mxu0 0
      %2251 = vmatpush1.bf16.msra.mxu0 0
      %2252 = vmatprep.subr.bf16.mxu0 0
      %2253 = vmatpush1.bf16.msra.mxu0 %v2236
      %2254 = vmatprep.subr.bf16.mxu0 0
      %2255 = vmatpush2.bf16.msra.mxu0 0
      %2256 = vmatprep.subr.bf16.mxu0 0
      %2257 = vmatpush2.bf16.msra.mxu0 0
      %2258 = vmatprep.subr.bf16.mxu0 0
      %2259 = vmatpush2.bf16.msra.mxu0 0
      %2260 = vmatprep.subr.bf16.mxu0 0
      %2261 = vmatpush2.bf16.msra.mxu0 0
      %2262 = vmatprep.subr.bf16.mxu0 0
      %2263 = vmatpush2.bf16.msra.mxu0 0
      %2264 = vmatprep.subr.bf16.mxu0 0
      %2265 = vmatpush2.bf16.msra.mxu0 0
      %2266 = vmatprep.subr.bf16.mxu0 0
      %2267 = vmatpush2.bf16.msra.mxu0 0
      %2268 = vmatprep.subr.bf16.mxu0 0
      %2269 = vmatpush2.bf16.msra.mxu0 0
      %2270 = vmatprep.mubr.bf16.mxu0 0
      %2271 = vmatmul.mubr.bf16.gmra.mxu0 %v2164
      %v2272 = vpop.f32.mrf.mxu0
      %v2273 = vadd.f32 0.0, %v2272
      %v2274 = vpop.f32.mrf.mxu0
      %v2275 = vpop.f32.mrf.mxu0
      %v2276 = vadd.f32 0.0, %v2275
      %v2277 = vpop.f32.mrf.mxu0
      %2278 = vmatprep.mubr.bf16.mxu0 0
      %2279 = vmatmul.mubr.bf16.gmra.mxu0 %v2167
      %v2280 = vpop.f32.mrf.mxu0
      %v2281 = vadd.f32 0.0, %v2280
      %v2282 = vpop.f32.mrf.mxu0
      %v2283 = vpop.f32.mrf.mxu0
      %v2284 = vadd.f32 0.0, %v2283
      %v2285 = vpop.f32.mrf.mxu0
      %2286 = vmatprep.mubr.bf16.mxu0 0
      %2287 = vmatmul.mubr.bf16.gmra.mxu0 %v2170
      %v2288 = vpop.f32.mrf.mxu0
      %v2289 = vadd.f32 0.0, %v2288
      %v2290 = vpop.f32.mrf.mxu0
      %v2291 = vpop.f32.mrf.mxu0
      %v2292 = vadd.f32 0.0, %v2291
      %v2293 = vpop.f32.mrf.mxu0
      %2294 = vmatprep.mubr.bf16.mxu0 0
      %2295 = vmatmul.mubr.bf16.gmra.mxu0 %v2173
      %v2296 = vpop.f32.mrf.mxu0
      %v2297 = vadd.f32 0.0, %v2296
      %v2298 = vpop.f32.mrf.mxu0
      %v2299 = vpop.f32.mrf.mxu0
      %v2300 = vadd.f32 0.0, %v2299
      %v2301 = vpop.f32.mrf.mxu0
      %2302 = vmatprep.mubr.bf16.mxu0 0
      %2303 = vmatmul.mubr.bf16.gmra.mxu0 %v2176
      %v2304 = vpop.f32.mrf.mxu0
      %v2305 = vadd.f32 0.0, %v2304
      %v2306 = vpop.f32.mrf.mxu0
      %v2307 = vpop.f32.mrf.mxu0
      %v2308 = vadd.f32 0.0, %v2307
      %v2309 = vpop.f32.mrf.mxu0
      %2310 = vmatprep.mubr.bf16.mxu0 0
      %2311 = vmatmul.mubr.bf16.gmra.mxu0 %v2179
      %v2312 = vpop.f32.mrf.mxu0
      %v2313 = vadd.f32 0.0, %v2312
      %v2314 = vpop.f32.mrf.mxu0
      %v2315 = vpop.f32.mrf.mxu0
      %v2316 = vadd.f32 0.0, %v2315
      %v2317 = vpop.f32.mrf.mxu0
      %2318 = vmatprep.mubr.bf16.mxu0 0
      %2319 = vmatmul.mubr.bf16.gmra.mxu0 %v2182
      %v2320 = vpop.f32.mrf.mxu0
      %v2321 = vadd.f32 0.0, %v2320
      %v2322 = vpop.f32.mrf.mxu0
      %v2323 = vpop.f32.mrf.mxu0
      %v2324 = vadd.f32 0.0, %v2323
      %v2325 = vpop.f32.mrf.mxu0
      %2326 = vmatprep.mubr.bf16.mxu0 0
      %2327 = vmatmul.mubr.bf16.gmra.mxu0 %v2185
      %v2328 = vpop.f32.mrf.mxu0
      %v2329 = vadd.f32 0.0, %v2328
      %v2330 = vpop.f32.mrf.mxu0
      %v2331 = vpop.f32.mrf.mxu0
      %v2332 = vadd.f32 0.0, %v2331
      %v2333 = vpop.f32.mrf.mxu0
      %2334 = vmatprep.mubr.bf16.mxu0 0
      %2335 = vmatmul.mubr.bf16.gmra.mxu0 %v2188
      %v2336 = vpop.f32.mrf.mxu0
      %v2337 = vadd.f32 0.0, %v2336
      %v2338 = vpop.f32.mrf.mxu0
      %v2339 = vpop.f32.mrf.mxu0
      %v2340 = vadd.f32 0.0, %v2339
      %v2341 = vpop.f32.mrf.mxu0
      %2342 = vmatprep.mubr.bf16.mxu0 0
      %2343 = vmatmul.mubr.bf16.gmra.mxu0 %v2191
      %v2344 = vpop.f32.mrf.mxu0
      %v2345 = vadd.f32 0.0, %v2344
      %v2346 = vpop.f32.mrf.mxu0
      %v2347 = vpop.f32.mrf.mxu0
      %v2348 = vadd.f32 0.0, %v2347
      %v2349 = vpop.f32.mrf.mxu0
      %2350 = vmatprep.mubr.bf16.mxu0 0
      %2351 = vmatmul.mubr.bf16.gmra.mxu0 %v2194
      %v2352 = vpop.f32.mrf.mxu0
      %v2353 = vadd.f32 0.0, %v2352
      %v2354 = vpop.f32.mrf.mxu0
      %v2355 = vpop.f32.mrf.mxu0
      %v2356 = vadd.f32 0.0, %v2355
      %v2357 = vpop.f32.mrf.mxu0
      %2358 = vmatprep.mubr.bf16.mxu0 0
      %2359 = vmatmul.mubr.bf16.gmra.mxu0 %v2197
      %v2360 = vpop.f32.mrf.mxu0
      %v2361 = vadd.f32 0.0, %v2360
      %v2362 = vpop.f32.mrf.mxu0
      %v2363 = vpop.f32.mrf.mxu0
      %v2364 = vadd.f32 0.0, %v2363
      %v2365 = vpop.f32.mrf.mxu0
      %2366 = vmatprep.mubr.bf16.mxu0 0
      %2367 = vmatmul.mubr.bf16.gmra.mxu0 %v2200
      %v2368 = vpop.f32.mrf.mxu0
      %v2369 = vadd.f32 0.0, %v2368
      %v2370 = vpop.f32.mrf.mxu0
      %v2371 = vpop.f32.mrf.mxu0
      %v2372 = vadd.f32 0.0, %v2371
      %v2373 = vpop.f32.mrf.mxu0
      %2374 = vmatprep.mubr.bf16.mxu0 0
      %2375 = vmatmul.mubr.bf16.gmra.mxu0 %v2203
      %v2376 = vpop.f32.mrf.mxu0
      %v2377 = vadd.f32 0.0, %v2376
      %v2378 = vpop.f32.mrf.mxu0
      %v2379 = vpop.f32.mrf.mxu0
      %v2380 = vadd.f32 0.0, %v2379
      %v2381 = vpop.f32.mrf.mxu0
      %2382 = vmatprep.mubr.bf16.mxu0 0
      %2383 = vmatmul.mubr.bf16.gmra.mxu0 %v2206
      %v2384 = vpop.f32.mrf.mxu0
      %v2385 = vadd.f32 0.0, %v2384
      %v2386 = vpop.f32.mrf.mxu0
      %v2387 = vpop.f32.mrf.mxu0
      %v2388 = vadd.f32 0.0, %v2387
      %v2389 = vpop.f32.mrf.mxu0
      %2390 = vmatprep.mubr.bf16.mxu0 0
      %2391 = vmatmul.mubr.bf16.gmra.mxu0 %v2209
      %v2392 = vpop.f32.mrf.mxu0
      %v2393 = vadd.f32 0.0, %v2392
      %v2394 = vpop.f32.mrf.mxu0
      %v2395 = vpop.f32.mrf.mxu0
      %v2396 = vadd.f32 0.0, %v2395
      %v2397 = vpop.f32.mrf.mxu0
      %2398 = vmatprep.mubr.bf16.mxu0 0
      %2399 = vmatmul.mubr.bf16.gmra.mxu0 %v2212
      %v2400 = vpop.f32.mrf.mxu0
      %v2401 = vadd.f32 0.0, %v2400
      %v2402 = vpop.f32.mrf.mxu0
      %v2403 = vpop.f32.mrf.mxu0
      %v2404 = vadd.f32 0.0, %v2403
      %v2405 = vpop.f32.mrf.mxu0
      %2406 = vmatprep.mubr.bf16.mxu0 0
      %2407 = vmatmul.mubr.bf16.gmra.mxu0 %v2215
      %v2408 = vpop.f32.mrf.mxu0
      %v2409 = vadd.f32 0.0, %v2408
      %v2410 = vpop.f32.mrf.mxu0
      %v2411 = vpop.f32.mrf.mxu0
      %v2412 = vadd.f32 0.0, %v2411
      %v2413 = vpop.f32.mrf.mxu0
      %2414 = vmatprep.mubr.bf16.mxu0 0
      %2415 = vmatmul.mubr.bf16.gmra.mxu0 %v2218
      %v2416 = vpop.f32.mrf.mxu0
      %v2417 = vadd.f32 0.0, %v2416
      %v2418 = vpop.f32.mrf.mxu0
      %v2419 = vpop.f32.mrf.mxu0
      %v2420 = vadd.f32 0.0, %v2419
      %v2421 = vpop.f32.mrf.mxu0
      %2422 = vmatprep.mubr.bf16.mxu0 0
      %2423 = vmatmul.mubr.bf16.gmra.mxu0 %v2221
      %v2424 = vpop.f32.mrf.mxu0
      %v2425 = vadd.f32 0.0, %v2424
      %v2426 = vpop.f32.mrf.mxu0
      %v2427 = vpop.f32.mrf.mxu0
      %v2428 = vadd.f32 0.0, %v2427
      %v2429 = vpop.f32.mrf.mxu0
      %2430 = vmatprep.mubr.bf16.mxu0 0
      %2431 = vmatmul.mubr.bf16.gmra.mxu0 %v2224
      %v2432 = vpop.f32.mrf.mxu0
      %v2433 = vadd.f32 0.0, %v2432
      %v2434 = vpop.f32.mrf.mxu0
      %v2435 = vpop.f32.mrf.mxu0
      %v2436 = vadd.f32 0.0, %v2435
      %v2437 = vpop.f32.mrf.mxu0
      %2438 = vmatprep.mubr.bf16.mxu0 0
      %2439 = vmatmul.mubr.bf16.gmra.mxu0 %v2227
      %v2440 = vpop.f32.mrf.mxu0
      %v2441 = vadd.f32 0.0, %v2440
      %v2442 = vpop.f32.mrf.mxu0
      %v2443 = vpop.f32.mrf.mxu0
      %v2444 = vadd.f32 0.0, %v2443
      %v2445 = vpop.f32.mrf.mxu0
      %2446 = vmatprep.mubr.bf16.mxu0 0
      %2447 = vmatmul.mubr.bf16.gmra.mxu0 %v2230
      %v2448 = vpop.f32.mrf.mxu0
      %v2449 = vadd.f32 0.0, %v2448
      %v2450 = vpop.f32.mrf.mxu0
      %v2451 = vpop.f32.mrf.mxu0
      %v2452 = vadd.f32 0.0, %v2451
      %v2453 = vpop.f32.mrf.mxu0
      %2454 = vmatprep.mubr.bf16.mxu0 0
      %2455 = vmatmul.mubr.bf16.gmra.mxu0 %v2233
      %v2456 = vpop.f32.mrf.mxu0
      %v2457 = vadd.f32 0.0, %v2456
      %v2458 = vpop.f32.mrf.mxu0
      %v2459 = vpop.f32.mrf.mxu0
      %v2460 = vadd.f32 0.0, %v2459
      %v2461 = vpop.f32.mrf.mxu0
      %2462 = vdwg.mxu0
      %v2463 = vadd.f32 %v1917, %v2273
      %v2464 = vadd.f32 %v1920, %v2276
      %v2465 = vadd.f32 %v1925, %v2281
      %v2466 = vadd.f32 %v1928, %v2284
      %v2467 = vadd.f32 %v1933, %v2289
      %v2468 = vadd.f32 %v1936, %v2292
      %v2469 = vadd.f32 %v1941, %v2297
      %v2470 = vadd.f32 %v1944, %v2300
      %v2471 = vadd.f32 %v1949, %v2305
      %v2472 = vadd.f32 %v1952, %v2308
      %v2473 = vadd.f32 %v1957, %v2313
      %v2474 = vadd.f32 %v1960, %v2316
      %v2475 = vadd.f32 %v1965, %v2321
      %v2476 = vadd.f32 %v1968, %v2324
      %v2477 = vadd.f32 %v1973, %v2329
      %v2478 = vadd.f32 %v1976, %v2332
      %v2479 = vadd.f32 %v1981, %v2337
      %v2480 = vadd.f32 %v1984, %v2340
      %v2481 = vadd.f32 %v1989, %v2345
      %v2482 = vadd.f32 %v1992, %v2348
      %v2483 = vadd.f32 %v1997, %v2353
      %v2484 = vadd.f32 %v2000, %v2356
      %v2485 = vadd.f32 %v2005, %v2361
      %v2486 = vadd.f32 %v2008, %v2364
      %v2487 = vadd.f32 %v2013, %v2369
      %v2488 = vadd.f32 %v2016, %v2372
      %v2489 = vadd.f32 %v2021, %v2377
      %v2490 = vadd.f32 %v2024, %v2380
      %v2491 = vadd.f32 %v2029, %v2385
      %v2492 = vadd.f32 %v2032, %v2388
      %v2493 = vadd.f32 %v2037, %v2393
      %v2494 = vadd.f32 %v2040, %v2396
      %v2495 = vadd.f32 %v2045, %v2401
      %v2496 = vadd.f32 %v2048, %v2404
      %v2497 = vadd.f32 %v2053, %v2409
      %v2498 = vadd.f32 %v2056, %v2412
      %v2499 = vadd.f32 %v2061, %v2417
      %v2500 = vadd.f32 %v2064, %v2420
      %v2501 = vadd.f32 %v2069, %v2425
      %v2502 = vadd.f32 %v2072, %v2428
      %v2503 = vadd.f32 %v2077, %v2433
      %v2504 = vadd.f32 %v2080, %v2436
      %v2505 = vadd.f32 %v2085, %v2441
      %v2506 = vadd.f32 %v2088, %v2444
      %v2507 = vadd.f32 %v2093, %v2449
      %v2508 = vadd.f32 %v2096, %v2452
      %v2509 = vadd.f32 %v2101, %v2457
      %v2510 = vadd.f32 %v2104, %v2460
      %v2511 = vld [vmem:[#allocation2 + $0xc] sm:$0xf]
      %v2512 = vld [vmem:[#allocation2 + $0x10] sm:$0xf]
      %v2513 = vld [vmem:[#allocation2 + $0x14] sm:$0xf]
      %v2514 = vld [vmem:[#allocation2 + $0x18] sm:$0xf]
      %v2515 = vld [vmem:[#allocation2 + $0x1c] sm:$0xf]
      %v2516 = vld [vmem:[#allocation2 + $0x20] sm:$0xf]
      %v2517 = vld [vmem:[#allocation2 + $0x24] sm:$0xf]
      %v2518 = vld [vmem:[#allocation2 + $0x28] sm:$0xf]
      %v2519 = vld [vmem:[#allocation2 + $0x2c] sm:$0xf]
      %v2520 = vld [vmem:[#allocation2 + $0x30] sm:$0xf]
      %v2521 = vld [vmem:[#allocation2 + $0x34] sm:$0xf]
      %v2522 = vld [vmem:[#allocation2 + $0x38] sm:$0xf]
      %v2523 = vld [vmem:[#allocation2 + $0x3c] sm:$0xf]
      %v2524 = vld [vmem:[#allocation2 + $0x40] sm:$0xf]
      %v2525 = vld [vmem:[#allocation2 + $0x44] sm:$0xf]
      %v2526 = vld [vmem:[#allocation2 + $0x48] sm:$0xf]
      %v2527 = vld [vmem:[#allocation2 + $0x4c] sm:$0xf]
      %v2528 = vld [vmem:[#allocation2 + $0x50] sm:$0xf]
      %v2529 = vld [vmem:[#allocation2 + $0x54] sm:$0xf]
      %v2530 = vld [vmem:[#allocation2 + $0x58] sm:$0xf]
      %v2531 = vld [vmem:[#allocation2 + $0x5c] sm:$0xf]
      %v2532 = vld [vmem:[#allocation2 + $0x60] sm:$0xf]
      %v2533 = vld [vmem:[#allocation2 + $0x64] sm:$0xf]
      %v2534 = vld [vmem:[#allocation2 + $0x68] sm:$0xf]
      %v2535 = vld [vmem:[#allocation2 + $0x6c] sm:$0xf]
      %v2536 = vld [vmem:[#allocation2 + $0x70] sm:$0xf]
      %v2537 = vld [vmem:[#allocation2 + $0x74] sm:$0xf]
      %v2538 = vld [vmem:[#allocation2 + $0x78] sm:$0xf]
      %v2539 = vld [vmem:[#allocation2 + $0x7c] sm:$0xf]
      %v2540 = vld [vmem:[#allocation2 + $0x80] sm:$0xf]
      %v2541 = vld [vmem:[#allocation2 + $0x84] sm:$0xf]
      %v2542 = vld [vmem:[#allocation2 + $0x88] sm:$0xf]
      %v2543 = vld [vmem:[#allocation2 + $0x8c] sm:$0xf]
      %v2544 = vld [vmem:[#allocation2 + $0x90] sm:$0xf]
      %v2545 = vld [vmem:[#allocation2 + $0x94] sm:$0xf]
      %v2546 = vld [vmem:[#allocation2 + $0x98] sm:$0xf]
      %v2547 = vld [vmem:[#allocation2 + $0x9c] sm:$0xf]
      %v2548 = vld [vmem:[#allocation2 + $0xa0] sm:$0xf]
      %v2549 = vld [vmem:[#allocation2 + $0xa4] sm:$0xf]
      %v2550 = vld [vmem:[#allocation2 + $0xa8] sm:$0xf]
      %v2551 = vld [vmem:[#allocation2 + $0xac] sm:$0xf]
      %v2552 = vld [vmem:[#allocation2 + $0xb0] sm:$0xf]
      %v2553 = vld [vmem:[#allocation2 + $0xb4] sm:$0xf]
      %v2554 = vld [vmem:[#allocation2 + $0xb8] sm:$0xf]
      %v2555 = vld [vmem:[#allocation2 + $0xbc] sm:$0xf]
      %v2556 = vld [vmem:[#allocation2 + $0xc0] sm:$0xf]
      %v2557 = vld [vmem:[#allocation2 + $0xc4] sm:$0xf]
      %v2558 = vld [vmem:[#allocation2 + $0xc8] sm:$0xf]
      %s2559 = scalar_lea.vmem %s3, 6
      %v2560 = vld [vmem:[%s2559] sm:$0x3]
      %v2609 = vunpack.c.l.b16 %v2511
      %v2610 = vunpack.c.l.b16 %v2512
      %v2611 = vunpack.c.l.b16 %v2513
      %v2612 = vunpack.c.l.b16 %v2514
      %v2613 = vunpack.c.l.b16 %v2515
      %v2614 = vunpack.c.l.b16 %v2516
      %v2615 = vunpack.c.l.b16 %v2517
      %v2616 = vunpack.c.l.b16 %v2518
      %v2617 = vunpack.c.l.b16 %v2519
      %v2618 = vunpack.c.l.b16 %v2520
      %v2619 = vunpack.c.l.b16 %v2521
      %v2620 = vunpack.c.l.b16 %v2522
      %v2621 = vunpack.c.l.b16 %v2523
      %v2622 = vunpack.c.l.b16 %v2524
      %v2623 = vunpack.c.l.b16 %v2525
      %v2624 = vunpack.c.l.b16 %v2526
      %v2625 = vunpack.c.l.b16 %v2527
      %v2626 = vunpack.c.l.b16 %v2528
      %v2627 = vunpack.c.l.b16 %v2529
      %v2628 = vunpack.c.l.b16 %v2530
      %v2629 = vunpack.c.l.b16 %v2531
      %v2630 = vunpack.c.l.b16 %v2532
      %v2631 = vunpack.c.l.b16 %v2533
      %v2632 = vunpack.c.l.b16 %v2534
      %v2633 = vunpack.c.l.b16 %v2535
      %v2634 = vunpack.c.l.b16 %v2536
      %v2635 = vunpack.c.l.b16 %v2537
      %v2636 = vunpack.c.l.b16 %v2538
      %v2637 = vunpack.c.l.b16 %v2539
      %v2638 = vunpack.c.l.b16 %v2540
      %v2639 = vunpack.c.l.b16 %v2541
      %v2640 = vunpack.c.l.b16 %v2542
      %v2641 = vunpack.c.l.b16 %v2543
      %v2642 = vunpack.c.l.b16 %v2544
      %v2643 = vunpack.c.l.b16 %v2545
      %v2644 = vunpack.c.l.b16 %v2546
      %v2645 = vunpack.c.l.b16 %v2547
      %v2646 = vunpack.c.l.b16 %v2548
      %v2647 = vunpack.c.l.b16 %v2549
      %v2648 = vunpack.c.l.b16 %v2550
      %v2649 = vunpack.c.l.b16 %v2551
      %v2650 = vunpack.c.l.b16 %v2552
      %v2651 = vunpack.c.l.b16 %v2553
      %v2652 = vunpack.c.l.b16 %v2554
      %v2653 = vunpack.c.l.b16 %v2555
      %v2654 = vunpack.c.l.b16 %v2556
      %v2655 = vunpack.c.l.b16 %v2557
      %v2656 = vunpack.c.l.b16 %v2558
      %v2657 = vpack.c.b16 %v2610, %v2609
      %v2658 = vpack.c.b16 %v2612, %v2611
      %v2659 = vpack.c.b16 %v2614, %v2613
      %v2660 = vpack.c.b16 %v2616, %v2615
      %v2661 = vpack.c.b16 %v2618, %v2617
      %v2662 = vpack.c.b16 %v2620, %v2619
      %v2663 = vpack.c.b16 %v2622, %v2621
      %v2664 = vpack.c.b16 %v2624, %v2623
      %v2665 = vpack.c.b16 %v2626, %v2625
      %v2666 = vpack.c.b16 %v2628, %v2627
      %v2667 = vpack.c.b16 %v2630, %v2629
      %v2668 = vpack.c.b16 %v2632, %v2631
      %v2669 = vpack.c.b16 %v2634, %v2633
      %v2670 = vpack.c.b16 %v2636, %v2635
      %v2671 = vpack.c.b16 %v2638, %v2637
      %v2672 = vpack.c.b16 %v2640, %v2639
      %v2673 = vpack.c.b16 %v2642, %v2641
      %v2674 = vpack.c.b16 %v2644, %v2643
      %v2675 = vpack.c.b16 %v2646, %v2645
      %v2676 = vpack.c.b16 %v2648, %v2647
      %v2677 = vpack.c.b16 %v2650, %v2649
      %v2678 = vpack.c.b16 %v2652, %v2651
      %v2679 = vpack.c.b16 %v2654, %v2653
      %v2680 = vpack.c.b16 %v2656, %v2655
      %v2682 = vsel %vm1526, %v2657, 0
      %v2685 = vsel %vm1526, %v2658, 0
      %v2688 = vsel %vm1526, %v2659, 0
      %v2691 = vsel %vm1526, %v2660, 0
      %v2694 = vsel %vm1526, %v2661, 0
      %v2697 = vsel %vm1526, %v2662, 0
      %v2700 = vsel %vm1526, %v2663, 0
      %v2703 = vsel %vm1526, %v2664, 0
      %v2706 = vsel %vm1526, %v2665, 0
      %v2709 = vsel %vm1526, %v2666, 0
      %v2712 = vsel %vm1526, %v2667, 0
      %v2715 = vsel %vm1526, %v2668, 0
      %v2718 = vsel %vm1526, %v2669, 0
      %v2721 = vsel %vm1526, %v2670, 0
      %v2724 = vsel %vm1526, %v2671, 0
      %v2727 = vsel %vm1526, %v2672, 0
      %v2730 = vsel %vm1526, %v2673, 0
      %v2733 = vsel %vm1526, %v2674, 0
      %v2736 = vsel %vm1526, %v2675, 0
      %v2739 = vsel %vm1526, %v2676, 0
      %v2742 = vsel %vm1526, %v2677, 0
      %v2745 = vsel %vm1526, %v2678, 0
      %v2748 = vsel %vm1526, %v2679, 0
      %v2751 = vsel %vm1526, %v2680, 0
      %v2754 = vand.u32 %v2560, %v1602
      %2756 = vmatprep.subr.bf16.mxu0 0
      %2757 = vmatpush1.bf16.msra.mxu0 0
      %2758 = vmatprep.subr.bf16.mxu0 0
      %2759 = vmatpush1.bf16.msra.mxu0 0
      %2760 = vmatprep.subr.bf16.mxu0 0
      %2761 = vmatpush1.bf16.msra.mxu0 0
      %2762 = vmatprep.subr.bf16.mxu0 0
      %2763 = vmatpush1.bf16.msra.mxu0 0
      %2764 = vmatprep.subr.bf16.mxu0 0
      %2765 = vmatpush1.bf16.msra.mxu0 0
      %2766 = vmatprep.subr.bf16.mxu0 0
      %2767 = vmatpush1.bf16.msra.mxu0 0
      %2768 = vmatprep.subr.bf16.mxu0 0
      %2769 = vmatpush1.bf16.msra.mxu0 0
      %2770 = vmatprep.subr.bf16.mxu0 0
      %2771 = vmatpush1.bf16.msra.mxu0 %v2754
      %2772 = vmatprep.subr.bf16.mxu0 0
      %2773 = vmatpush2.bf16.msra.mxu0 0
      %2774 = vmatprep.subr.bf16.mxu0 0
      %2775 = vmatpush2.bf16.msra.mxu0 0
      %2776 = vmatprep.subr.bf16.mxu0 0
      %2777 = vmatpush2.bf16.msra.mxu0 0
      %2778 = vmatprep.subr.bf16.mxu0 0
      %2779 = vmatpush2.bf16.msra.mxu0 0
      %2780 = vmatprep.subr.bf16.mxu0 0
      %2781 = vmatpush2.bf16.msra.mxu0 0
      %2782 = vmatprep.subr.bf16.mxu0 0
      %2783 = vmatpush2.bf16.msra.mxu0 0
      %2784 = vmatprep.subr.bf16.mxu0 0
      %2785 = vmatpush2.bf16.msra.mxu0 0
      %2786 = vmatprep.subr.bf16.mxu0 0
      %2787 = vmatpush2.bf16.msra.mxu0 0
      %2788 = vmatprep.mubr.bf16.mxu0 0
      %2789 = vmatmul.mubr.bf16.gmra.mxu0 %v2682
      %v2790 = vpop.f32.mrf.mxu0
      %v2791 = vadd.f32 0.0, %v2790
      %v2792 = vpop.f32.mrf.mxu0
      %v2793 = vpop.f32.mrf.mxu0
      %v2794 = vadd.f32 0.0, %v2793
      %v2795 = vpop.f32.mrf.mxu0
      %2796 = vmatprep.mubr.bf16.mxu0 0
      %2797 = vmatmul.mubr.bf16.gmra.mxu0 %v2685
      %v2798 = vpop.f32.mrf.mxu0
      %v2799 = vadd.f32 0.0, %v2798
      %v2800 = vpop.f32.mrf.mxu0
      %v2801 = vpop.f32.mrf.mxu0
      %v2802 = vadd.f32 0.0, %v2801
      %v2803 = vpop.f32.mrf.mxu0
      %2804 = vmatprep.mubr.bf16.mxu0 0
      %2805 = vmatmul.mubr.bf16.gmra.mxu0 %v2688
      %v2806 = vpop.f32.mrf.mxu0
      %v2807 = vadd.f32 0.0, %v2806
      %v2808 = vpop.f32.mrf.mxu0
      %v2809 = vpop.f32.mrf.mxu0
      %v2810 = vadd.f32 0.0, %v2809
      %v2811 = vpop.f32.mrf.mxu0
      %2812 = vmatprep.mubr.bf16.mxu0 0
      %2813 = vmatmul.mubr.bf16.gmra.mxu0 %v2691
      %v2814 = vpop.f32.mrf.mxu0
      %v2815 = vadd.f32 0.0, %v2814
      %v2816 = vpop.f32.mrf.mxu0
      %v2817 = vpop.f32.mrf.mxu0
      %v2818 = vadd.f32 0.0, %v2817
      %v2819 = vpop.f32.mrf.mxu0
      %2820 = vmatprep.mubr.bf16.mxu0 0
      %2821 = vmatmul.mubr.bf16.gmra.mxu0 %v2694
      %v2822 = vpop.f32.mrf.mxu0
      %v2823 = vadd.f32 0.0, %v2822
      %v2824 = vpop.f32.mrf.mxu0
      %v2825 = vpop.f32.mrf.mxu0
      %v2826 = vadd.f32 0.0, %v2825
      %v2827 = vpop.f32.mrf.mxu0
      %2828 = vmatprep.mubr.bf16.mxu0 0
      %2829 = vmatmul.mubr.bf16.gmra.mxu0 %v2697
      %v2830 = vpop.f32.mrf.mxu0
      %v2831 = vadd.f32 0.0, %v2830
      %v2832 = vpop.f32.mrf.mxu0
      %v2833 = vpop.f32.mrf.mxu0
      %v2834 = vadd.f32 0.0, %v2833
      %v2835 = vpop.f32.mrf.mxu0
      %2836 = vmatprep.mubr.bf16.mxu0 0
      %2837 = vmatmul.mubr.bf16.gmra.mxu0 %v2700
      %v2838 = vpop.f32.mrf.mxu0
      %v2839 = vadd.f32 0.0, %v2838
      %v2840 = vpop.f32.mrf.mxu0
      %v2841 = vpop.f32.mrf.mxu0
      %v2842 = vadd.f32 0.0, %v2841
      %v2843 = vpop.f32.mrf.mxu0
      %2844 = vmatprep.mubr.bf16.mxu0 0
      %2845 = vmatmul.mubr.bf16.gmra.mxu0 %v2703
      %v2846 = vpop.f32.mrf.mxu0
      %v2847 = vadd.f32 0.0, %v2846
      %v2848 = vpop.f32.mrf.mxu0
      %v2849 = vpop.f32.mrf.mxu0
      %v2850 = vadd.f32 0.0, %v2849
      %v2851 = vpop.f32.mrf.mxu0
      %2852 = vmatprep.mubr.bf16.mxu0 0
      %2853 = vmatmul.mubr.bf16.gmra.mxu0 %v2706
      %v2854 = vpop.f32.mrf.mxu0
      %v2855 = vadd.f32 0.0, %v2854
      %v2856 = vpop.f32.mrf.mxu0
      %v2857 = vpop.f32.mrf.mxu0
      %v2858 = vadd.f32 0.0, %v2857
      %v2859 = vpop.f32.mrf.mxu0
      %2860 = vmatprep.mubr.bf16.mxu0 0
      %2861 = vmatmul.mubr.bf16.gmra.mxu0 %v2709
      %v2862 = vpop.f32.mrf.mxu0
      %v2863 = vadd.f32 0.0, %v2862
      %v2864 = vpop.f32.mrf.mxu0
      %v2865 = vpop.f32.mrf.mxu0
      %v2866 = vadd.f32 0.0, %v2865
      %v2867 = vpop.f32.mrf.mxu0
      %2868 = vmatprep.mubr.bf16.mxu0 0
      %2869 = vmatmul.mubr.bf16.gmra.mxu0 %v2712
      %v2870 = vpop.f32.mrf.mxu0
      %v2871 = vadd.f32 0.0, %v2870
      %v2872 = vpop.f32.mrf.mxu0
      %v2873 = vpop.f32.mrf.mxu0
      %v2874 = vadd.f32 0.0, %v2873
      %v2875 = vpop.f32.mrf.mxu0
      %2876 = vmatprep.mubr.bf16.mxu0 0
      %2877 = vmatmul.mubr.bf16.gmra.mxu0 %v2715
      %v2878 = vpop.f32.mrf.mxu0
      %v2879 = vadd.f32 0.0, %v2878
      %v2880 = vpop.f32.mrf.mxu0
      %v2881 = vpop.f32.mrf.mxu0
      %v2882 = vadd.f32 0.0, %v2881
      %v2883 = vpop.f32.mrf.mxu0
      %2884 = vmatprep.mubr.bf16.mxu0 0
      %2885 = vmatmul.mubr.bf16.gmra.mxu0 %v2718
      %v2886 = vpop.f32.mrf.mxu0
      %v2887 = vadd.f32 0.0, %v2886
      %v2888 = vpop.f32.mrf.mxu0
      %v2889 = vpop.f32.mrf.mxu0
      %v2890 = vadd.f32 0.0, %v2889
      %v2891 = vpop.f32.mrf.mxu0
      %2892 = vmatprep.mubr.bf16.mxu0 0
      %2893 = vmatmul.mubr.bf16.gmra.mxu0 %v2721
      %v2894 = vpop.f32.mrf.mxu0
      %v2895 = vadd.f32 0.0, %v2894
      %v2896 = vpop.f32.mrf.mxu0
      %v2897 = vpop.f32.mrf.mxu0
      %v2898 = vadd.f32 0.0, %v2897
      %v2899 = vpop.f32.mrf.mxu0
      %2900 = vmatprep.mubr.bf16.mxu0 0
      %2901 = vmatmul.mubr.bf16.gmra.mxu0 %v2724
      %v2902 = vpop.f32.mrf.mxu0
      %v2903 = vadd.f32 0.0, %v2902
      %v2904 = vpop.f32.mrf.mxu0
      %v2905 = vpop.f32.mrf.mxu0
      %v2906 = vadd.f32 0.0, %v2905
      %v2907 = vpop.f32.mrf.mxu0
      %2908 = vmatprep.mubr.bf16.mxu0 0
      %2909 = vmatmul.mubr.bf16.gmra.mxu0 %v2727
      %v2910 = vpop.f32.mrf.mxu0
      %v2911 = vadd.f32 0.0, %v2910
      %v2912 = vpop.f32.mrf.mxu0
      %v2913 = vpop.f32.mrf.mxu0
      %v2914 = vadd.f32 0.0, %v2913
      %v2915 = vpop.f32.mrf.mxu0
      %2916 = vmatprep.mubr.bf16.mxu0 0
      %2917 = vmatmul.mubr.bf16.gmra.mxu0 %v2730
      %v2918 = vpop.f32.mrf.mxu0
      %v2919 = vadd.f32 0.0, %v2918
      %v2920 = vpop.f32.mrf.mxu0
      %v2921 = vpop.f32.mrf.mxu0
      %v2922 = vadd.f32 0.0, %v2921
      %v2923 = vpop.f32.mrf.mxu0
      %2924 = vmatprep.mubr.bf16.mxu0 0
      %2925 = vmatmul.mubr.bf16.gmra.mxu0 %v2733
      %v2926 = vpop.f32.mrf.mxu0
      %v2927 = vadd.f32 0.0, %v2926
      %v2928 = vpop.f32.mrf.mxu0
      %v2929 = vpop.f32.mrf.mxu0
      %v2930 = vadd.f32 0.0, %v2929
      %v2931 = vpop.f32.mrf.mxu0
      %2932 = vmatprep.mubr.bf16.mxu0 0
      %2933 = vmatmul.mubr.bf16.gmra.mxu0 %v2736
      %v2934 = vpop.f32.mrf.mxu0
      %v2935 = vadd.f32 0.0, %v2934
      %v2936 = vpop.f32.mrf.mxu0
      %v2937 = vpop.f32.mrf.mxu0
      %v2938 = vadd.f32 0.0, %v2937
      %v2939 = vpop.f32.mrf.mxu0
      %2940 = vmatprep.mubr.bf16.mxu0 0
      %2941 = vmatmul.mubr.bf16.gmra.mxu0 %v2739
      %v2942 = vpop.f32.mrf.mxu0
      %v2943 = vadd.f32 0.0, %v2942
      %v2944 = vpop.f32.mrf.mxu0
      %v2945 = vpop.f32.mrf.mxu0
      %v2946 = vadd.f32 0.0, %v2945
      %v2947 = vpop.f32.mrf.mxu0
      %2948 = vmatprep.mubr.bf16.mxu0 0
      %2949 = vmatmul.mubr.bf16.gmra.mxu0 %v2742
      %v2950 = vpop.f32.mrf.mxu0
      %v2951 = vadd.f32 0.0, %v2950
      %v2952 = vpop.f32.mrf.mxu0
      %v2953 = vpop.f32.mrf.mxu0
      %v2954 = vadd.f32 0.0, %v2953
      %v2955 = vpop.f32.mrf.mxu0
      %2956 = vmatprep.mubr.bf16.mxu0 0
      %2957 = vmatmul.mubr.bf16.gmra.mxu0 %v2745
      %v2958 = vpop.f32.mrf.mxu0
      %v2959 = vadd.f32 0.0, %v2958
      %v2960 = vpop.f32.mrf.mxu0
      %v2961 = vpop.f32.mrf.mxu0
      %v2962 = vadd.f32 0.0, %v2961
      %v2963 = vpop.f32.mrf.mxu0
      %2964 = vmatprep.mubr.bf16.mxu0 0
      %2965 = vmatmul.mubr.bf16.gmra.mxu0 %v2748
      %v2966 = vpop.f32.mrf.mxu0
      %v2967 = vadd.f32 0.0, %v2966
      %v2968 = vpop.f32.mrf.mxu0
      %v2969 = vpop.f32.mrf.mxu0
      %v2970 = vadd.f32 0.0, %v2969
      %v2971 = vpop.f32.mrf.mxu0
      %2972 = vmatprep.mubr.bf16.mxu0 0
      %2973 = vmatmul.mubr.bf16.gmra.mxu0 %v2751
      %v2974 = vpop.f32.mrf.mxu0
      %v2975 = vadd.f32 0.0, %v2974
      %v2976 = vpop.f32.mrf.mxu0
      %v2977 = vpop.f32.mrf.mxu0
      %v2978 = vadd.f32 0.0, %v2977
      %v2979 = vpop.f32.mrf.mxu0
      %2980 = vdwg.mxu0
      %v2981 = vadd.f32 %v2463, %v2791
      %v2982 = vadd.f32 %v2464, %v2794
      %v2983 = vadd.f32 %v2465, %v2799
      %v2984 = vadd.f32 %v2466, %v2802
      %v2985 = vadd.f32 %v2467, %v2807
      %v2986 = vadd.f32 %v2468, %v2810
      %v2987 = vadd.f32 %v2469, %v2815
      %v2988 = vadd.f32 %v2470, %v2818
      %v2989 = vadd.f32 %v2471, %v2823
      %v2990 = vadd.f32 %v2472, %v2826
      %v2991 = vadd.f32 %v2473, %v2831
      %v2992 = vadd.f32 %v2474, %v2834
      %v2993 = vadd.f32 %v2475, %v2839
      %v2994 = vadd.f32 %v2476, %v2842
      %v2995 = vadd.f32 %v2477, %v2847
      %v2996 = vadd.f32 %v2478, %v2850
      %v2997 = vadd.f32 %v2479, %v2855
      %v2998 = vadd.f32 %v2480, %v2858
      %v2999 = vadd.f32 %v2481, %v2863
      %v3000 = vadd.f32 %v2482, %v2866
      %v3001 = vadd.f32 %v2483, %v2871
      %v3002 = vadd.f32 %v2484, %v2874
      %v3003 = vadd.f32 %v2485, %v2879
      %v3004 = vadd.f32 %v2486, %v2882
      %v3005 = vadd.f32 %v2487, %v2887
      %v3006 = vadd.f32 %v2488, %v2890
      %v3007 = vadd.f32 %v2489, %v2895
      %v3008 = vadd.f32 %v2490, %v2898
      %v3009 = vadd.f32 %v2491, %v2903
      %v3010 = vadd.f32 %v2492, %v2906
      %v3011 = vadd.f32 %v2493, %v2911
      %v3012 = vadd.f32 %v2494, %v2914
      %v3013 = vadd.f32 %v2495, %v2919
      %v3014 = vadd.f32 %v2496, %v2922
      %v3015 = vadd.f32 %v2497, %v2927
      %v3016 = vadd.f32 %v2498, %v2930
      %v3017 = vadd.f32 %v2499, %v2935
      %v3018 = vadd.f32 %v2500, %v2938
      %v3019 = vadd.f32 %v2501, %v2943
      %v3020 = vadd.f32 %v2502, %v2946
      %v3021 = vadd.f32 %v2503, %v2951
      %v3022 = vadd.f32 %v2504, %v2954
      %v3023 = vadd.f32 %v2505, %v2959
      %v3024 = vadd.f32 %v2506, %v2962
      %v3025 = vadd.f32 %v2507, %v2967
      %v3026 = vadd.f32 %v2508, %v2970
      %v3027 = vadd.f32 %v2509, %v2975
      %v3028 = vadd.f32 %v2510, %v2978
      %v3029 = vld [vmem:[#allocation2 + $0xc] sm:$0xf]
      %v3030 = vld [vmem:[#allocation2 + $0x10] sm:$0xf]
      %v3031 = vld [vmem:[#allocation2 + $0x14] sm:$0xf]
      %v3032 = vld [vmem:[#allocation2 + $0x18] sm:$0xf]
      %v3033 = vld [vmem:[#allocation2 + $0x1c] sm:$0xf]
      %v3034 = vld [vmem:[#allocation2 + $0x20] sm:$0xf]
      %v3035 = vld [vmem:[#allocation2 + $0x24] sm:$0xf]
      %v3036 = vld [vmem:[#allocation2 + $0x28] sm:$0xf]
      %v3037 = vld [vmem:[#allocation2 + $0x2c] sm:$0xf]
      %v3038 = vld [vmem:[#allocation2 + $0x30] sm:$0xf]
      %v3039 = vld [vmem:[#allocation2 + $0x34] sm:$0xf]
      %v3040 = vld [vmem:[#allocation2 + $0x38] sm:$0xf]
      %v3041 = vld [vmem:[#allocation2 + $0x3c] sm:$0xf]
      %v3042 = vld [vmem:[#allocation2 + $0x40] sm:$0xf]
      %v3043 = vld [vmem:[#allocation2 + $0x44] sm:$0xf]
      %v3044 = vld [vmem:[#allocation2 + $0x48] sm:$0xf]
      %v3045 = vld [vmem:[#allocation2 + $0x4c] sm:$0xf]
      %v3046 = vld [vmem:[#allocation2 + $0x50] sm:$0xf]
      %v3047 = vld [vmem:[#allocation2 + $0x54] sm:$0xf]
      %v3048 = vld [vmem:[#allocation2 + $0x58] sm:$0xf]
      %v3049 = vld [vmem:[#allocation2 + $0x5c] sm:$0xf]
      %v3050 = vld [vmem:[#allocation2 + $0x60] sm:$0xf]
      %v3051 = vld [vmem:[#allocation2 + $0x64] sm:$0xf]
      %v3052 = vld [vmem:[#allocation2 + $0x68] sm:$0xf]
      %v3053 = vld [vmem:[#allocation2 + $0x6c] sm:$0xf]
      %v3054 = vld [vmem:[#allocation2 + $0x70] sm:$0xf]
      %v3055 = vld [vmem:[#allocation2 + $0x74] sm:$0xf]
      %v3056 = vld [vmem:[#allocation2 + $0x78] sm:$0xf]
      %v3057 = vld [vmem:[#allocation2 + $0x7c] sm:$0xf]
      %v3058 = vld [vmem:[#allocation2 + $0x80] sm:$0xf]
      %v3059 = vld [vmem:[#allocation2 + $0x84] sm:$0xf]
      %v3060 = vld [vmem:[#allocation2 + $0x88] sm:$0xf]
      %v3061 = vld [vmem:[#allocation2 + $0x8c] sm:$0xf]
      %v3062 = vld [vmem:[#allocation2 + $0x90] sm:$0xf]
      %v3063 = vld [vmem:[#allocation2 + $0x94] sm:$0xf]
      %v3064 = vld [vmem:[#allocation2 + $0x98] sm:$0xf]
      %v3065 = vld [vmem:[#allocation2 + $0x9c] sm:$0xf]
      %v3066 = vld [vmem:[#allocation2 + $0xa0] sm:$0xf]
      %v3067 = vld [vmem:[#allocation2 + $0xa4] sm:$0xf]
      %v3068 = vld [vmem:[#allocation2 + $0xa8] sm:$0xf]
      %v3069 = vld [vmem:[#allocation2 + $0xac] sm:$0xf]
      %v3070 = vld [vmem:[#allocation2 + $0xb0] sm:$0xf]
      %v3071 = vld [vmem:[#allocation2 + $0xb4] sm:$0xf]
      %v3072 = vld [vmem:[#allocation2 + $0xb8] sm:$0xf]
      %v3073 = vld [vmem:[#allocation2 + $0xbc] sm:$0xf]
      %v3074 = vld [vmem:[#allocation2 + $0xc0] sm:$0xf]
      %v3075 = vld [vmem:[#allocation2 + $0xc4] sm:$0xf]
      %v3076 = vld [vmem:[#allocation2 + $0xc8] sm:$0xf]
      %v3077 = vld [vmem:[#allocation2 + $0xcc] sm:$0x1]
      %s3078 = scalar_lea.vmem %s3, 8
      %v3079 = vld [vmem:[%s3078] sm:$0x3]
      %v3129 = vunpack.c.l.b16 %v3029
      %v3130 = vunpack.c.l.b16 %v3030
      %v3131 = vunpack.c.l.b16 %v3031
      %v3132 = vunpack.c.l.b16 %v3032
      %v3133 = vunpack.c.l.b16 %v3033
      %v3134 = vunpack.c.l.b16 %v3034
      %v3135 = vunpack.c.l.b16 %v3035
      %v3136 = vunpack.c.l.b16 %v3036
      %v3137 = vunpack.c.l.b16 %v3037
      %v3138 = vunpack.c.l.b16 %v3038
      %v3139 = vunpack.c.l.b16 %v3039
      %v3140 = vunpack.c.l.b16 %v3040
      %v3141 = vunpack.c.l.b16 %v3041
      %v3142 = vunpack.c.l.b16 %v3042
      %v3143 = vunpack.c.l.b16 %v3043
      %v3144 = vunpack.c.l.b16 %v3044
      %v3145 = vunpack.c.l.b16 %v3045
      %v3146 = vunpack.c.l.b16 %v3046
      %v3147 = vunpack.c.l.b16 %v3047
      %v3148 = vunpack.c.l.b16 %v3048
      %v3149 = vunpack.c.l.b16 %v3049
      %v3150 = vunpack.c.l.b16 %v3050
      %v3151 = vunpack.c.l.b16 %v3051
      %v3152 = vunpack.c.l.b16 %v3052
      %v3153 = vunpack.c.l.b16 %v3053
      %v3154 = vunpack.c.l.b16 %v3054
      %v3155 = vunpack.c.l.b16 %v3055
      %v3156 = vunpack.c.l.b16 %v3056
      %v3157 = vunpack.c.l.b16 %v3057
      %v3158 = vunpack.c.l.b16 %v3058
      %v3159 = vunpack.c.l.b16 %v3059
      %v3160 = vunpack.c.l.b16 %v3060
      %v3161 = vunpack.c.l.b16 %v3061
      %v3162 = vunpack.c.l.b16 %v3062
      %v3163 = vunpack.c.l.b16 %v3063
      %v3164 = vunpack.c.l.b16 %v3064
      %v3165 = vunpack.c.l.b16 %v3065
      %v3166 = vunpack.c.l.b16 %v3066
      %v3167 = vunpack.c.l.b16 %v3067
      %v3168 = vunpack.c.l.b16 %v3068
      %v3169 = vunpack.c.l.b16 %v3069
      %v3170 = vunpack.c.l.b16 %v3070
      %v3171 = vunpack.c.l.b16 %v3071
      %v3172 = vunpack.c.l.b16 %v3072
      %v3173 = vunpack.c.l.b16 %v3073
      %v3174 = vunpack.c.l.b16 %v3074
      %v3175 = vunpack.c.l.b16 %v3075
      %v3176 = vunpack.c.l.b16 %v3076
      %v3177 = vunpack.c.l.b16 %v3077
      %v3178 = vpack.c.b16 %v3130, %v3129
      %v3179 = vpack.c.b16 %v3132, %v3131
      %v3180 = vpack.c.b16 %v3134, %v3133
      %v3181 = vpack.c.b16 %v3136, %v3135
      %v3182 = vpack.c.b16 %v3138, %v3137
      %v3183 = vpack.c.b16 %v3140, %v3139
      %v3184 = vpack.c.b16 %v3142, %v3141
      %v3185 = vpack.c.b16 %v3144, %v3143
      %v3186 = vpack.c.b16 %v3146, %v3145
      %v3187 = vpack.c.b16 %v3148, %v3147
      %v3188 = vpack.c.b16 %v3150, %v3149
      %v3189 = vpack.c.b16 %v3152, %v3151
      %v3190 = vpack.c.b16 %v3154, %v3153
      %v3191 = vpack.c.b16 %v3156, %v3155
      %v3192 = vpack.c.b16 %v3158, %v3157
      %v3193 = vpack.c.b16 %v3160, %v3159
      %v3194 = vpack.c.b16 %v3162, %v3161
      %v3195 = vpack.c.b16 %v3164, %v3163
      %v3196 = vpack.c.b16 %v3166, %v3165
      %v3197 = vpack.c.b16 %v3168, %v3167
      %v3198 = vpack.c.b16 %v3170, %v3169
      %v3199 = vpack.c.b16 %v3172, %v3171
      %v3200 = vpack.c.b16 %v3174, %v3173
      %v3201 = vpack.c.b16 %v3176, %v3175
      %v3202 = vpack.c.b16 %v3177, %v3177
      %v3204 = vshrl.u32 %v3178, 16
      %v3206 = vshll.u32 %v3178, 16
      %v3208 = vrot.slane %v3206, 1
      %v3209 = vor.u32 %v3204, %v3208
      %v3211 = vshll.u32 %v3179, 16
      %v3213 = vrot.slane %v3211, 1
      %v3214 = vsel %vm1329, %v3209, %v3213
      %v3215 = vshrl.u32 %v3179, 16
      %v3217 = vor.u32 %v3215, %v3213
      %v3219 = vshll.u32 %v3180, 16
      %v3221 = vrot.slane %v3219, 1
      %v3222 = vsel %vm1329, %v3217, %v3221
      %v3223 = vshrl.u32 %v3180, 16
      %v3225 = vor.u32 %v3223, %v3221
      %v3227 = vshll.u32 %v3181, 16
      %v3229 = vrot.slane %v3227, 1
      %v3230 = vsel %vm1329, %v3225, %v3229
      %v3231 = vshrl.u32 %v3181, 16
      %v3233 = vor.u32 %v3231, %v3229
      %v3235 = vshll.u32 %v3182, 16
      %v3237 = vrot.slane %v3235, 1
      %v3238 = vsel %vm1329, %v3233, %v3237
      %v3239 = vshrl.u32 %v3182, 16
      %v3241 = vor.u32 %v3239, %v3237
      %v3243 = vshll.u32 %v3183, 16
      %v3245 = vrot.slane %v3243, 1
      %v3246 = vsel %vm1329, %v3241, %v3245
      %v3247 = vshrl.u32 %v3183, 16
      %v3249 = vor.u32 %v3247, %v3245
      %v3251 = vshll.u32 %v3184, 16
      %v3253 = vrot.slane %v3251, 1
      %v3254 = vsel %vm1329, %v3249, %v3253
      %v3255 = vshrl.u32 %v3184, 16
      %v3257 = vor.u32 %v3255, %v3253
      %v3259 = vshll.u32 %v3185, 16
      %v3261 = vrot.slane %v3259, 1
      %v3262 = vsel %vm1329, %v3257, %v3261
      %v3263 = vshrl.u32 %v3185, 16
      %v3265 = vor.u32 %v3263, %v3261
      %v3267 = vshll.u32 %v3186, 16
      %v3269 = vrot.slane %v3267, 1
      %v3270 = vsel %vm1329, %v3265, %v3269
      %v3271 = vshrl.u32 %v3186, 16
      %v3273 = vor.u32 %v3271, %v3269
      %v3275 = vshll.u32 %v3187, 16
      %v3277 = vrot.slane %v3275, 1
      %v3278 = vsel %vm1329, %v3273, %v3277
      %v3279 = vshrl.u32 %v3187, 16
      %v3281 = vor.u32 %v3279, %v3277
      %v3283 = vshll.u32 %v3188, 16
      %v3285 = vrot.slane %v3283, 1
      %v3286 = vsel %vm1329, %v3281, %v3285
      %v3287 = vshrl.u32 %v3188, 16
      %v3289 = vor.u32 %v3287, %v3285
      %v3291 = vshll.u32 %v3189, 16
      %v3293 = vrot.slane %v3291, 1
      %v3294 = vsel %vm1329, %v3289, %v3293
      %v3295 = vshrl.u32 %v3189, 16
      %v3297 = vor.u32 %v3295, %v3293
      %v3299 = vshll.u32 %v3190, 16
      %v3301 = vrot.slane %v3299, 1
      %v3302 = vsel %vm1329, %v3297, %v3301
      %v3303 = vshrl.u32 %v3190, 16
      %v3305 = vor.u32 %v3303, %v3301
      %v3307 = vshll.u32 %v3191, 16
      %v3309 = vrot.slane %v3307, 1
      %v3310 = vsel %vm1329, %v3305, %v3309
      %v3311 = vshrl.u32 %v3191, 16
      %v3313 = vor.u32 %v3311, %v3309
      %v3315 = vshll.u32 %v3192, 16
      %v3317 = vrot.slane %v3315, 1
      %v3318 = vsel %vm1329, %v3313, %v3317
      %v3319 = vshrl.u32 %v3192, 16
      %v3321 = vor.u32 %v3319, %v3317
      %v3323 = vshll.u32 %v3193, 16
      %v3325 = vrot.slane %v3323, 1
      %v3326 = vsel %vm1329, %v3321, %v3325
      %v3327 = vshrl.u32 %v3193, 16
      %v3329 = vor.u32 %v3327, %v3325
      %v3331 = vshll.u32 %v3194, 16
      %v3333 = vrot.slane %v3331, 1
      %v3334 = vsel %vm1329, %v3329, %v3333
      %v3335 = vshrl.u32 %v3194, 16
      %v3337 = vor.u32 %v3335, %v3333
      %v3339 = vshll.u32 %v3195, 16
      %v3341 = vrot.slane %v3339, 1
      %v3342 = vsel %vm1329, %v3337, %v3341
      %v3343 = vshrl.u32 %v3195, 16
      %v3345 = vor.u32 %v3343, %v3341
      %v3347 = vshll.u32 %v3196, 16
      %v3349 = vrot.slane %v3347, 1
      %v3350 = vsel %vm1329, %v3345, %v3349
      %v3351 = vshrl.u32 %v3196, 16
      %v3353 = vor.u32 %v3351, %v3349
      %v3355 = vshll.u32 %v3197, 16
      %v3357 = vrot.slane %v3355, 1
      %v3358 = vsel %vm1329, %v3353, %v3357
      %v3359 = vshrl.u32 %v3197, 16
      %v3361 = vor.u32 %v3359, %v3357
      %v3363 = vshll.u32 %v3198, 16
      %v3365 = vrot.slane %v3363, 1
      %v3366 = vsel %vm1329, %v3361, %v3365
      %v3367 = vshrl.u32 %v3198, 16
      %v3369 = vor.u32 %v3367, %v3365
      %v3371 = vshll.u32 %v3199, 16
      %v3373 = vrot.slane %v3371, 1
      %v3374 = vsel %vm1329, %v3369, %v3373
      %v3375 = vshrl.u32 %v3199, 16
      %v3377 = vor.u32 %v3375, %v3373
      %v3379 = vshll.u32 %v3200, 16
      %v3381 = vrot.slane %v3379, 1
      %v3382 = vsel %vm1329, %v3377, %v3381
      %v3383 = vshrl.u32 %v3200, 16
      %v3385 = vor.u32 %v3383, %v3381
      %v3387 = vshll.u32 %v3201, 16
      %v3389 = vrot.slane %v3387, 1
      %v3390 = vsel %vm1329, %v3385, %v3389
      %v3391 = vshrl.u32 %v3201, 16
      %v3393 = vor.u32 %v3391, %v3389
      %v3395 = vshll.u32 %v3202, 16
      %v3397 = vrot.slane %v3395, 1
      %v3398 = vsel %vm1329, %v3393, %v3397
      %v3400 = vsel %vm1526, %v3214, 0
      %v3403 = vsel %vm1526, %v3222, 0
      %v3406 = vsel %vm1526, %v3230, 0
      %v3409 = vsel %vm1526, %v3238, 0
      %v3412 = vsel %vm1526, %v3246, 0
      %v3415 = vsel %vm1526, %v3254, 0
      %v3418 = vsel %vm1526, %v3262, 0
      %v3421 = vsel %vm1526, %v3270, 0
      %v3424 = vsel %vm1526, %v3278, 0
      %v3427 = vsel %vm1526, %v3286, 0
      %v3430 = vsel %vm1526, %v3294, 0
      %v3433 = vsel %vm1526, %v3302, 0
      %v3436 = vsel %vm1526, %v3310, 0
      %v3439 = vsel %vm1526, %v3318, 0
      %v3442 = vsel %vm1526, %v3326, 0
      %v3445 = vsel %vm1526, %v3334, 0
      %v3448 = vsel %vm1526, %v3342, 0
      %v3451 = vsel %vm1526, %v3350, 0
      %v3454 = vsel %vm1526, %v3358, 0
      %v3457 = vsel %vm1526, %v3366, 0
      %v3460 = vsel %vm1526, %v3374, 0
      %v3463 = vsel %vm1526, %v3382, 0
      %v3466 = vsel %vm1526, %v3390, 0
      %v3469 = vsel %vm1526, %v3398, 0
      %v3472 = vand.u32 %v3079, %v1602
      %3474 = vmatprep.subr.bf16.mxu0 0
      %3475 = vmatpush1.bf16.msra.mxu0 0
      %3476 = vmatprep.subr.bf16.mxu0 0
      %3477 = vmatpush1.bf16.msra.mxu0 0
      %3478 = vmatprep.subr.bf16.mxu0 0
      %3479 = vmatpush1.bf16.msra.mxu0 0
      %3480 = vmatprep.subr.bf16.mxu0 0
      %3481 = vmatpush1.bf16.msra.mxu0 0
      %3482 = vmatprep.subr.bf16.mxu0 0
      %3483 = vmatpush1.bf16.msra.mxu0 0
      %3484 = vmatprep.subr.bf16.mxu0 0
      %3485 = vmatpush1.bf16.msra.mxu0 0
      %3486 = vmatprep.subr.bf16.mxu0 0
      %3487 = vmatpush1.bf16.msra.mxu0 0
      %3488 = vmatprep.subr.bf16.mxu0 0
      %3489 = vmatpush1.bf16.msra.mxu0 %v3472
      %3490 = vmatprep.subr.bf16.mxu0 0
      %3491 = vmatpush2.bf16.msra.mxu0 0
      %3492 = vmatprep.subr.bf16.mxu0 0
      %3493 = vmatpush2.bf16.msra.mxu0 0
      %3494 = vmatprep.subr.bf16.mxu0 0
      %3495 = vmatpush2.bf16.msra.mxu0 0
      %3496 = vmatprep.subr.bf16.mxu0 0
      %3497 = vmatpush2.bf16.msra.mxu0 0
      %3498 = vmatprep.subr.bf16.mxu0 0
      %3499 = vmatpush2.bf16.msra.mxu0 0
      %3500 = vmatprep.subr.bf16.mxu0 0
      %3501 = vmatpush2.bf16.msra.mxu0 0
      %3502 = vmatprep.subr.bf16.mxu0 0
      %3503 = vmatpush2.bf16.msra.mxu0 0
      %3504 = vmatprep.subr.bf16.mxu0 0
      %3505 = vmatpush2.bf16.msra.mxu0 0
      %3506 = vmatprep.mubr.bf16.mxu0 0
      %3507 = vmatmul.mubr.bf16.gmra.mxu0 %v3400
      %v3508 = vpop.f32.mrf.mxu0
      %v3509 = vadd.f32 0.0, %v3508
      %v3510 = vpop.f32.mrf.mxu0
      %v3511 = vpop.f32.mrf.mxu0
      %v3512 = vadd.f32 0.0, %v3511
      %v3513 = vpop.f32.mrf.mxu0
      %3514 = vmatprep.mubr.bf16.mxu0 0
      %3515 = vmatmul.mubr.bf16.gmra.mxu0 %v3403
      %v3516 = vpop.f32.mrf.mxu0
      %v3517 = vadd.f32 0.0, %v3516
      %v3518 = vpop.f32.mrf.mxu0
      %v3519 = vpop.f32.mrf.mxu0
      %v3520 = vadd.f32 0.0, %v3519
      %v3521 = vpop.f32.mrf.mxu0
      %3522 = vmatprep.mubr.bf16.mxu0 0
      %3523 = vmatmul.mubr.bf16.gmra.mxu0 %v3406
      %v3524 = vpop.f32.mrf.mxu0
      %v3525 = vadd.f32 0.0, %v3524
      %v3526 = vpop.f32.mrf.mxu0
      %v3527 = vpop.f32.mrf.mxu0
      %v3528 = vadd.f32 0.0, %v3527
      %v3529 = vpop.f32.mrf.mxu0
      %3530 = vmatprep.mubr.bf16.mxu0 0
      %3531 = vmatmul.mubr.bf16.gmra.mxu0 %v3409
      %v3532 = vpop.f32.mrf.mxu0
      %v3533 = vadd.f32 0.0, %v3532
      %v3534 = vpop.f32.mrf.mxu0
      %v3535 = vpop.f32.mrf.mxu0
      %v3536 = vadd.f32 0.0, %v3535
      %v3537 = vpop.f32.mrf.mxu0
      %3538 = vmatprep.mubr.bf16.mxu0 0
      %3539 = vmatmul.mubr.bf16.gmra.mxu0 %v3412
      %v3540 = vpop.f32.mrf.mxu0
      %v3541 = vadd.f32 0.0, %v3540
      %v3542 = vpop.f32.mrf.mxu0
      %v3543 = vpop.f32.mrf.mxu0
      %v3544 = vadd.f32 0.0, %v3543
      %v3545 = vpop.f32.mrf.mxu0
      %3546 = vmatprep.mubr.bf16.mxu0 0
      %3547 = vmatmul.mubr.bf16.gmra.mxu0 %v3415
      %v3548 = vpop.f32.mrf.mxu0
      %v3549 = vadd.f32 0.0, %v3548
      %v3550 = vpop.f32.mrf.mxu0
      %v3551 = vpop.f32.mrf.mxu0
      %v3552 = vadd.f32 0.0, %v3551
      %v3553 = vpop.f32.mrf.mxu0
      %3554 = vmatprep.mubr.bf16.mxu0 0
      %3555 = vmatmul.mubr.bf16.gmra.mxu0 %v3418
      %v3556 = vpop.f32.mrf.mxu0
      %v3557 = vadd.f32 0.0, %v3556
      %v3558 = vpop.f32.mrf.mxu0
      %v3559 = vpop.f32.mrf.mxu0
      %v3560 = vadd.f32 0.0, %v3559
      %v3561 = vpop.f32.mrf.mxu0
      %3562 = vmatprep.mubr.bf16.mxu0 0
      %3563 = vmatmul.mubr.bf16.gmra.mxu0 %v3421
      %v3564 = vpop.f32.mrf.mxu0
      %v3565 = vadd.f32 0.0, %v3564
      %v3566 = vpop.f32.mrf.mxu0
      %v3567 = vpop.f32.mrf.mxu0
      %v3568 = vadd.f32 0.0, %v3567
      %v3569 = vpop.f32.mrf.mxu0
      %3570 = vmatprep.mubr.bf16.mxu0 0
      %3571 = vmatmul.mubr.bf16.gmra.mxu0 %v3424
      %v3572 = vpop.f32.mrf.mxu0
      %v3573 = vadd.f32 0.0, %v3572
      %v3574 = vpop.f32.mrf.mxu0
      %v3575 = vpop.f32.mrf.mxu0
      %v3576 = vadd.f32 0.0, %v3575
      %v3577 = vpop.f32.mrf.mxu0
      %3578 = vmatprep.mubr.bf16.mxu0 0
      %3579 = vmatmul.mubr.bf16.gmra.mxu0 %v3427
      %v3580 = vpop.f32.mrf.mxu0
      %v3581 = vadd.f32 0.0, %v3580
      %v3582 = vpop.f32.mrf.mxu0
      %v3583 = vpop.f32.mrf.mxu0
      %v3584 = vadd.f32 0.0, %v3583
      %v3585 = vpop.f32.mrf.mxu0
      %3586 = vmatprep.mubr.bf16.mxu0 0
      %3587 = vmatmul.mubr.bf16.gmra.mxu0 %v3430
      %v3588 = vpop.f32.mrf.mxu0
      %v3589 = vadd.f32 0.0, %v3588
      %v3590 = vpop.f32.mrf.mxu0
      %v3591 = vpop.f32.mrf.mxu0
      %v3592 = vadd.f32 0.0, %v3591
      %v3593 = vpop.f32.mrf.mxu0
      %3594 = vmatprep.mubr.bf16.mxu0 0
      %3595 = vmatmul.mubr.bf16.gmra.mxu0 %v3433
      %v3596 = vpop.f32.mrf.mxu0
      %v3597 = vadd.f32 0.0, %v3596
      %v3598 = vpop.f32.mrf.mxu0
      %v3599 = vpop.f32.mrf.mxu0
      %v3600 = vadd.f32 0.0, %v3599
      %v3601 = vpop.f32.mrf.mxu0
      %3602 = vmatprep.mubr.bf16.mxu0 0
      %3603 = vmatmul.mubr.bf16.gmra.mxu0 %v3436
      %v3604 = vpop.f32.mrf.mxu0
      %v3605 = vadd.f32 0.0, %v3604
      %v3606 = vpop.f32.mrf.mxu0
      %v3607 = vpop.f32.mrf.mxu0
      %v3608 = vadd.f32 0.0, %v3607
      %v3609 = vpop.f32.mrf.mxu0
      %3610 = vmatprep.mubr.bf16.mxu0 0
      %3611 = vmatmul.mubr.bf16.gmra.mxu0 %v3439
      %v3612 = vpop.f32.mrf.mxu0
      %v3613 = vadd.f32 0.0, %v3612
      %v3614 = vpop.f32.mrf.mxu0
      %v3615 = vpop.f32.mrf.mxu0
      %v3616 = vadd.f32 0.0, %v3615
      %v3617 = vpop.f32.mrf.mxu0
      %3618 = vmatprep.mubr.bf16.mxu0 0
      %3619 = vmatmul.mubr.bf16.gmra.mxu0 %v3442
      %v3620 = vpop.f32.mrf.mxu0
      %v3621 = vadd.f32 0.0, %v3620
      %v3622 = vpop.f32.mrf.mxu0
      %v3623 = vpop.f32.mrf.mxu0
      %v3624 = vadd.f32 0.0, %v3623
      %v3625 = vpop.f32.mrf.mxu0
      %3626 = vmatprep.mubr.bf16.mxu0 0
      %3627 = vmatmul.mubr.bf16.gmra.mxu0 %v3445
      %v3628 = vpop.f32.mrf.mxu0
      %v3629 = vadd.f32 0.0, %v3628
      %v3630 = vpop.f32.mrf.mxu0
      %v3631 = vpop.f32.mrf.mxu0
      %v3632 = vadd.f32 0.0, %v3631
      %v3633 = vpop.f32.mrf.mxu0
      %3634 = vmatprep.mubr.bf16.mxu0 0
      %3635 = vmatmul.mubr.bf16.gmra.mxu0 %v3448
      %v3636 = vpop.f32.mrf.mxu0
      %v3637 = vadd.f32 0.0, %v3636
      %v3638 = vpop.f32.mrf.mxu0
      %v3639 = vpop.f32.mrf.mxu0
      %v3640 = vadd.f32 0.0, %v3639
      %v3641 = vpop.f32.mrf.mxu0
      %3642 = vmatprep.mubr.bf16.mxu0 0
      %3643 = vmatmul.mubr.bf16.gmra.mxu0 %v3451
      %v3644 = vpop.f32.mrf.mxu0
      %v3645 = vadd.f32 0.0, %v3644
      %v3646 = vpop.f32.mrf.mxu0
      %v3647 = vpop.f32.mrf.mxu0
      %v3648 = vadd.f32 0.0, %v3647
      %v3649 = vpop.f32.mrf.mxu0
      %3650 = vmatprep.mubr.bf16.mxu0 0
      %3651 = vmatmul.mubr.bf16.gmra.mxu0 %v3454
      %v3652 = vpop.f32.mrf.mxu0
      %v3653 = vadd.f32 0.0, %v3652
      %v3654 = vpop.f32.mrf.mxu0
      %v3655 = vpop.f32.mrf.mxu0
      %v3656 = vadd.f32 0.0, %v3655
      %v3657 = vpop.f32.mrf.mxu0
      %3658 = vmatprep.mubr.bf16.mxu0 0
      %3659 = vmatmul.mubr.bf16.gmra.mxu0 %v3457
      %v3660 = vpop.f32.mrf.mxu0
      %v3661 = vadd.f32 0.0, %v3660
      %v3662 = vpop.f32.mrf.mxu0
      %v3663 = vpop.f32.mrf.mxu0
      %v3664 = vadd.f32 0.0, %v3663
      %v3665 = vpop.f32.mrf.mxu0
      %3666 = vmatprep.mubr.bf16.mxu0 0
      %3667 = vmatmul.mubr.bf16.gmra.mxu0 %v3460
      %v3668 = vpop.f32.mrf.mxu0
      %v3669 = vadd.f32 0.0, %v3668
      %v3670 = vpop.f32.mrf.mxu0
      %v3671 = vpop.f32.mrf.mxu0
      %v3672 = vadd.f32 0.0, %v3671
      %v3673 = vpop.f32.mrf.mxu0
      %3674 = vmatprep.mubr.bf16.mxu0 0
      %3675 = vmatmul.mubr.bf16.gmra.mxu0 %v3463
      %v3676 = vpop.f32.mrf.mxu0
      %v3677 = vadd.f32 0.0, %v3676
      %v3678 = vpop.f32.mrf.mxu0
      %v3679 = vpop.f32.mrf.mxu0
      %v3680 = vadd.f32 0.0, %v3679
      %v3681 = vpop.f32.mrf.mxu0
      %3682 = vmatprep.mubr.bf16.mxu0 0
      %3683 = vmatmul.mubr.bf16.gmra.mxu0 %v3466
      %v3684 = vpop.f32.mrf.mxu0
      %v3685 = vadd.f32 0.0, %v3684
      %v3686 = vpop.f32.mrf.mxu0
      %v3687 = vpop.f32.mrf.mxu0
      %v3688 = vadd.f32 0.0, %v3687
      %v3689 = vpop.f32.mrf.mxu0
      %3690 = vmatprep.mubr.bf16.mxu0 0
      %3691 = vmatmul.mubr.bf16.gmra.mxu0 %v3469
      %v3692 = vpop.f32.mrf.mxu0
      %v3693 = vadd.f32 0.0, %v3692
      %v3694 = vpop.f32.mrf.mxu0
      %v3695 = vpop.f32.mrf.mxu0
      %v3696 = vadd.f32 0.0, %v3695
      %v3697 = vpop.f32.mrf.mxu0
      %3698 = vdwg.mxu0
      %v3699 = vadd.f32 %v2981, %v3509
      %v3700 = vadd.f32 %v2982, %v3512
      %v3701 = vadd.f32 %v2983, %v3517
      %v3702 = vadd.f32 %v2984, %v3520
      %v3703 = vadd.f32 %v2985, %v3525
      %v3704 = vadd.f32 %v2986, %v3528
      %v3705 = vadd.f32 %v2987, %v3533
      %v3706 = vadd.f32 %v2988, %v3536
      %v3707 = vadd.f32 %v2989, %v3541
      %v3708 = vadd.f32 %v2990, %v3544
      %v3709 = vadd.f32 %v2991, %v3549
      %v3710 = vadd.f32 %v2992, %v3552
      %v3711 = vadd.f32 %v2993, %v3557
      %v3712 = vadd.f32 %v2994, %v3560
      %v3713 = vadd.f32 %v2995, %v3565
      %v3714 = vadd.f32 %v2996, %v3568
      %v3715 = vadd.f32 %v2997, %v3573
      %v3716 = vadd.f32 %v2998, %v3576
      %v3717 = vadd.f32 %v2999, %v3581
      %v3718 = vadd.f32 %v3000, %v3584
      %v3719 = vadd.f32 %v3001, %v3589
      %v3720 = vadd.f32 %v3002, %v3592
      %v3721 = vadd.f32 %v3003, %v3597
      %v3722 = vadd.f32 %v3004, %v3600
      %v3723 = vadd.f32 %v3005, %v3605
      %v3724 = vadd.f32 %v3006, %v3608
      %v3725 = vadd.f32 %v3007, %v3613
      %v3726 = vadd.f32 %v3008, %v3616
      %v3727 = vadd.f32 %v3009, %v3621
      %v3728 = vadd.f32 %v3010, %v3624
      %v3729 = vadd.f32 %v3011, %v3629
      %v3730 = vadd.f32 %v3012, %v3632
      %v3731 = vadd.f32 %v3013, %v3637
      %v3732 = vadd.f32 %v3014, %v3640
      %v3733 = vadd.f32 %v3015, %v3645
      %v3734 = vadd.f32 %v3016, %v3648
      %v3735 = vadd.f32 %v3017, %v3653
      %v3736 = vadd.f32 %v3018, %v3656
      %v3737 = vadd.f32 %v3019, %v3661
      %v3738 = vadd.f32 %v3020, %v3664
      %v3739 = vadd.f32 %v3021, %v3669
      %v3740 = vadd.f32 %v3022, %v3672
      %v3741 = vadd.f32 %v3023, %v3677
      %v3742 = vadd.f32 %v3024, %v3680
      %v3743 = vadd.f32 %v3025, %v3685
      %v3744 = vadd.f32 %v3026, %v3688
      %v3745 = vadd.f32 %v3027, %v3693
      %v3746 = vadd.f32 %v3028, %v3696
      %v3747 = vld [vmem:[#allocation2 + $0xc] sm:$0xe]
      %s3748 = scalar_lea.vmem %s3, 10
      %v3749 = vld [vmem:[%s3748] sm:$0x3]
      %v3751 = vunpack.c.l.b16 %v3747
      %v3752 = vpack.c.b16 %v3130, %v3751
      %v3753 = vrot.slane %v3752, 1
      %v3754 = vrot.slane %v3179, 1
      %v3755 = vsel %vm2113, %v3753, %v3754
      %v3756 = vrot.slane %v3180, 1
      %v3757 = vsel %vm2113, %v3754, %v3756
      %v3758 = vrot.slane %v3181, 1
      %v3759 = vsel %vm2113, %v3756, %v3758
      %v3760 = vrot.slane %v3182, 1
      %v3761 = vsel %vm2113, %v3758, %v3760
      %v3762 = vrot.slane %v3183, 1
      %v3763 = vsel %vm2113, %v3760, %v3762
      %v3764 = vrot.slane %v3184, 1
      %v3765 = vsel %vm2113, %v3762, %v3764
      %v3766 = vrot.slane %v3185, 1
      %v3767 = vsel %vm2113, %v3764, %v3766
      %v3768 = vrot.slane %v3186, 1
      %v3769 = vsel %vm2113, %v3766, %v3768
      %v3770 = vrot.slane %v3187, 1
      %v3771 = vsel %vm2113, %v3768, %v3770
      %v3772 = vrot.slane %v3188, 1
      %v3773 = vsel %vm2113, %v3770, %v3772
      %v3774 = vrot.slane %v3189, 1
      %v3775 = vsel %vm2113, %v3772, %v3774
      %v3776 = vrot.slane %v3190, 1
      %v3777 = vsel %vm2113, %v3774, %v3776
      %v3778 = vrot.slane %v3191, 1
      %v3779 = vsel %vm2113, %v3776, %v3778
      %v3780 = vrot.slane %v3192, 1
      %v3781 = vsel %vm2113, %v3778, %v3780
      %v3782 = vrot.slane %v3193, 1
      %v3783 = vsel %vm2113, %v3780, %v3782
      %v3784 = vrot.slane %v3194, 1
      %v3785 = vsel %vm2113, %v3782, %v3784
      %v3786 = vrot.slane %v3195, 1
      %v3787 = vsel %vm2113, %v3784, %v3786
      %v3788 = vrot.slane %v3196, 1
      %v3789 = vsel %vm2113, %v3786, %v3788
      %v3790 = vrot.slane %v3197, 1
      %v3791 = vsel %vm2113, %v3788, %v3790
      %v3792 = vrot.slane %v3198, 1
      %v3793 = vsel %vm2113, %v3790, %v3792
      %v3794 = vrot.slane %v3199, 1
      %v3795 = vsel %vm2113, %v3792, %v3794
      %v3796 = vrot.slane %v3200, 1
      %v3797 = vsel %vm2113, %v3794, %v3796
      %v3798 = vrot.slane %v3201, 1
      %v3799 = vsel %vm2113, %v3796, %v3798
      %v3800 = vrot.slane %v3202, 1
      %v3801 = vsel %vm2113, %v3798, %v3800
      %v3803 = vsel %vm1526, %v3755, 0
      %v3806 = vsel %vm1526, %v3757, 0
      %v3809 = vsel %vm1526, %v3759, 0
      %v3812 = vsel %vm1526, %v3761, 0
      %v3815 = vsel %vm1526, %v3763, 0
      %v3818 = vsel %vm1526, %v3765, 0
      %v3821 = vsel %vm1526, %v3767, 0
      %v3824 = vsel %vm1526, %v3769, 0
      %v3827 = vsel %vm1526, %v3771, 0
      %v3830 = vsel %vm1526, %v3773, 0
      %v3833 = vsel %vm1526, %v3775, 0
      %v3836 = vsel %vm1526, %v3777, 0
      %v3839 = vsel %vm1526, %v3779, 0
      %v3842 = vsel %vm1526, %v3781, 0
      %v3845 = vsel %vm1526, %v3783, 0
      %v3848 = vsel %vm1526, %v3785, 0
      %v3851 = vsel %vm1526, %v3787, 0
      %v3854 = vsel %vm1526, %v3789, 0
      %v3857 = vsel %vm1526, %v3791, 0
      %v3860 = vsel %vm1526, %v3793, 0
      %v3863 = vsel %vm1526, %v3795, 0
      %v3866 = vsel %vm1526, %v3797, 0
      %v3869 = vsel %vm1526, %v3799, 0
      %v3872 = vsel %vm1526, %v3801, 0
      %v3875 = vand.u32 %v3749, %v1602
      %3877 = vmatprep.subr.bf16.mxu0 0
      %3878 = vmatpush1.bf16.msra.mxu0 0
      %3879 = vmatprep.subr.bf16.mxu0 0
      %3880 = vmatpush1.bf16.msra.mxu0 0
      %3881 = vmatprep.subr.bf16.mxu0 0
      %3882 = vmatpush1.bf16.msra.mxu0 0
      %3883 = vmatprep.subr.bf16.mxu0 0
      %3884 = vmatpush1.bf16.msra.mxu0 0
      %3885 = vmatprep.subr.bf16.mxu0 0
      %3886 = vmatpush1.bf16.msra.mxu0 0
      %3887 = vmatprep.subr.bf16.mxu0 0
      %3888 = vmatpush1.bf16.msra.mxu0 0
      %3889 = vmatprep.subr.bf16.mxu0 0
      %3890 = vmatpush1.bf16.msra.mxu0 0
      %3891 = vmatprep.subr.bf16.mxu0 0
      %3892 = vmatpush1.bf16.msra.mxu0 %v3875
      %3893 = vmatprep.subr.bf16.mxu0 0
      %3894 = vmatpush2.bf16.msra.mxu0 0
      %3895 = vmatprep.subr.bf16.mxu0 0
      %3896 = vmatpush2.bf16.msra.mxu0 0
      %3897 = vmatprep.subr.bf16.mxu0 0
      %3898 = vmatpush2.bf16.msra.mxu0 0
      %3899 = vmatprep.subr.bf16.mxu0 0
      %3900 = vmatpush2.bf16.msra.mxu0 0
      %3901 = vmatprep.subr.bf16.mxu0 0
      %3902 = vmatpush2.bf16.msra.mxu0 0
      %3903 = vmatprep.subr.bf16.mxu0 0
      %3904 = vmatpush2.bf16.msra.mxu0 0
      %3905 = vmatprep.subr.bf16.mxu0 0
      %3906 = vmatpush2.bf16.msra.mxu0 0
      %3907 = vmatprep.subr.bf16.mxu0 0
      %3908 = vmatpush2.bf16.msra.mxu0 0
      %3909 = vmatprep.mubr.bf16.mxu0 0
      %3910 = vmatmul.mubr.bf16.gmra.mxu0 %v3803
      %v3911 = vpop.f32.mrf.mxu0
      %v3912 = vadd.f32 0.0, %v3911
      %v3913 = vpop.f32.mrf.mxu0
      %v3914 = vpop.f32.mrf.mxu0
      %v3915 = vadd.f32 0.0, %v3914
      %v3916 = vpop.f32.mrf.mxu0
      %3917 = vmatprep.mubr.bf16.mxu0 0
      %3918 = vmatmul.mubr.bf16.gmra.mxu0 %v3806
      %v3919 = vpop.f32.mrf.mxu0
      %v3920 = vadd.f32 0.0, %v3919
      %v3921 = vpop.f32.mrf.mxu0
      %v3922 = vpop.f32.mrf.mxu0
      %v3923 = vadd.f32 0.0, %v3922
      %v3924 = vpop.f32.mrf.mxu0
      %3925 = vmatprep.mubr.bf16.mxu0 0
      %3926 = vmatmul.mubr.bf16.gmra.mxu0 %v3809
      %v3927 = vpop.f32.mrf.mxu0
      %v3928 = vadd.f32 0.0, %v3927
      %v3929 = vpop.f32.mrf.mxu0
      %v3930 = vpop.f32.mrf.mxu0
      %v3931 = vadd.f32 0.0, %v3930
      %v3932 = vpop.f32.mrf.mxu0
      %3933 = vmatprep.mubr.bf16.mxu0 0
      %3934 = vmatmul.mubr.bf16.gmra.mxu0 %v3812
      %v3935 = vpop.f32.mrf.mxu0
      %v3936 = vadd.f32 0.0, %v3935
      %v3937 = vpop.f32.mrf.mxu0
      %v3938 = vpop.f32.mrf.mxu0
      %v3939 = vadd.f32 0.0, %v3938
      %v3940 = vpop.f32.mrf.mxu0
      %3941 = vmatprep.mubr.bf16.mxu0 0
      %3942 = vmatmul.mubr.bf16.gmra.mxu0 %v3815
      %v3943 = vpop.f32.mrf.mxu0
      %v3944 = vadd.f32 0.0, %v3943
      %v3945 = vpop.f32.mrf.mxu0
      %v3946 = vpop.f32.mrf.mxu0
      %v3947 = vadd.f32 0.0, %v3946
      %v3948 = vpop.f32.mrf.mxu0
      %3949 = vmatprep.mubr.bf16.mxu0 0
      %3950 = vmatmul.mubr.bf16.gmra.mxu0 %v3818
      %v3951 = vpop.f32.mrf.mxu0
      %v3952 = vadd.f32 0.0, %v3951
      %v3953 = vpop.f32.mrf.mxu0
      %v3954 = vpop.f32.mrf.mxu0
      %v3955 = vadd.f32 0.0, %v3954
      %v3956 = vpop.f32.mrf.mxu0
      %3957 = vmatprep.mubr.bf16.mxu0 0
      %3958 = vmatmul.mubr.bf16.gmra.mxu0 %v3821
      %v3959 = vpop.f32.mrf.mxu0
      %v3960 = vadd.f32 0.0, %v3959
      %v3961 = vpop.f32.mrf.mxu0
      %v3962 = vpop.f32.mrf.mxu0
      %v3963 = vadd.f32 0.0, %v3962
      %v3964 = vpop.f32.mrf.mxu0
      %3965 = vmatprep.mubr.bf16.mxu0 0
      %3966 = vmatmul.mubr.bf16.gmra.mxu0 %v3824
      %v3967 = vpop.f32.mrf.mxu0
      %v3968 = vadd.f32 0.0, %v3967
      %v3969 = vpop.f32.mrf.mxu0
      %v3970 = vpop.f32.mrf.mxu0
      %v3971 = vadd.f32 0.0, %v3970
      %v3972 = vpop.f32.mrf.mxu0
      %3973 = vmatprep.mubr.bf16.mxu0 0
      %3974 = vmatmul.mubr.bf16.gmra.mxu0 %v3827
      %v3975 = vpop.f32.mrf.mxu0
      %v3976 = vadd.f32 0.0, %v3975
      %v3977 = vpop.f32.mrf.mxu0
      %v3978 = vpop.f32.mrf.mxu0
      %v3979 = vadd.f32 0.0, %v3978
      %v3980 = vpop.f32.mrf.mxu0
      %3981 = vmatprep.mubr.bf16.mxu0 0
      %3982 = vmatmul.mubr.bf16.gmra.mxu0 %v3830
      %v3983 = vpop.f32.mrf.mxu0
      %v3984 = vadd.f32 0.0, %v3983
      %v3985 = vpop.f32.mrf.mxu0
      %v3986 = vpop.f32.mrf.mxu0
      %v3987 = vadd.f32 0.0, %v3986
      %v3988 = vpop.f32.mrf.mxu0
      %3989 = vmatprep.mubr.bf16.mxu0 0
      %3990 = vmatmul.mubr.bf16.gmra.mxu0 %v3833
      %v3991 = vpop.f32.mrf.mxu0
      %v3992 = vadd.f32 0.0, %v3991
      %v3993 = vpop.f32.mrf.mxu0
      %v3994 = vpop.f32.mrf.mxu0
      %v3995 = vadd.f32 0.0, %v3994
      %v3996 = vpop.f32.mrf.mxu0
      %3997 = vmatprep.mubr.bf16.mxu0 0
      %3998 = vmatmul.mubr.bf16.gmra.mxu0 %v3836
      %v3999 = vpop.f32.mrf.mxu0
      %v4000 = vadd.f32 0.0, %v3999
      %v4001 = vpop.f32.mrf.mxu0
      %v4002 = vpop.f32.mrf.mxu0
      %v4003 = vadd.f32 0.0, %v4002
      %v4004 = vpop.f32.mrf.mxu0
      %4005 = vmatprep.mubr.bf16.mxu0 0
      %4006 = vmatmul.mubr.bf16.gmra.mxu0 %v3839
      %v4007 = vpop.f32.mrf.mxu0
      %v4008 = vadd.f32 0.0, %v4007
      %v4009 = vpop.f32.mrf.mxu0
      %v4010 = vpop.f32.mrf.mxu0
      %v4011 = vadd.f32 0.0, %v4010
      %v4012 = vpop.f32.mrf.mxu0
      %4013 = vmatprep.mubr.bf16.mxu0 0
      %4014 = vmatmul.mubr.bf16.gmra.mxu0 %v3842
      %v4015 = vpop.f32.mrf.mxu0
      %v4016 = vadd.f32 0.0, %v4015
      %v4017 = vpop.f32.mrf.mxu0
      %v4018 = vpop.f32.mrf.mxu0
      %v4019 = vadd.f32 0.0, %v4018
      %v4020 = vpop.f32.mrf.mxu0
      %4021 = vmatprep.mubr.bf16.mxu0 0
      %4022 = vmatmul.mubr.bf16.gmra.mxu0 %v3845
      %v4023 = vpop.f32.mrf.mxu0
      %v4024 = vadd.f32 0.0, %v4023
      %v4025 = vpop.f32.mrf.mxu0
      %v4026 = vpop.f32.mrf.mxu0
      %v4027 = vadd.f32 0.0, %v4026
      %v4028 = vpop.f32.mrf.mxu0
      %4029 = vmatprep.mubr.bf16.mxu0 0
      %4030 = vmatmul.mubr.bf16.gmra.mxu0 %v3848
      %v4031 = vpop.f32.mrf.mxu0
      %v4032 = vadd.f32 0.0, %v4031
      %v4033 = vpop.f32.mrf.mxu0
      %v4034 = vpop.f32.mrf.mxu0
      %v4035 = vadd.f32 0.0, %v4034
      %v4036 = vpop.f32.mrf.mxu0
      %4037 = vmatprep.mubr.bf16.mxu0 0
      %4038 = vmatmul.mubr.bf16.gmra.mxu0 %v3851
      %v4039 = vpop.f32.mrf.mxu0
      %v4040 = vadd.f32 0.0, %v4039
      %v4041 = vpop.f32.mrf.mxu0
      %v4042 = vpop.f32.mrf.mxu0
      %v4043 = vadd.f32 0.0, %v4042
      %v4044 = vpop.f32.mrf.mxu0
      %4045 = vmatprep.mubr.bf16.mxu0 0
      %4046 = vmatmul.mubr.bf16.gmra.mxu0 %v3854
      %v4047 = vpop.f32.mrf.mxu0
      %v4048 = vadd.f32 0.0, %v4047
      %v4049 = vpop.f32.mrf.mxu0
      %v4050 = vpop.f32.mrf.mxu0
      %v4051 = vadd.f32 0.0, %v4050
      %v4052 = vpop.f32.mrf.mxu0
      %4053 = vmatprep.mubr.bf16.mxu0 0
      %4054 = vmatmul.mubr.bf16.gmra.mxu0 %v3857
      %v4055 = vpop.f32.mrf.mxu0
      %v4056 = vadd.f32 0.0, %v4055
      %v4057 = vpop.f32.mrf.mxu0
      %v4058 = vpop.f32.mrf.mxu0
      %v4059 = vadd.f32 0.0, %v4058
      %v4060 = vpop.f32.mrf.mxu0
      %4061 = vmatprep.mubr.bf16.mxu0 0
      %4062 = vmatmul.mubr.bf16.gmra.mxu0 %v3860
      %v4063 = vpop.f32.mrf.mxu0
      %v4064 = vadd.f32 0.0, %v4063
      %v4065 = vpop.f32.mrf.mxu0
      %v4066 = vpop.f32.mrf.mxu0
      %v4067 = vadd.f32 0.0, %v4066
      %v4068 = vpop.f32.mrf.mxu0
      %4069 = vmatprep.mubr.bf16.mxu0 0
      %4070 = vmatmul.mubr.bf16.gmra.mxu0 %v3863
      %v4071 = vpop.f32.mrf.mxu0
      %v4072 = vadd.f32 0.0, %v4071
      %v4073 = vpop.f32.mrf.mxu0
      %v4074 = vpop.f32.mrf.mxu0
      %v4075 = vadd.f32 0.0, %v4074
      %v4076 = vpop.f32.mrf.mxu0
      %4077 = vmatprep.mubr.bf16.mxu0 0
      %4078 = vmatmul.mubr.bf16.gmra.mxu0 %v3866
      %v4079 = vpop.f32.mrf.mxu0
      %v4080 = vadd.f32 0.0, %v4079
      %v4081 = vpop.f32.mrf.mxu0
      %v4082 = vpop.f32.mrf.mxu0
      %v4083 = vadd.f32 0.0, %v4082
      %v4084 = vpop.f32.mrf.mxu0
      %4085 = vmatprep.mubr.bf16.mxu0 0
      %4086 = vmatmul.mubr.bf16.gmra.mxu0 %v3869
      %v4087 = vpop.f32.mrf.mxu0
      %v4088 = vadd.f32 0.0, %v4087
      %v4089 = vpop.f32.mrf.mxu0
      %v4090 = vpop.f32.mrf.mxu0
      %v4091 = vadd.f32 0.0, %v4090
      %v4092 = vpop.f32.mrf.mxu0
      %4093 = vmatprep.mubr.bf16.mxu0 0
      %4094 = vmatmul.mubr.bf16.gmra.mxu0 %v3872
      %v4095 = vpop.f32.mrf.mxu0
      %v4096 = vadd.f32 0.0, %v4095
      %v4097 = vpop.f32.mrf.mxu0
      %v4098 = vpop.f32.mrf.mxu0
      %v4099 = vadd.f32 0.0, %v4098
      %v4100 = vpop.f32.mrf.mxu0
      %4101 = vdwg.mxu0
      %v4102 = vadd.f32 %v3699, %v3912
      %v4103 = vadd.f32 %v3700, %v3915
      %v4104 = vadd.f32 %v3701, %v3920
      %v4105 = vadd.f32 %v3702, %v3923
      %v4106 = vadd.f32 %v3703, %v3928
      %v4107 = vadd.f32 %v3704, %v3931
      %v4108 = vadd.f32 %v3705, %v3936
      %v4109 = vadd.f32 %v3706, %v3939
      %v4110 = vadd.f32 %v3707, %v3944
      %v4111 = vadd.f32 %v3708, %v3947
      %v4112 = vadd.f32 %v3709, %v3952
      %v4113 = vadd.f32 %v3710, %v3955
      %v4114 = vadd.f32 %v3711, %v3960
      %v4115 = vadd.f32 %v3712, %v3963
      %v4116 = vadd.f32 %v3713, %v3968
      %v4117 = vadd.f32 %v3714, %v3971
      %v4118 = vadd.f32 %v3715, %v3976
      %v4119 = vadd.f32 %v3716, %v3979
      %v4120 = vadd.f32 %v3717, %v3984
      %v4121 = vadd.f32 %v3718, %v3987
      %v4122 = vadd.f32 %v3719, %v3992
      %v4123 = vadd.f32 %v3720, %v3995
      %v4124 = vadd.f32 %v3721, %v4000
      %v4125 = vadd.f32 %v3722, %v4003
      %v4126 = vadd.f32 %v3723, %v4008
      %v4127 = vadd.f32 %v3724, %v4011
      %v4128 = vadd.f32 %v3725, %v4016
      %v4129 = vadd.f32 %v3726, %v4019
      %v4130 = vadd.f32 %v3727, %v4024
      %v4131 = vadd.f32 %v3728, %v4027
      %v4132 = vadd.f32 %v3729, %v4032
      %v4133 = vadd.f32 %v3730, %v4035
      %v4134 = vadd.f32 %v3731, %v4040
      %v4135 = vadd.f32 %v3732, %v4043
      %v4136 = vadd.f32 %v3733, %v4048
      %v4137 = vadd.f32 %v3734, %v4051
      %v4138 = vadd.f32 %v3735, %v4056
      %v4139 = vadd.f32 %v3736, %v4059
      %v4140 = vadd.f32 %v3737, %v4064
      %v4141 = vadd.f32 %v3738, %v4067
      %v4142 = vadd.f32 %v3739, %v4072
      %v4143 = vadd.f32 %v3740, %v4075
      %v4144 = vadd.f32 %v3741, %v4080
      %v4145 = vadd.f32 %v3742, %v4083
      %v4146 = vadd.f32 %v3743, %v4088
      %v4147 = vadd.f32 %v3744, %v4091
      %v4148 = vadd.f32 %v3745, %v4096
      %v4149 = vadd.f32 %v3746, %v4099
      %v4150 = vld [vmem:[#allocation2 + $0x18] sm:$0xf]
      %v4151 = vld [vmem:[#allocation2 + $0x1c] sm:$0xf]
      %v4152 = vld [vmem:[#allocation2 + $0x20] sm:$0xf]
      %v4153 = vld [vmem:[#allocation2 + $0x24] sm:$0xf]
      %v4154 = vld [vmem:[#allocation2 + $0x28] sm:$0xf]
      %v4155 = vld [vmem:[#allocation2 + $0x2c] sm:$0xf]
      %v4156 = vld [vmem:[#allocation2 + $0x30] sm:$0xf]
      %v4157 = vld [vmem:[#allocation2 + $0x34] sm:$0xf]
      %v4158 = vld [vmem:[#allocation2 + $0x38] sm:$0xf]
      %v4159 = vld [vmem:[#allocation2 + $0x3c] sm:$0xf]
      %v4160 = vld [vmem:[#allocation2 + $0x40] sm:$0xf]
      %v4161 = vld [vmem:[#allocation2 + $0x44] sm:$0xf]
      %v4162 = vld [vmem:[#allocation2 + $0x48] sm:$0xf]
      %v4163 = vld [vmem:[#allocation2 + $0x4c] sm:$0xf]
      %v4164 = vld [vmem:[#allocation2 + $0x50] sm:$0xf]
      %v4165 = vld [vmem:[#allocation2 + $0x54] sm:$0xf]
      %v4166 = vld [vmem:[#allocation2 + $0x58] sm:$0xf]
      %v4167 = vld [vmem:[#allocation2 + $0x5c] sm:$0xf]
      %v4168 = vld [vmem:[#allocation2 + $0x60] sm:$0xf]
      %v4169 = vld [vmem:[#allocation2 + $0x64] sm:$0xf]
      %v4170 = vld [vmem:[#allocation2 + $0x68] sm:$0xf]
      %v4171 = vld [vmem:[#allocation2 + $0x6c] sm:$0xf]
      %v4172 = vld [vmem:[#allocation2 + $0x70] sm:$0xf]
      %v4173 = vld [vmem:[#allocation2 + $0x74] sm:$0xf]
      %v4174 = vld [vmem:[#allocation2 + $0x78] sm:$0xf]
      %v4175 = vld [vmem:[#allocation2 + $0x7c] sm:$0xf]
      %v4176 = vld [vmem:[#allocation2 + $0x80] sm:$0xf]
      %v4177 = vld [vmem:[#allocation2 + $0x84] sm:$0xf]
      %v4178 = vld [vmem:[#allocation2 + $0x88] sm:$0xf]
      %v4179 = vld [vmem:[#allocation2 + $0x8c] sm:$0xf]
      %v4180 = vld [vmem:[#allocation2 + $0x90] sm:$0xf]
      %v4181 = vld [vmem:[#allocation2 + $0x94] sm:$0xf]
      %v4182 = vld [vmem:[#allocation2 + $0x98] sm:$0xf]
      %v4183 = vld [vmem:[#allocation2 + $0x9c] sm:$0xf]
      %v4184 = vld [vmem:[#allocation2 + $0xa0] sm:$0xf]
      %v4185 = vld [vmem:[#allocation2 + $0xa4] sm:$0xf]
      %v4186 = vld [vmem:[#allocation2 + $0xa8] sm:$0xf]
      %v4187 = vld [vmem:[#allocation2 + $0xac] sm:$0xf]
      %v4188 = vld [vmem:[#allocation2 + $0xb0] sm:$0xf]
      %v4189 = vld [vmem:[#allocation2 + $0xb4] sm:$0xf]
      %v4190 = vld [vmem:[#allocation2 + $0xb8] sm:$0xf]
      %v4191 = vld [vmem:[#allocation2 + $0xbc] sm:$0xf]
      %v4192 = vld [vmem:[#allocation2 + $0xc0] sm:$0xf]
      %v4193 = vld [vmem:[#allocation2 + $0xc4] sm:$0xf]
      %v4194 = vld [vmem:[#allocation2 + $0xc8] sm:$0xf]
      %v4195 = vld [vmem:[#allocation2 + $0xcc] sm:$0xf]
      %v4196 = vld [vmem:[#allocation2 + $0xd0] sm:$0xf]
      %v4197 = vld [vmem:[#allocation2 + $0xd4] sm:$0xf]
      %s4198 = scalar_lea.vmem %s3, 12
      %v4199 = vld [vmem:[%s4198] sm:$0x3]
      %v4248 = vunpack.c.l.b16 %v4150
      %v4249 = vunpack.c.l.b16 %v4151
      %v4250 = vunpack.c.l.b16 %v4152
      %v4251 = vunpack.c.l.b16 %v4153
      %v4252 = vunpack.c.l.b16 %v4154
      %v4253 = vunpack.c.l.b16 %v4155
      %v4254 = vunpack.c.l.b16 %v4156
      %v4255 = vunpack.c.l.b16 %v4157
      %v4256 = vunpack.c.l.b16 %v4158
      %v4257 = vunpack.c.l.b16 %v4159
      %v4258 = vunpack.c.l.b16 %v4160
      %v4259 = vunpack.c.l.b16 %v4161
      %v4260 = vunpack.c.l.b16 %v4162
      %v4261 = vunpack.c.l.b16 %v4163
      %v4262 = vunpack.c.l.b16 %v4164
      %v4263 = vunpack.c.l.b16 %v4165
      %v4264 = vunpack.c.l.b16 %v4166
      %v4265 = vunpack.c.l.b16 %v4167
      %v4266 = vunpack.c.l.b16 %v4168
      %v4267 = vunpack.c.l.b16 %v4169
      %v4268 = vunpack.c.l.b16 %v4170
      %v4269 = vunpack.c.l.b16 %v4171
      %v4270 = vunpack.c.l.b16 %v4172
      %v4271 = vunpack.c.l.b16 %v4173
      %v4272 = vunpack.c.l.b16 %v4174
      %v4273 = vunpack.c.l.b16 %v4175
      %v4274 = vunpack.c.l.b16 %v4176
      %v4275 = vunpack.c.l.b16 %v4177
      %v4276 = vunpack.c.l.b16 %v4178
      %v4277 = vunpack.c.l.b16 %v4179
      %v4278 = vunpack.c.l.b16 %v4180
      %v4279 = vunpack.c.l.b16 %v4181
      %v4280 = vunpack.c.l.b16 %v4182
      %v4281 = vunpack.c.l.b16 %v4183
      %v4282 = vunpack.c.l.b16 %v4184
      %v4283 = vunpack.c.l.b16 %v4185
      %v4284 = vunpack.c.l.b16 %v4186
      %v4285 = vunpack.c.l.b16 %v4187
      %v4286 = vunpack.c.l.b16 %v4188
      %v4287 = vunpack.c.l.b16 %v4189
      %v4288 = vunpack.c.l.b16 %v4190
      %v4289 = vunpack.c.l.b16 %v4191
      %v4290 = vunpack.c.l.b16 %v4192
      %v4291 = vunpack.c.l.b16 %v4193
      %v4292 = vunpack.c.l.b16 %v4194
      %v4293 = vunpack.c.l.b16 %v4195
      %v4294 = vunpack.c.l.b16 %v4196
      %v4295 = vunpack.c.l.b16 %v4197
      %v4296 = vpack.c.b16 %v4249, %v4248
      %v4297 = vpack.c.b16 %v4251, %v4250
      %v4298 = vpack.c.b16 %v4253, %v4252
      %v4299 = vpack.c.b16 %v4255, %v4254
      %v4300 = vpack.c.b16 %v4257, %v4256
      %v4301 = vpack.c.b16 %v4259, %v4258
      %v4302 = vpack.c.b16 %v4261, %v4260
      %v4303 = vpack.c.b16 %v4263, %v4262
      %v4304 = vpack.c.b16 %v4265, %v4264
      %v4305 = vpack.c.b16 %v4267, %v4266
      %v4306 = vpack.c.b16 %v4269, %v4268
      %v4307 = vpack.c.b16 %v4271, %v4270
      %v4308 = vpack.c.b16 %v4273, %v4272
      %v4309 = vpack.c.b16 %v4275, %v4274
      %v4310 = vpack.c.b16 %v4277, %v4276
      %v4311 = vpack.c.b16 %v4279, %v4278
      %v4312 = vpack.c.b16 %v4281, %v4280
      %v4313 = vpack.c.b16 %v4283, %v4282
      %v4314 = vpack.c.b16 %v4285, %v4284
      %v4315 = vpack.c.b16 %v4287, %v4286
      %v4316 = vpack.c.b16 %v4289, %v4288
      %v4317 = vpack.c.b16 %v4291, %v4290
      %v4318 = vpack.c.b16 %v4293, %v4292
      %v4319 = vpack.c.b16 %v4295, %v4294
      %v4321 = vsel %vm1526, %v4296, 0
      %v4324 = vsel %vm1526, %v4297, 0
      %v4327 = vsel %vm1526, %v4298, 0
      %v4330 = vsel %vm1526, %v4299, 0
      %v4333 = vsel %vm1526, %v4300, 0
      %v4336 = vsel %vm1526, %v4301, 0
      %v4339 = vsel %vm1526, %v4302, 0
      %v4342 = vsel %vm1526, %v4303, 0
      %v4345 = vsel %vm1526, %v4304, 0
      %v4348 = vsel %vm1526, %v4305, 0
      %v4351 = vsel %vm1526, %v4306, 0
      %v4354 = vsel %vm1526, %v4307, 0
      %v4357 = vsel %vm1526, %v4308, 0
      %v4360 = vsel %vm1526, %v4309, 0
      %v4363 = vsel %vm1526, %v4310, 0
      %v4366 = vsel %vm1526, %v4311, 0
      %v4369 = vsel %vm1526, %v4312, 0
      %v4372 = vsel %vm1526, %v4313, 0
      %v4375 = vsel %vm1526, %v4314, 0
      %v4378 = vsel %vm1526, %v4315, 0
      %v4381 = vsel %vm1526, %v4316, 0
      %v4384 = vsel %vm1526, %v4317, 0
      %v4387 = vsel %vm1526, %v4318, 0
      %v4390 = vsel %vm1526, %v4319, 0
      %v4393 = vand.u32 %v4199, %v1602
      %4395 = vmatprep.subr.bf16.mxu0 0
      %4396 = vmatpush1.bf16.msra.mxu0 0
      %4397 = vmatprep.subr.bf16.mxu0 0
      %4398 = vmatpush1.bf16.msra.mxu0 0
      %4399 = vmatprep.subr.bf16.mxu0 0
      %4400 = vmatpush1.bf16.msra.mxu0 0
      %4401 = vmatprep.subr.bf16.mxu0 0
      %4402 = vmatpush1.bf16.msra.mxu0 0
      %4403 = vmatprep.subr.bf16.mxu0 0
      %4404 = vmatpush1.bf16.msra.mxu0 0
      %4405 = vmatprep.subr.bf16.mxu0 0
      %4406 = vmatpush1.bf16.msra.mxu0 0
      %4407 = vmatprep.subr.bf16.mxu0 0
      %4408 = vmatpush1.bf16.msra.mxu0 0
      %4409 = vmatprep.subr.bf16.mxu0 0
      %4410 = vmatpush1.bf16.msra.mxu0 %v4393
      %4411 = vmatprep.subr.bf16.mxu0 0
      %4412 = vmatpush2.bf16.msra.mxu0 0
      %4413 = vmatprep.subr.bf16.mxu0 0
      %4414 = vmatpush2.bf16.msra.mxu0 0
      %4415 = vmatprep.subr.bf16.mxu0 0
      %4416 = vmatpush2.bf16.msra.mxu0 0
      %4417 = vmatprep.subr.bf16.mxu0 0
      %4418 = vmatpush2.bf16.msra.mxu0 0
      %4419 = vmatprep.subr.bf16.mxu0 0
      %4420 = vmatpush2.bf16.msra.mxu0 0
      %4421 = vmatprep.subr.bf16.mxu0 0
      %4422 = vmatpush2.bf16.msra.mxu0 0
      %4423 = vmatprep.subr.bf16.mxu0 0
      %4424 = vmatpush2.bf16.msra.mxu0 0
      %4425 = vmatprep.subr.bf16.mxu0 0
      %4426 = vmatpush2.bf16.msra.mxu0 0
      %4427 = vmatprep.mubr.bf16.mxu0 0
      %4428 = vmatmul.mubr.bf16.gmra.mxu0 %v4321
      %v4429 = vpop.f32.mrf.mxu0
      %v4430 = vadd.f32 0.0, %v4429
      %v4431 = vpop.f32.mrf.mxu0
      %v4432 = vpop.f32.mrf.mxu0
      %v4433 = vadd.f32 0.0, %v4432
      %v4434 = vpop.f32.mrf.mxu0
      %4435 = vmatprep.mubr.bf16.mxu0 0
      %4436 = vmatmul.mubr.bf16.gmra.mxu0 %v4324
      %v4437 = vpop.f32.mrf.mxu0
      %v4438 = vadd.f32 0.0, %v4437
      %v4439 = vpop.f32.mrf.mxu0
      %v4440 = vpop.f32.mrf.mxu0
      %v4441 = vadd.f32 0.0, %v4440
      %v4442 = vpop.f32.mrf.mxu0
      %4443 = vmatprep.mubr.bf16.mxu0 0
      %4444 = vmatmul.mubr.bf16.gmra.mxu0 %v4327
      %v4445 = vpop.f32.mrf.mxu0
      %v4446 = vadd.f32 0.0, %v4445
      %v4447 = vpop.f32.mrf.mxu0
      %v4448 = vpop.f32.mrf.mxu0
      %v4449 = vadd.f32 0.0, %v4448
      %v4450 = vpop.f32.mrf.mxu0
      %4451 = vmatprep.mubr.bf16.mxu0 0
      %4452 = vmatmul.mubr.bf16.gmra.mxu0 %v4330
      %v4453 = vpop.f32.mrf.mxu0
      %v4454 = vadd.f32 0.0, %v4453
      %v4455 = vpop.f32.mrf.mxu0
      %v4456 = vpop.f32.mrf.mxu0
      %v4457 = vadd.f32 0.0, %v4456
      %v4458 = vpop.f32.mrf.mxu0
      %4459 = vmatprep.mubr.bf16.mxu0 0
      %4460 = vmatmul.mubr.bf16.gmra.mxu0 %v4333
      %v4461 = vpop.f32.mrf.mxu0
      %v4462 = vadd.f32 0.0, %v4461
      %v4463 = vpop.f32.mrf.mxu0
      %v4464 = vpop.f32.mrf.mxu0
      %v4465 = vadd.f32 0.0, %v4464
      %v4466 = vpop.f32.mrf.mxu0
      %4467 = vmatprep.mubr.bf16.mxu0 0
      %4468 = vmatmul.mubr.bf16.gmra.mxu0 %v4336
      %v4469 = vpop.f32.mrf.mxu0
      %v4470 = vadd.f32 0.0, %v4469
      %v4471 = vpop.f32.mrf.mxu0
      %v4472 = vpop.f32.mrf.mxu0
      %v4473 = vadd.f32 0.0, %v4472
      %v4474 = vpop.f32.mrf.mxu0
      %4475 = vmatprep.mubr.bf16.mxu0 0
      %4476 = vmatmul.mubr.bf16.gmra.mxu0 %v4339
      %v4477 = vpop.f32.mrf.mxu0
      %v4478 = vadd.f32 0.0, %v4477
      %v4479 = vpop.f32.mrf.mxu0
      %v4480 = vpop.f32.mrf.mxu0
      %v4481 = vadd.f32 0.0, %v4480
      %v4482 = vpop.f32.mrf.mxu0
      %4483 = vmatprep.mubr.bf16.mxu0 0
      %4484 = vmatmul.mubr.bf16.gmra.mxu0 %v4342
      %v4485 = vpop.f32.mrf.mxu0
      %v4486 = vadd.f32 0.0, %v4485
      %v4487 = vpop.f32.mrf.mxu0
      %v4488 = vpop.f32.mrf.mxu0
      %v4489 = vadd.f32 0.0, %v4488
      %v4490 = vpop.f32.mrf.mxu0
      %4491 = vmatprep.mubr.bf16.mxu0 0
      %4492 = vmatmul.mubr.bf16.gmra.mxu0 %v4345
      %v4493 = vpop.f32.mrf.mxu0
      %v4494 = vadd.f32 0.0, %v4493
      %v4495 = vpop.f32.mrf.mxu0
      %v4496 = vpop.f32.mrf.mxu0
      %v4497 = vadd.f32 0.0, %v4496
      %v4498 = vpop.f32.mrf.mxu0
      %4499 = vmatprep.mubr.bf16.mxu0 0
      %4500 = vmatmul.mubr.bf16.gmra.mxu0 %v4348
      %v4501 = vpop.f32.mrf.mxu0
      %v4502 = vadd.f32 0.0, %v4501
      %v4503 = vpop.f32.mrf.mxu0
      %v4504 = vpop.f32.mrf.mxu0
      %v4505 = vadd.f32 0.0, %v4504
      %v4506 = vpop.f32.mrf.mxu0
      %4507 = vmatprep.mubr.bf16.mxu0 0
      %4508 = vmatmul.mubr.bf16.gmra.mxu0 %v4351
      %v4509 = vpop.f32.mrf.mxu0
      %v4510 = vadd.f32 0.0, %v4509
      %v4511 = vpop.f32.mrf.mxu0
      %v4512 = vpop.f32.mrf.mxu0
      %v4513 = vadd.f32 0.0, %v4512
      %v4514 = vpop.f32.mrf.mxu0
      %4515 = vmatprep.mubr.bf16.mxu0 0
      %4516 = vmatmul.mubr.bf16.gmra.mxu0 %v4354
      %v4517 = vpop.f32.mrf.mxu0
      %v4518 = vadd.f32 0.0, %v4517
      %v4519 = vpop.f32.mrf.mxu0
      %v4520 = vpop.f32.mrf.mxu0
      %v4521 = vadd.f32 0.0, %v4520
      %v4522 = vpop.f32.mrf.mxu0
      %4523 = vmatprep.mubr.bf16.mxu0 0
      %4524 = vmatmul.mubr.bf16.gmra.mxu0 %v4357
      %v4525 = vpop.f32.mrf.mxu0
      %v4526 = vadd.f32 0.0, %v4525
      %v4527 = vpop.f32.mrf.mxu0
      %v4528 = vpop.f32.mrf.mxu0
      %v4529 = vadd.f32 0.0, %v4528
      %v4530 = vpop.f32.mrf.mxu0
      %4531 = vmatprep.mubr.bf16.mxu0 0
      %4532 = vmatmul.mubr.bf16.gmra.mxu0 %v4360
      %v4533 = vpop.f32.mrf.mxu0
      %v4534 = vadd.f32 0.0, %v4533
      %v4535 = vpop.f32.mrf.mxu0
      %v4536 = vpop.f32.mrf.mxu0
      %v4537 = vadd.f32 0.0, %v4536
      %v4538 = vpop.f32.mrf.mxu0
      %4539 = vmatprep.mubr.bf16.mxu0 0
      %4540 = vmatmul.mubr.bf16.gmra.mxu0 %v4363
      %v4541 = vpop.f32.mrf.mxu0
      %v4542 = vadd.f32 0.0, %v4541
      %v4543 = vpop.f32.mrf.mxu0
      %v4544 = vpop.f32.mrf.mxu0
      %v4545 = vadd.f32 0.0, %v4544
      %v4546 = vpop.f32.mrf.mxu0
      %4547 = vmatprep.mubr.bf16.mxu0 0
      %4548 = vmatmul.mubr.bf16.gmra.mxu0 %v4366
      %v4549 = vpop.f32.mrf.mxu0
      %v4550 = vadd.f32 0.0, %v4549
      %v4551 = vpop.f32.mrf.mxu0
      %v4552 = vpop.f32.mrf.mxu0
      %v4553 = vadd.f32 0.0, %v4552
      %v4554 = vpop.f32.mrf.mxu0
      %4555 = vmatprep.mubr.bf16.mxu0 0
      %4556 = vmatmul.mubr.bf16.gmra.mxu0 %v4369
      %v4557 = vpop.f32.mrf.mxu0
      %v4558 = vadd.f32 0.0, %v4557
      %v4559 = vpop.f32.mrf.mxu0
      %v4560 = vpop.f32.mrf.mxu0
      %v4561 = vadd.f32 0.0, %v4560
      %v4562 = vpop.f32.mrf.mxu0
      %4563 = vmatprep.mubr.bf16.mxu0 0
      %4564 = vmatmul.mubr.bf16.gmra.mxu0 %v4372
      %v4565 = vpop.f32.mrf.mxu0
      %v4566 = vadd.f32 0.0, %v4565
      %v4567 = vpop.f32.mrf.mxu0
      %v4568 = vpop.f32.mrf.mxu0
      %v4569 = vadd.f32 0.0, %v4568
      %v4570 = vpop.f32.mrf.mxu0
      %4571 = vmatprep.mubr.bf16.mxu0 0
      %4572 = vmatmul.mubr.bf16.gmra.mxu0 %v4375
      %v4573 = vpop.f32.mrf.mxu0
      %v4574 = vadd.f32 0.0, %v4573
      %v4575 = vpop.f32.mrf.mxu0
      %v4576 = vpop.f32.mrf.mxu0
      %v4577 = vadd.f32 0.0, %v4576
      %v4578 = vpop.f32.mrf.mxu0
      %4579 = vmatprep.mubr.bf16.mxu0 0
      %4580 = vmatmul.mubr.bf16.gmra.mxu0 %v4378
      %v4581 = vpop.f32.mrf.mxu0
      %v4582 = vadd.f32 0.0, %v4581
      %v4583 = vpop.f32.mrf.mxu0
      %v4584 = vpop.f32.mrf.mxu0
      %v4585 = vadd.f32 0.0, %v4584
      %v4586 = vpop.f32.mrf.mxu0
      %4587 = vmatprep.mubr.bf16.mxu0 0
      %4588 = vmatmul.mubr.bf16.gmra.mxu0 %v4381
      %v4589 = vpop.f32.mrf.mxu0
      %v4590 = vadd.f32 0.0, %v4589
      %v4591 = vpop.f32.mrf.mxu0
      %v4592 = vpop.f32.mrf.mxu0
      %v4593 = vadd.f32 0.0, %v4592
      %v4594 = vpop.f32.mrf.mxu0
      %4595 = vmatprep.mubr.bf16.mxu0 0
      %4596 = vmatmul.mubr.bf16.gmra.mxu0 %v4384
      %v4597 = vpop.f32.mrf.mxu0
      %v4598 = vadd.f32 0.0, %v4597
      %v4599 = vpop.f32.mrf.mxu0
      %v4600 = vpop.f32.mrf.mxu0
      %v4601 = vadd.f32 0.0, %v4600
      %v4602 = vpop.f32.mrf.mxu0
      %4603 = vmatprep.mubr.bf16.mxu0 0
      %4604 = vmatmul.mubr.bf16.gmra.mxu0 %v4387
      %v4605 = vpop.f32.mrf.mxu0
      %v4606 = vadd.f32 0.0, %v4605
      %v4607 = vpop.f32.mrf.mxu0
      %v4608 = vpop.f32.mrf.mxu0
      %v4609 = vadd.f32 0.0, %v4608
      %v4610 = vpop.f32.mrf.mxu0
      %4611 = vmatprep.mubr.bf16.mxu0 0
      %4612 = vmatmul.mubr.bf16.gmra.mxu0 %v4390
      %v4613 = vpop.f32.mrf.mxu0
      %v4614 = vadd.f32 0.0, %v4613
      %v4615 = vpop.f32.mrf.mxu0
      %v4616 = vpop.f32.mrf.mxu0
      %v4617 = vadd.f32 0.0, %v4616
      %v4618 = vpop.f32.mrf.mxu0
      %4619 = vdwg.mxu0
      %v4620 = vadd.f32 %v4102, %v4430
      %v4621 = vadd.f32 %v4103, %v4433
      %v4622 = vadd.f32 %v4104, %v4438
      %v4623 = vadd.f32 %v4105, %v4441
      %v4624 = vadd.f32 %v4106, %v4446
      %v4625 = vadd.f32 %v4107, %v4449
      %v4626 = vadd.f32 %v4108, %v4454
      %v4627 = vadd.f32 %v4109, %v4457
      %v4628 = vadd.f32 %v4110, %v4462
      %v4629 = vadd.f32 %v4111, %v4465
      %v4630 = vadd.f32 %v4112, %v4470
      %v4631 = vadd.f32 %v4113, %v4473
      %v4632 = vadd.f32 %v4114, %v4478
      %v4633 = vadd.f32 %v4115, %v4481
      %v4634 = vadd.f32 %v4116, %v4486
      %v4635 = vadd.f32 %v4117, %v4489
      %v4636 = vadd.f32 %v4118, %v4494
      %v4637 = vadd.f32 %v4119, %v4497
      %v4638 = vadd.f32 %v4120, %v4502
      %v4639 = vadd.f32 %v4121, %v4505
      %v4640 = vadd.f32 %v4122, %v4510
      %v4641 = vadd.f32 %v4123, %v4513
      %v4642 = vadd.f32 %v4124, %v4518
      %v4643 = vadd.f32 %v4125, %v4521
      %v4644 = vadd.f32 %v4126, %v4526
      %v4645 = vadd.f32 %v4127, %v4529
      %v4646 = vadd.f32 %v4128, %v4534
      %v4647 = vadd.f32 %v4129, %v4537
      %v4648 = vadd.f32 %v4130, %v4542
      %v4649 = vadd.f32 %v4131, %v4545
      %v4650 = vadd.f32 %v4132, %v4550
      %v4651 = vadd.f32 %v4133, %v4553
      %v4652 = vadd.f32 %v4134, %v4558
      %v4653 = vadd.f32 %v4135, %v4561
      %v4654 = vadd.f32 %v4136, %v4566
      %v4655 = vadd.f32 %v4137, %v4569
      %v4656 = vadd.f32 %v4138, %v4574
      %v4657 = vadd.f32 %v4139, %v4577
      %v4658 = vadd.f32 %v4140, %v4582
      %v4659 = vadd.f32 %v4141, %v4585
      %v4660 = vadd.f32 %v4142, %v4590
      %v4661 = vadd.f32 %v4143, %v4593
      %v4662 = vadd.f32 %v4144, %v4598
      %v4663 = vadd.f32 %v4145, %v4601
      %v4664 = vadd.f32 %v4146, %v4606
      %v4665 = vadd.f32 %v4147, %v4609
      %v4666 = vadd.f32 %v4148, %v4614
      %v4667 = vadd.f32 %v4149, %v4617
      %v4668 = vld [vmem:[#allocation2 + $0x18] sm:$0xf]
      %v4669 = vld [vmem:[#allocation2 + $0x1c] sm:$0xf]
      %v4670 = vld [vmem:[#allocation2 + $0x20] sm:$0xf]
      %v4671 = vld [vmem:[#allocation2 + $0x24] sm:$0xf]
      %v4672 = vld [vmem:[#allocation2 + $0x28] sm:$0xf]
      %v4673 = vld [vmem:[#allocation2 + $0x2c] sm:$0xf]
      %v4674 = vld [vmem:[#allocation2 + $0x30] sm:$0xf]
      %v4675 = vld [vmem:[#allocation2 + $0x34] sm:$0xf]
      %v4676 = vld [vmem:[#allocation2 + $0x38] sm:$0xf]
      %v4677 = vld [vmem:[#allocation2 + $0x3c] sm:$0xf]
      %v4678 = vld [vmem:[#allocation2 + $0x40] sm:$0xf]
      %v4679 = vld [vmem:[#allocation2 + $0x44] sm:$0xf]
      %v4680 = vld [vmem:[#allocation2 + $0x48] sm:$0xf]
      %v4681 = vld [vmem:[#allocation2 + $0x4c] sm:$0xf]
      %v4682 = vld [vmem:[#allocation2 + $0x50] sm:$0xf]
      %v4683 = vld [vmem:[#allocation2 + $0x54] sm:$0xf]
      %v4684 = vld [vmem:[#allocation2 + $0x58] sm:$0xf]
      %v4685 = vld [vmem:[#allocation2 + $0x5c] sm:$0xf]
      %v4686 = vld [vmem:[#allocation2 + $0x60] sm:$0xf]
      %v4687 = vld [vmem:[#allocation2 + $0x64] sm:$0xf]
      %v4688 = vld [vmem:[#allocation2 + $0x68] sm:$0xf]
      %v4689 = vld [vmem:[#allocation2 + $0x6c] sm:$0xf]
      %v4690 = vld [vmem:[#allocation2 + $0x70] sm:$0xf]
      %v4691 = vld [vmem:[#allocation2 + $0x74] sm:$0xf]
      %v4692 = vld [vmem:[#allocation2 + $0x78] sm:$0xf]
      %v4693 = vld [vmem:[#allocation2 + $0x7c] sm:$0xf]
      %v4694 = vld [vmem:[#allocation2 + $0x80] sm:$0xf]
      %v4695 = vld [vmem:[#allocation2 + $0x84] sm:$0xf]
      %v4696 = vld [vmem:[#allocation2 + $0x88] sm:$0xf]
      %v4697 = vld [vmem:[#allocation2 + $0x8c] sm:$0xf]
      %v4698 = vld [vmem:[#allocation2 + $0x90] sm:$0xf]
      %v4699 = vld [vmem:[#allocation2 + $0x94] sm:$0xf]
      %v4700 = vld [vmem:[#allocation2 + $0x98] sm:$0xf]
      %v4701 = vld [vmem:[#allocation2 + $0x9c] sm:$0xf]
      %v4702 = vld [vmem:[#allocation2 + $0xa0] sm:$0xf]
      %v4703 = vld [vmem:[#allocation2 + $0xa4] sm:$0xf]
      %v4704 = vld [vmem:[#allocation2 + $0xa8] sm:$0xf]
      %v4705 = vld [vmem:[#allocation2 + $0xac] sm:$0xf]
      %v4706 = vld [vmem:[#allocation2 + $0xb0] sm:$0xf]
      %v4707 = vld [vmem:[#allocation2 + $0xb4] sm:$0xf]
      %v4708 = vld [vmem:[#allocation2 + $0xb8] sm:$0xf]
      %v4709 = vld [vmem:[#allocation2 + $0xbc] sm:$0xf]
      %v4710 = vld [vmem:[#allocation2 + $0xc0] sm:$0xf]
      %v4711 = vld [vmem:[#allocation2 + $0xc4] sm:$0xf]
      %v4712 = vld [vmem:[#allocation2 + $0xc8] sm:$0xf]
      %v4713 = vld [vmem:[#allocation2 + $0xcc] sm:$0xf]
      %v4714 = vld [vmem:[#allocation2 + $0xd0] sm:$0xf]
      %v4715 = vld [vmem:[#allocation2 + $0xd4] sm:$0xf]
      %v4716 = vld [vmem:[#allocation2 + $0xd8] sm:$0x1]
      %s4717 = scalar_lea.vmem %s3, 14
      %v4718 = vld [vmem:[%s4717] sm:$0x3]
      %v4768 = vunpack.c.l.b16 %v4668
      %v4769 = vunpack.c.l.b16 %v4669
      %v4770 = vunpack.c.l.b16 %v4670
      %v4771 = vunpack.c.l.b16 %v4671
      %v4772 = vunpack.c.l.b16 %v4672
      %v4773 = vunpack.c.l.b16 %v4673
      %v4774 = vunpack.c.l.b16 %v4674
      %v4775 = vunpack.c.l.b16 %v4675
      %v4776 = vunpack.c.l.b16 %v4676
      %v4777 = vunpack.c.l.b16 %v4677
      %v4778 = vunpack.c.l.b16 %v4678
      %v4779 = vunpack.c.l.b16 %v4679
      %v4780 = vunpack.c.l.b16 %v4680
      %v4781 = vunpack.c.l.b16 %v4681
      %v4782 = vunpack.c.l.b16 %v4682
      %v4783 = vunpack.c.l.b16 %v4683
      %v4784 = vunpack.c.l.b16 %v4684
      %v4785 = vunpack.c.l.b16 %v4685
      %v4786 = vunpack.c.l.b16 %v4686
      %v4787 = vunpack.c.l.b16 %v4687
      %v4788 = vunpack.c.l.b16 %v4688
      %v4789 = vunpack.c.l.b16 %v4689
      %v4790 = vunpack.c.l.b16 %v4690
      %v4791 = vunpack.c.l.b16 %v4691
      %v4792 = vunpack.c.l.b16 %v4692
      %v4793 = vunpack.c.l.b16 %v4693
      %v4794 = vunpack.c.l.b16 %v4694
      %v4795 = vunpack.c.l.b16 %v4695
      %v4796 = vunpack.c.l.b16 %v4696
      %v4797 = vunpack.c.l.b16 %v4697
      %v4798 = vunpack.c.l.b16 %v4698
      %v4799 = vunpack.c.l.b16 %v4699
      %v4800 = vunpack.c.l.b16 %v4700
      %v4801 = vunpack.c.l.b16 %v4701
      %v4802 = vunpack.c.l.b16 %v4702
      %v4803 = vunpack.c.l.b16 %v4703
      %v4804 = vunpack.c.l.b16 %v4704
      %v4805 = vunpack.c.l.b16 %v4705
      %v4806 = vunpack.c.l.b16 %v4706
      %v4807 = vunpack.c.l.b16 %v4707
      %v4808 = vunpack.c.l.b16 %v4708
      %v4809 = vunpack.c.l.b16 %v4709
      %v4810 = vunpack.c.l.b16 %v4710
      %v4811 = vunpack.c.l.b16 %v4711
      %v4812 = vunpack.c.l.b16 %v4712
      %v4813 = vunpack.c.l.b16 %v4713
      %v4814 = vunpack.c.l.b16 %v4714
      %v4815 = vunpack.c.l.b16 %v4715
      %v4816 = vunpack.c.l.b16 %v4716
      %v4817 = vpack.c.b16 %v4769, %v4768
      %v4818 = vpack.c.b16 %v4771, %v4770
      %v4819 = vpack.c.b16 %v4773, %v4772
      %v4820 = vpack.c.b16 %v4775, %v4774
      %v4821 = vpack.c.b16 %v4777, %v4776
      %v4822 = vpack.c.b16 %v4779, %v4778
      %v4823 = vpack.c.b16 %v4781, %v4780
      %v4824 = vpack.c.b16 %v4783, %v4782
      %v4825 = vpack.c.b16 %v4785, %v4784
      %v4826 = vpack.c.b16 %v4787, %v4786
      %v4827 = vpack.c.b16 %v4789, %v4788
      %v4828 = vpack.c.b16 %v4791, %v4790
      %v4829 = vpack.c.b16 %v4793, %v4792
      %v4830 = vpack.c.b16 %v4795, %v4794
      %v4831 = vpack.c.b16 %v4797, %v4796
      %v4832 = vpack.c.b16 %v4799, %v4798
      %v4833 = vpack.c.b16 %v4801, %v4800
      %v4834 = vpack.c.b16 %v4803, %v4802
      %v4835 = vpack.c.b16 %v4805, %v4804
      %v4836 = vpack.c.b16 %v4807, %v4806
      %v4837 = vpack.c.b16 %v4809, %v4808
      %v4838 = vpack.c.b16 %v4811, %v4810
      %v4839 = vpack.c.b16 %v4813, %v4812
      %v4840 = vpack.c.b16 %v4815, %v4814
      %v4841 = vpack.c.b16 %v4816, %v4816
      %v4843 = vshrl.u32 %v4817, 16
      %v4845 = vshll.u32 %v4817, 16
      %v4847 = vrot.slane %v4845, 1
      %v4848 = vor.u32 %v4843, %v4847
      %v4850 = vshll.u32 %v4818, 16
      %v4852 = vrot.slane %v4850, 1
      %v4853 = vsel %vm1329, %v4848, %v4852
      %v4854 = vshrl.u32 %v4818, 16
      %v4856 = vor.u32 %v4854, %v4852
      %v4858 = vshll.u32 %v4819, 16
      %v4860 = vrot.slane %v4858, 1
      %v4861 = vsel %vm1329, %v4856, %v4860
      %v4862 = vshrl.u32 %v4819, 16
      %v4864 = vor.u32 %v4862, %v4860
      %v4866 = vshll.u32 %v4820, 16
      %v4868 = vrot.slane %v4866, 1
      %v4869 = vsel %vm1329, %v4864, %v4868
      %v4870 = vshrl.u32 %v4820, 16
      %v4872 = vor.u32 %v4870, %v4868
      %v4874 = vshll.u32 %v4821, 16
      %v4876 = vrot.slane %v4874, 1
      %v4877 = vsel %vm1329, %v4872, %v4876
      %v4878 = vshrl.u32 %v4821, 16
      %v4880 = vor.u32 %v4878, %v4876
      %v4882 = vshll.u32 %v4822, 16
      %v4884 = vrot.slane %v4882, 1
      %v4885 = vsel %vm1329, %v4880, %v4884
      %v4886 = vshrl.u32 %v4822, 16
      %v4888 = vor.u32 %v4886, %v4884
      %v4890 = vshll.u32 %v4823, 16
      %v4892 = vrot.slane %v4890, 1
      %v4893 = vsel %vm1329, %v4888, %v4892
      %v4894 = vshrl.u32 %v4823, 16
      %v4896 = vor.u32 %v4894, %v4892
      %v4898 = vshll.u32 %v4824, 16
      %v4900 = vrot.slane %v4898, 1
      %v4901 = vsel %vm1329, %v4896, %v4900
      %v4902 = vshrl.u32 %v4824, 16
      %v4904 = vor.u32 %v4902, %v4900
      %v4906 = vshll.u32 %v4825, 16
      %v4908 = vrot.slane %v4906, 1
      %v4909 = vsel %vm1329, %v4904, %v4908
      %v4910 = vshrl.u32 %v4825, 16
      %v4912 = vor.u32 %v4910, %v4908
      %v4914 = vshll.u32 %v4826, 16
      %v4916 = vrot.slane %v4914, 1
      %v4917 = vsel %vm1329, %v4912, %v4916
      %v4918 = vshrl.u32 %v4826, 16
      %v4920 = vor.u32 %v4918, %v4916
      %v4922 = vshll.u32 %v4827, 16
      %v4924 = vrot.slane %v4922, 1
      %v4925 = vsel %vm1329, %v4920, %v4924
      %v4926 = vshrl.u32 %v4827, 16
      %v4928 = vor.u32 %v4926, %v4924
      %v4930 = vshll.u32 %v4828, 16
      %v4932 = vrot.slane %v4930, 1
      %v4933 = vsel %vm1329, %v4928, %v4932
      %v4934 = vshrl.u32 %v4828, 16
      %v4936 = vor.u32 %v4934, %v4932
      %v4938 = vshll.u32 %v4829, 16
      %v4940 = vrot.slane %v4938, 1
      %v4941 = vsel %vm1329, %v4936, %v4940
      %v4942 = vshrl.u32 %v4829, 16
      %v4944 = vor.u32 %v4942, %v4940
      %v4946 = vshll.u32 %v4830, 16
      %v4948 = vrot.slane %v4946, 1
      %v4949 = vsel %vm1329, %v4944, %v4948
      %v4950 = vshrl.u32 %v4830, 16
      %v4952 = vor.u32 %v4950, %v4948
      %v4954 = vshll.u32 %v4831, 16
      %v4956 = vrot.slane %v4954, 1
      %v4957 = vsel %vm1329, %v4952, %v4956
      %v4958 = vshrl.u32 %v4831, 16
      %v4960 = vor.u32 %v4958, %v4956
      %v4962 = vshll.u32 %v4832, 16
      %v4964 = vrot.slane %v4962, 1
      %v4965 = vsel %vm1329, %v4960, %v4964
      %v4966 = vshrl.u32 %v4832, 16
      %v4968 = vor.u32 %v4966, %v4964
      %v4970 = vshll.u32 %v4833, 16
      %v4972 = vrot.slane %v4970, 1
      %v4973 = vsel %vm1329, %v4968, %v4972
      %v4974 = vshrl.u32 %v4833, 16
      %v4976 = vor.u32 %v4974, %v4972
      %v4978 = vshll.u32 %v4834, 16
      %v4980 = vrot.slane %v4978, 1
      %v4981 = vsel %vm1329, %v4976, %v4980
      %v4982 = vshrl.u32 %v4834, 16
      %v4984 = vor.u32 %v4982, %v4980
      %v4986 = vshll.u32 %v4835, 16
      %v4988 = vrot.slane %v4986, 1
      %v4989 = vsel %vm1329, %v4984, %v4988
      %v4990 = vshrl.u32 %v4835, 16
      %v4992 = vor.u32 %v4990, %v4988
      %v4994 = vshll.u32 %v4836, 16
      %v4996 = vrot.slane %v4994, 1
      %v4997 = vsel %vm1329, %v4992, %v4996
      %v4998 = vshrl.u32 %v4836, 16
      %v5000 = vor.u32 %v4998, %v4996
      %v5002 = vshll.u32 %v4837, 16
      %v5004 = vrot.slane %v5002, 1
      %v5005 = vsel %vm1329, %v5000, %v5004
      %v5006 = vshrl.u32 %v4837, 16
      %v5008 = vor.u32 %v5006, %v5004
      %v5010 = vshll.u32 %v4838, 16
      %v5012 = vrot.slane %v5010, 1
      %v5013 = vsel %vm1329, %v5008, %v5012
      %v5014 = vshrl.u32 %v4838, 16
      %v5016 = vor.u32 %v5014, %v5012
      %v5018 = vshll.u32 %v4839, 16
      %v5020 = vrot.slane %v5018, 1
      %v5021 = vsel %vm1329, %v5016, %v5020
      %v5022 = vshrl.u32 %v4839, 16
      %v5024 = vor.u32 %v5022, %v5020
      %v5026 = vshll.u32 %v4840, 16
      %v5028 = vrot.slane %v5026, 1
      %v5029 = vsel %vm1329, %v5024, %v5028
      %v5030 = vshrl.u32 %v4840, 16
      %v5032 = vor.u32 %v5030, %v5028
      %v5034 = vshll.u32 %v4841, 16
      %v5036 = vrot.slane %v5034, 1
      %v5037 = vsel %vm1329, %v5032, %v5036
      %v5039 = vsel %vm1526, %v4853, 0
      %v5042 = vsel %vm1526, %v4861, 0
      %v5045 = vsel %vm1526, %v4869, 0
      %v5048 = vsel %vm1526, %v4877, 0
      %v5051 = vsel %vm1526, %v4885, 0
      %v5054 = vsel %vm1526, %v4893, 0
      %v5057 = vsel %vm1526, %v4901, 0
      %v5060 = vsel %vm1526, %v4909, 0
      %v5063 = vsel %vm1526, %v4917, 0
      %v5066 = vsel %vm1526, %v4925, 0
      %v5069 = vsel %vm1526, %v4933, 0
      %v5072 = vsel %vm1526, %v4941, 0
      %v5075 = vsel %vm1526, %v4949, 0
      %v5078 = vsel %vm1526, %v4957, 0
      %v5081 = vsel %vm1526, %v4965, 0
      %v5084 = vsel %vm1526, %v4973, 0
      %v5087 = vsel %vm1526, %v4981, 0
      %v5090 = vsel %vm1526, %v4989, 0
      %v5093 = vsel %vm1526, %v4997, 0
      %v5096 = vsel %vm1526, %v5005, 0
      %v5099 = vsel %vm1526, %v5013, 0
      %v5102 = vsel %vm1526, %v5021, 0
      %v5105 = vsel %vm1526, %v5029, 0
      %v5108 = vsel %vm1526, %v5037, 0
      %v5111 = vand.u32 %v4718, %v1602
      %5113 = vmatprep.subr.bf16.mxu0 0
      %5114 = vmatpush1.bf16.msra.mxu0 0
      %5115 = vmatprep.subr.bf16.mxu0 0
      %5116 = vmatpush1.bf16.msra.mxu0 0
      %5117 = vmatprep.subr.bf16.mxu0 0
      %5118 = vmatpush1.bf16.msra.mxu0 0
      %5119 = vmatprep.subr.bf16.mxu0 0
      %5120 = vmatpush1.bf16.msra.mxu0 0
      %5121 = vmatprep.subr.bf16.mxu0 0
      %5122 = vmatpush1.bf16.msra.mxu0 0
      %5123 = vmatprep.subr.bf16.mxu0 0
      %5124 = vmatpush1.bf16.msra.mxu0 0
      %5125 = vmatprep.subr.bf16.mxu0 0
      %5126 = vmatpush1.bf16.msra.mxu0 0
      %5127 = vmatprep.subr.bf16.mxu0 0
      %5128 = vmatpush1.bf16.msra.mxu0 %v5111
      %5129 = vmatprep.subr.bf16.mxu0 0
      %5130 = vmatpush2.bf16.msra.mxu0 0
      %5131 = vmatprep.subr.bf16.mxu0 0
      %5132 = vmatpush2.bf16.msra.mxu0 0
      %5133 = vmatprep.subr.bf16.mxu0 0
      %5134 = vmatpush2.bf16.msra.mxu0 0
      %5135 = vmatprep.subr.bf16.mxu0 0
      %5136 = vmatpush2.bf16.msra.mxu0 0
      %5137 = vmatprep.subr.bf16.mxu0 0
      %5138 = vmatpush2.bf16.msra.mxu0 0
      %5139 = vmatprep.subr.bf16.mxu0 0
      %5140 = vmatpush2.bf16.msra.mxu0 0
      %5141 = vmatprep.subr.bf16.mxu0 0
      %5142 = vmatpush2.bf16.msra.mxu0 0
      %5143 = vmatprep.subr.bf16.mxu0 0
      %5144 = vmatpush2.bf16.msra.mxu0 0
      %5145 = vmatprep.mubr.bf16.mxu0 0
      %5146 = vmatmul.mubr.bf16.gmra.mxu0 %v5039
      %v5147 = vpop.f32.mrf.mxu0
      %v5148 = vadd.f32 0.0, %v5147
      %v5149 = vpop.f32.mrf.mxu0
      %v5150 = vpop.f32.mrf.mxu0
      %v5151 = vadd.f32 0.0, %v5150
      %v5152 = vpop.f32.mrf.mxu0
      %5153 = vmatprep.mubr.bf16.mxu0 0
      %5154 = vmatmul.mubr.bf16.gmra.mxu0 %v5042
      %v5155 = vpop.f32.mrf.mxu0
      %v5156 = vadd.f32 0.0, %v5155
      %v5157 = vpop.f32.mrf.mxu0
      %v5158 = vpop.f32.mrf.mxu0
      %v5159 = vadd.f32 0.0, %v5158
      %v5160 = vpop.f32.mrf.mxu0
      %5161 = vmatprep.mubr.bf16.mxu0 0
      %5162 = vmatmul.mubr.bf16.gmra.mxu0 %v5045
      %v5163 = vpop.f32.mrf.mxu0
      %v5164 = vadd.f32 0.0, %v5163
      %v5165 = vpop.f32.mrf.mxu0
      %v5166 = vpop.f32.mrf.mxu0
      %v5167 = vadd.f32 0.0, %v5166
      %v5168 = vpop.f32.mrf.mxu0
      %5169 = vmatprep.mubr.bf16.mxu0 0
      %5170 = vmatmul.mubr.bf16.gmra.mxu0 %v5048
      %v5171 = vpop.f32.mrf.mxu0
      %v5172 = vadd.f32 0.0, %v5171
      %v5173 = vpop.f32.mrf.mxu0
      %v5174 = vpop.f32.mrf.mxu0
      %v5175 = vadd.f32 0.0, %v5174
      %v5176 = vpop.f32.mrf.mxu0
      %5177 = vmatprep.mubr.bf16.mxu0 0
      %5178 = vmatmul.mubr.bf16.gmra.mxu0 %v5051
      %v5179 = vpop.f32.mrf.mxu0
      %v5180 = vadd.f32 0.0, %v5179
      %v5181 = vpop.f32.mrf.mxu0
      %v5182 = vpop.f32.mrf.mxu0
      %v5183 = vadd.f32 0.0, %v5182
      %v5184 = vpop.f32.mrf.mxu0
      %5185 = vmatprep.mubr.bf16.mxu0 0
      %5186 = vmatmul.mubr.bf16.gmra.mxu0 %v5054
      %v5187 = vpop.f32.mrf.mxu0
      %v5188 = vadd.f32 0.0, %v5187
      %v5189 = vpop.f32.mrf.mxu0
      %v5190 = vpop.f32.mrf.mxu0
      %v5191 = vadd.f32 0.0, %v5190
      %v5192 = vpop.f32.mrf.mxu0
      %5193 = vmatprep.mubr.bf16.mxu0 0
      %5194 = vmatmul.mubr.bf16.gmra.mxu0 %v5057
      %v5195 = vpop.f32.mrf.mxu0
      %v5196 = vadd.f32 0.0, %v5195
      %v5197 = vpop.f32.mrf.mxu0
      %v5198 = vpop.f32.mrf.mxu0
      %v5199 = vadd.f32 0.0, %v5198
      %v5200 = vpop.f32.mrf.mxu0
      %5201 = vmatprep.mubr.bf16.mxu0 0
      %5202 = vmatmul.mubr.bf16.gmra.mxu0 %v5060
      %v5203 = vpop.f32.mrf.mxu0
      %v5204 = vadd.f32 0.0, %v5203
      %v5205 = vpop.f32.mrf.mxu0
      %v5206 = vpop.f32.mrf.mxu0
      %v5207 = vadd.f32 0.0, %v5206
      %v5208 = vpop.f32.mrf.mxu0
      %5209 = vmatprep.mubr.bf16.mxu0 0
      %5210 = vmatmul.mubr.bf16.gmra.mxu0 %v5063
      %v5211 = vpop.f32.mrf.mxu0
      %v5212 = vadd.f32 0.0, %v5211
      %v5213 = vpop.f32.mrf.mxu0
      %v5214 = vpop.f32.mrf.mxu0
      %v5215 = vadd.f32 0.0, %v5214
      %v5216 = vpop.f32.mrf.mxu0
      %5217 = vmatprep.mubr.bf16.mxu0 0
      %5218 = vmatmul.mubr.bf16.gmra.mxu0 %v5066
      %v5219 = vpop.f32.mrf.mxu0
      %v5220 = vadd.f32 0.0, %v5219
      %v5221 = vpop.f32.mrf.mxu0
      %v5222 = vpop.f32.mrf.mxu0
      %v5223 = vadd.f32 0.0, %v5222
      %v5224 = vpop.f32.mrf.mxu0
      %5225 = vmatprep.mubr.bf16.mxu0 0
      %5226 = vmatmul.mubr.bf16.gmra.mxu0 %v5069
      %v5227 = vpop.f32.mrf.mxu0
      %v5228 = vadd.f32 0.0, %v5227
      %v5229 = vpop.f32.mrf.mxu0
      %v5230 = vpop.f32.mrf.mxu0
      %v5231 = vadd.f32 0.0, %v5230
      %v5232 = vpop.f32.mrf.mxu0
      %5233 = vmatprep.mubr.bf16.mxu0 0
      %5234 = vmatmul.mubr.bf16.gmra.mxu0 %v5072
      %v5235 = vpop.f32.mrf.mxu0
      %v5236 = vadd.f32 0.0, %v5235
      %v5237 = vpop.f32.mrf.mxu0
      %v5238 = vpop.f32.mrf.mxu0
      %v5239 = vadd.f32 0.0, %v5238
      %v5240 = vpop.f32.mrf.mxu0
      %5241 = vmatprep.mubr.bf16.mxu0 0
      %5242 = vmatmul.mubr.bf16.gmra.mxu0 %v5075
      %v5243 = vpop.f32.mrf.mxu0
      %v5244 = vadd.f32 0.0, %v5243
      %v5245 = vpop.f32.mrf.mxu0
      %v5246 = vpop.f32.mrf.mxu0
      %v5247 = vadd.f32 0.0, %v5246
      %v5248 = vpop.f32.mrf.mxu0
      %5249 = vmatprep.mubr.bf16.mxu0 0
      %5250 = vmatmul.mubr.bf16.gmra.mxu0 %v5078
      %v5251 = vpop.f32.mrf.mxu0
      %v5252 = vadd.f32 0.0, %v5251
      %v5253 = vpop.f32.mrf.mxu0
      %v5254 = vpop.f32.mrf.mxu0
      %v5255 = vadd.f32 0.0, %v5254
      %v5256 = vpop.f32.mrf.mxu0
      %5257 = vmatprep.mubr.bf16.mxu0 0
      %5258 = vmatmul.mubr.bf16.gmra.mxu0 %v5081
      %v5259 = vpop.f32.mrf.mxu0
      %v5260 = vadd.f32 0.0, %v5259
      %v5261 = vpop.f32.mrf.mxu0
      %v5262 = vpop.f32.mrf.mxu0
      %v5263 = vadd.f32 0.0, %v5262
      %v5264 = vpop.f32.mrf.mxu0
      %5265 = vmatprep.mubr.bf16.mxu0 0
      %5266 = vmatmul.mubr.bf16.gmra.mxu0 %v5084
      %v5267 = vpop.f32.mrf.mxu0
      %v5268 = vadd.f32 0.0, %v5267
      %v5269 = vpop.f32.mrf.mxu0
      %v5270 = vpop.f32.mrf.mxu0
      %v5271 = vadd.f32 0.0, %v5270
      %v5272 = vpop.f32.mrf.mxu0
      %5273 = vmatprep.mubr.bf16.mxu0 0
      %5274 = vmatmul.mubr.bf16.gmra.mxu0 %v5087
      %v5275 = vpop.f32.mrf.mxu0
      %v5276 = vadd.f32 0.0, %v5275
      %v5277 = vpop.f32.mrf.mxu0
      %v5278 = vpop.f32.mrf.mxu0
      %v5279 = vadd.f32 0.0, %v5278
      %v5280 = vpop.f32.mrf.mxu0
      %5281 = vmatprep.mubr.bf16.mxu0 0
      %5282 = vmatmul.mubr.bf16.gmra.mxu0 %v5090
      %v5283 = vpop.f32.mrf.mxu0
      %v5284 = vadd.f32 0.0, %v5283
      %v5285 = vpop.f32.mrf.mxu0
      %v5286 = vpop.f32.mrf.mxu0
      %v5287 = vadd.f32 0.0, %v5286
      %v5288 = vpop.f32.mrf.mxu0
      %5289 = vmatprep.mubr.bf16.mxu0 0
      %5290 = vmatmul.mubr.bf16.gmra.mxu0 %v5093
      %v5291 = vpop.f32.mrf.mxu0
      %v5292 = vadd.f32 0.0, %v5291
      %v5293 = vpop.f32.mrf.mxu0
      %v5294 = vpop.f32.mrf.mxu0
      %v5295 = vadd.f32 0.0, %v5294
      %v5296 = vpop.f32.mrf.mxu0
      %5297 = vmatprep.mubr.bf16.mxu0 0
      %5298 = vmatmul.mubr.bf16.gmra.mxu0 %v5096
      %v5299 = vpop.f32.mrf.mxu0
      %v5300 = vadd.f32 0.0, %v5299
      %v5301 = vpop.f32.mrf.mxu0
      %v5302 = vpop.f32.mrf.mxu0
      %v5303 = vadd.f32 0.0, %v5302
      %v5304 = vpop.f32.mrf.mxu0
      %5305 = vmatprep.mubr.bf16.mxu0 0
      %5306 = vmatmul.mubr.bf16.gmra.mxu0 %v5099
      %v5307 = vpop.f32.mrf.mxu0
      %v5308 = vadd.f32 0.0, %v5307
      %v5309 = vpop.f32.mrf.mxu0
      %v5310 = vpop.f32.mrf.mxu0
      %v5311 = vadd.f32 0.0, %v5310
      %v5312 = vpop.f32.mrf.mxu0
      %5313 = vmatprep.mubr.bf16.mxu0 0
      %5314 = vmatmul.mubr.bf16.gmra.mxu0 %v5102
      %v5315 = vpop.f32.mrf.mxu0
      %v5316 = vadd.f32 0.0, %v5315
      %v5317 = vpop.f32.mrf.mxu0
      %v5318 = vpop.f32.mrf.mxu0
      %v5319 = vadd.f32 0.0, %v5318
      %v5320 = vpop.f32.mrf.mxu0
      %5321 = vmatprep.mubr.bf16.mxu0 0
      %5322 = vmatmul.mubr.bf16.gmra.mxu0 %v5105
      %v5323 = vpop.f32.mrf.mxu0
      %v5324 = vadd.f32 0.0, %v5323
      %v5325 = vpop.f32.mrf.mxu0
      %v5326 = vpop.f32.mrf.mxu0
      %v5327 = vadd.f32 0.0, %v5326
      %v5328 = vpop.f32.mrf.mxu0
      %5329 = vmatprep.mubr.bf16.mxu0 0
      %5330 = vmatmul.mubr.bf16.gmra.mxu0 %v5108
      %v5331 = vpop.f32.mrf.mxu0
      %v5332 = vadd.f32 0.0, %v5331
      %v5333 = vpop.f32.mrf.mxu0
      %v5334 = vpop.f32.mrf.mxu0
      %v5335 = vadd.f32 0.0, %v5334
      %v5336 = vpop.f32.mrf.mxu0
      %5337 = vdwg.mxu0
      %v5338 = vadd.f32 %v4620, %v5148
      %v5339 = vadd.f32 %v4621, %v5151
      %v5340 = vadd.f32 %v4622, %v5156
      %v5341 = vadd.f32 %v4623, %v5159
      %v5342 = vadd.f32 %v4624, %v5164
      %v5343 = vadd.f32 %v4625, %v5167
      %v5344 = vadd.f32 %v4626, %v5172
      %v5345 = vadd.f32 %v4627, %v5175
      %v5346 = vadd.f32 %v4628, %v5180
      %v5347 = vadd.f32 %v4629, %v5183
      %v5348 = vadd.f32 %v4630, %v5188
      %v5349 = vadd.f32 %v4631, %v5191
      %v5350 = vadd.f32 %v4632, %v5196
      %v5351 = vadd.f32 %v4633, %v5199
      %v5352 = vadd.f32 %v4634, %v5204
      %v5353 = vadd.f32 %v4635, %v5207
      %v5354 = vadd.f32 %v4636, %v5212
      %v5355 = vadd.f32 %v4637, %v5215
      %v5356 = vadd.f32 %v4638, %v5220
      %v5357 = vadd.f32 %v4639, %v5223
      %v5358 = vadd.f32 %v4640, %v5228
      %v5359 = vadd.f32 %v4641, %v5231
      %v5360 = vadd.f32 %v4642, %v5236
      %v5361 = vadd.f32 %v4643, %v5239
      %v5362 = vadd.f32 %v4644, %v5244
      %v5363 = vadd.f32 %v4645, %v5247
      %v5364 = vadd.f32 %v4646, %v5252
      %v5365 = vadd.f32 %v4647, %v5255
      %v5366 = vadd.f32 %v4648, %v5260
      %v5367 = vadd.f32 %v4649, %v5263
      %v5368 = vadd.f32 %v4650, %v5268
      %v5369 = vadd.f32 %v4651, %v5271
      %v5370 = vadd.f32 %v4652, %v5276
      %v5371 = vadd.f32 %v4653, %v5279
      %v5372 = vadd.f32 %v4654, %v5284
      %v5373 = vadd.f32 %v4655, %v5287
      %v5374 = vadd.f32 %v4656, %v5292
      %v5375 = vadd.f32 %v4657, %v5295
      %v5376 = vadd.f32 %v4658, %v5300
      %v5377 = vadd.f32 %v4659, %v5303
      %v5378 = vadd.f32 %v4660, %v5308
      %v5379 = vadd.f32 %v4661, %v5311
      %v5380 = vadd.f32 %v4662, %v5316
      %v5381 = vadd.f32 %v4663, %v5319
      %v5382 = vadd.f32 %v4664, %v5324
      %v5383 = vadd.f32 %v4665, %v5327
      %v5384 = vadd.f32 %v4666, %v5332
      %v5385 = vadd.f32 %v4667, %v5335
      %v5386 = vld [vmem:[#allocation2 + $0x18] sm:$0xe]
      %s5387 = scalar_lea.vmem %s3, 16
      %v5388 = vld [vmem:[%s5387] sm:$0x3]
      %v5390 = vunpack.c.l.b16 %v5386
      %v5391 = vpack.c.b16 %v4769, %v5390
      %v5392 = vrot.slane %v5391, 1
      %v5393 = vrot.slane %v4818, 1
      %v5394 = vsel %vm2113, %v5392, %v5393
      %v5395 = vrot.slane %v4819, 1
      %v5396 = vsel %vm2113, %v5393, %v5395
      %v5397 = vrot.slane %v4820, 1
      %v5398 = vsel %vm2113, %v5395, %v5397
      %v5399 = vrot.slane %v4821, 1
      %v5400 = vsel %vm2113, %v5397, %v5399
      %v5401 = vrot.slane %v4822, 1
      %v5402 = vsel %vm2113, %v5399, %v5401
      %v5403 = vrot.slane %v4823, 1
      %v5404 = vsel %vm2113, %v5401, %v5403
      %v5405 = vrot.slane %v4824, 1
      %v5406 = vsel %vm2113, %v5403, %v5405
      %v5407 = vrot.slane %v4825, 1
      %v5408 = vsel %vm2113, %v5405, %v5407
      %v5409 = vrot.slane %v4826, 1
      %v5410 = vsel %vm2113, %v5407, %v5409
      %v5411 = vrot.slane %v4827, 1
      %v5412 = vsel %vm2113, %v5409, %v5411
      %v5413 = vrot.slane %v4828, 1
      %v5414 = vsel %vm2113, %v5411, %v5413
      %v5415 = vrot.slane %v4829, 1
      %v5416 = vsel %vm2113, %v5413, %v5415
      %v5417 = vrot.slane %v4830, 1
      %v5418 = vsel %vm2113, %v5415, %v5417
      %v5419 = vrot.slane %v4831, 1
      %v5420 = vsel %vm2113, %v5417, %v5419
      %v5421 = vrot.slane %v4832, 1
      %v5422 = vsel %vm2113, %v5419, %v5421
      %v5423 = vrot.slane %v4833, 1
      %v5424 = vsel %vm2113, %v5421, %v5423
      %v5425 = vrot.slane %v4834, 1
      %v5426 = vsel %vm2113, %v5423, %v5425
      %v5427 = vrot.slane %v4835, 1
      %v5428 = vsel %vm2113, %v5425, %v5427
      %v5429 = vrot.slane %v4836, 1
      %v5430 = vsel %vm2113, %v5427, %v5429
      %v5431 = vrot.slane %v4837, 1
      %v5432 = vsel %vm2113, %v5429, %v5431
      %v5433 = vrot.slane %v4838, 1
      %v5434 = vsel %vm2113, %v5431, %v5433
      %v5435 = vrot.slane %v4839, 1
      %v5436 = vsel %vm2113, %v5433, %v5435
      %v5437 = vrot.slane %v4840, 1
      %v5438 = vsel %vm2113, %v5435, %v5437
      %v5439 = vrot.slane %v4841, 1
      %v5440 = vsel %vm2113, %v5437, %v5439
      %v5442 = vsel %vm1526, %v5394, 0
      %v5445 = vsel %vm1526, %v5396, 0
      %v5448 = vsel %vm1526, %v5398, 0
      %v5451 = vsel %vm1526, %v5400, 0
      %v5454 = vsel %vm1526, %v5402, 0
      %v5457 = vsel %vm1526, %v5404, 0
      %v5460 = vsel %vm1526, %v5406, 0
      %v5463 = vsel %vm1526, %v5408, 0
      %v5466 = vsel %vm1526, %v5410, 0
      %v5469 = vsel %vm1526, %v5412, 0
      %v5472 = vsel %vm1526, %v5414, 0
      %v5475 = vsel %vm1526, %v5416, 0
      %v5478 = vsel %vm1526, %v5418, 0
      %v5481 = vsel %vm1526, %v5420, 0
      %v5484 = vsel %vm1526, %v5422, 0
      %v5487 = vsel %vm1526, %v5424, 0
      %v5490 = vsel %vm1526, %v5426, 0
      %v5493 = vsel %vm1526, %v5428, 0
      %v5496 = vsel %vm1526, %v5430, 0
      %v5499 = vsel %vm1526, %v5432, 0
      %v5502 = vsel %vm1526, %v5434, 0
      %v5505 = vsel %vm1526, %v5436, 0
      %v5508 = vsel %vm1526, %v5438, 0
      %v5511 = vsel %vm1526, %v5440, 0
      %v5514 = vand.u32 %v5388, %v1602
      %5516 = vmatprep.subr.bf16.mxu0 0
      %5517 = vmatpush1.bf16.msra.mxu0 0
      %5518 = vmatprep.subr.bf16.mxu0 0
      %5519 = vmatpush1.bf16.msra.mxu0 0
      %5520 = vmatprep.subr.bf16.mxu0 0
      %5521 = vmatpush1.bf16.msra.mxu0 0
      %5522 = vmatprep.subr.bf16.mxu0 0
      %5523 = vmatpush1.bf16.msra.mxu0 0
      %5524 = vmatprep.subr.bf16.mxu0 0
      %5525 = vmatpush1.bf16.msra.mxu0 0
      %5526 = vmatprep.subr.bf16.mxu0 0
      %5527 = vmatpush1.bf16.msra.mxu0 0
      %5528 = vmatprep.subr.bf16.mxu0 0
      %5529 = vmatpush1.bf16.msra.mxu0 0
      %5530 = vmatprep.subr.bf16.mxu0 0
      %5531 = vmatpush1.bf16.msra.mxu0 %v5514
      %5532 = vmatprep.subr.bf16.mxu0 0
      %5533 = vmatpush2.bf16.msra.mxu0 0
      %5534 = vmatprep.subr.bf16.mxu0 0
      %5535 = vmatpush2.bf16.msra.mxu0 0
      %5536 = vmatprep.subr.bf16.mxu0 0
      %5537 = vmatpush2.bf16.msra.mxu0 0
      %5538 = vmatprep.subr.bf16.mxu0 0
      %5539 = vmatpush2.bf16.msra.mxu0 0
      %5540 = vmatprep.subr.bf16.mxu0 0
      %5541 = vmatpush2.bf16.msra.mxu0 0
      %5542 = vmatprep.subr.bf16.mxu0 0
      %5543 = vmatpush2.bf16.msra.mxu0 0
      %5544 = vmatprep.subr.bf16.mxu0 0
      %5545 = vmatpush2.bf16.msra.mxu0 0
      %5546 = vmatprep.subr.bf16.mxu0 0
      %5547 = vmatpush2.bf16.msra.mxu0 0
      %5548 = vmatprep.mubr.bf16.mxu0 0
      %5549 = vmatmul.mubr.bf16.gmra.mxu0 %v5442
      %v5550 = vpop.f32.mrf.mxu0
      %v5551 = vadd.f32 0.0, %v5550
      %v5552 = vpop.f32.mrf.mxu0
      %v5553 = vpop.f32.mrf.mxu0
      %v5554 = vadd.f32 0.0, %v5553
      %v5555 = vpop.f32.mrf.mxu0
      %5556 = vmatprep.mubr.bf16.mxu0 0
      %5557 = vmatmul.mubr.bf16.gmra.mxu0 %v5445
      %v5558 = vpop.f32.mrf.mxu0
      %v5559 = vadd.f32 0.0, %v5558
      %v5560 = vpop.f32.mrf.mxu0
      %v5561 = vpop.f32.mrf.mxu0
      %v5562 = vadd.f32 0.0, %v5561
      %v5563 = vpop.f32.mrf.mxu0
      %5564 = vmatprep.mubr.bf16.mxu0 0
      %5565 = vmatmul.mubr.bf16.gmra.mxu0 %v5448
      %v5566 = vpop.f32.mrf.mxu0
      %v5567 = vadd.f32 0.0, %v5566
      %v5568 = vpop.f32.mrf.mxu0
      %v5569 = vpop.f32.mrf.mxu0
      %v5570 = vadd.f32 0.0, %v5569
      %v5571 = vpop.f32.mrf.mxu0
      %5572 = vmatprep.mubr.bf16.mxu0 0
      %5573 = vmatmul.mubr.bf16.gmra.mxu0 %v5451
      %v5574 = vpop.f32.mrf.mxu0
      %v5575 = vadd.f32 0.0, %v5574
      %v5576 = vpop.f32.mrf.mxu0
      %v5577 = vpop.f32.mrf.mxu0
      %v5578 = vadd.f32 0.0, %v5577
      %v5579 = vpop.f32.mrf.mxu0
      %5580 = vmatprep.mubr.bf16.mxu0 0
      %5581 = vmatmul.mubr.bf16.gmra.mxu0 %v5454
      %v5582 = vpop.f32.mrf.mxu0
      %v5583 = vadd.f32 0.0, %v5582
      %v5584 = vpop.f32.mrf.mxu0
      %v5585 = vpop.f32.mrf.mxu0
      %v5586 = vadd.f32 0.0, %v5585
      %v5587 = vpop.f32.mrf.mxu0
      %5588 = vmatprep.mubr.bf16.mxu0 0
      %5589 = vmatmul.mubr.bf16.gmra.mxu0 %v5457
      %v5590 = vpop.f32.mrf.mxu0
      %v5591 = vadd.f32 0.0, %v5590
      %v5592 = vpop.f32.mrf.mxu0
      %v5593 = vpop.f32.mrf.mxu0
      %v5594 = vadd.f32 0.0, %v5593
      %v5595 = vpop.f32.mrf.mxu0
      %5596 = vmatprep.mubr.bf16.mxu0 0
      %5597 = vmatmul.mubr.bf16.gmra.mxu0 %v5460
      %v5598 = vpop.f32.mrf.mxu0
      %v5599 = vadd.f32 0.0, %v5598
      %v5600 = vpop.f32.mrf.mxu0
      %v5601 = vpop.f32.mrf.mxu0
      %v5602 = vadd.f32 0.0, %v5601
      %v5603 = vpop.f32.mrf.mxu0
      %5604 = vmatprep.mubr.bf16.mxu0 0
      %5605 = vmatmul.mubr.bf16.gmra.mxu0 %v5463
      %v5606 = vpop.f32.mrf.mxu0
      %v5607 = vadd.f32 0.0, %v5606
      %v5608 = vpop.f32.mrf.mxu0
      %v5609 = vpop.f32.mrf.mxu0
      %v5610 = vadd.f32 0.0, %v5609
      %v5611 = vpop.f32.mrf.mxu0
      %5612 = vmatprep.mubr.bf16.mxu0 0
      %5613 = vmatmul.mubr.bf16.gmra.mxu0 %v5466
      %v5614 = vpop.f32.mrf.mxu0
      %v5615 = vadd.f32 0.0, %v5614
      %v5616 = vpop.f32.mrf.mxu0
      %v5617 = vpop.f32.mrf.mxu0
      %v5618 = vadd.f32 0.0, %v5617
      %v5619 = vpop.f32.mrf.mxu0
      %5620 = vmatprep.mubr.bf16.mxu0 0
      %5621 = vmatmul.mubr.bf16.gmra.mxu0 %v5469
      %v5622 = vpop.f32.mrf.mxu0
      %v5623 = vadd.f32 0.0, %v5622
      %v5624 = vpop.f32.mrf.mxu0
      %v5625 = vpop.f32.mrf.mxu0
      %v5626 = vadd.f32 0.0, %v5625
      %v5627 = vpop.f32.mrf.mxu0
      %5628 = vmatprep.mubr.bf16.mxu0 0
      %5629 = vmatmul.mubr.bf16.gmra.mxu0 %v5472
      %v5630 = vpop.f32.mrf.mxu0
      %v5631 = vadd.f32 0.0, %v5630
      %v5632 = vpop.f32.mrf.mxu0
      %v5633 = vpop.f32.mrf.mxu0
      %v5634 = vadd.f32 0.0, %v5633
      %v5635 = vpop.f32.mrf.mxu0
      %5636 = vmatprep.mubr.bf16.mxu0 0
      %5637 = vmatmul.mubr.bf16.gmra.mxu0 %v5475
      %v5638 = vpop.f32.mrf.mxu0
      %v5639 = vadd.f32 0.0, %v5638
      %v5640 = vpop.f32.mrf.mxu0
      %v5641 = vpop.f32.mrf.mxu0
      %v5642 = vadd.f32 0.0, %v5641
      %v5643 = vpop.f32.mrf.mxu0
      %5644 = vmatprep.mubr.bf16.mxu0 0
      %5645 = vmatmul.mubr.bf16.gmra.mxu0 %v5478
      %v5646 = vpop.f32.mrf.mxu0
      %v5647 = vadd.f32 0.0, %v5646
      %v5648 = vpop.f32.mrf.mxu0
      %v5649 = vpop.f32.mrf.mxu0
      %v5650 = vadd.f32 0.0, %v5649
      %v5651 = vpop.f32.mrf.mxu0
      %5652 = vmatprep.mubr.bf16.mxu0 0
      %5653 = vmatmul.mubr.bf16.gmra.mxu0 %v5481
      %v5654 = vpop.f32.mrf.mxu0
      %v5655 = vadd.f32 0.0, %v5654
      %v5656 = vpop.f32.mrf.mxu0
      %v5657 = vpop.f32.mrf.mxu0
      %v5658 = vadd.f32 0.0, %v5657
      %v5659 = vpop.f32.mrf.mxu0
      %5660 = vmatprep.mubr.bf16.mxu0 0
      %5661 = vmatmul.mubr.bf16.gmra.mxu0 %v5484
      %v5662 = vpop.f32.mrf.mxu0
      %v5663 = vadd.f32 0.0, %v5662
      %v5664 = vpop.f32.mrf.mxu0
      %v5665 = vpop.f32.mrf.mxu0
      %v5666 = vadd.f32 0.0, %v5665
      %v5667 = vpop.f32.mrf.mxu0
      %5668 = vmatprep.mubr.bf16.mxu0 0
      %5669 = vmatmul.mubr.bf16.gmra.mxu0 %v5487
      %v5670 = vpop.f32.mrf.mxu0
      %v5671 = vadd.f32 0.0, %v5670
      %v5672 = vpop.f32.mrf.mxu0
      %v5673 = vpop.f32.mrf.mxu0
      %v5674 = vadd.f32 0.0, %v5673
      %v5675 = vpop.f32.mrf.mxu0
      %5676 = vmatprep.mubr.bf16.mxu0 0
      %5677 = vmatmul.mubr.bf16.gmra.mxu0 %v5490
      %v5678 = vpop.f32.mrf.mxu0
      %v5679 = vadd.f32 0.0, %v5678
      %v5680 = vpop.f32.mrf.mxu0
      %v5681 = vpop.f32.mrf.mxu0
      %v5682 = vadd.f32 0.0, %v5681
      %v5683 = vpop.f32.mrf.mxu0
      %5684 = vmatprep.mubr.bf16.mxu0 0
      %5685 = vmatmul.mubr.bf16.gmra.mxu0 %v5493
      %v5686 = vpop.f32.mrf.mxu0
      %v5687 = vadd.f32 0.0, %v5686
      %v5688 = vpop.f32.mrf.mxu0
      %v5689 = vpop.f32.mrf.mxu0
      %v5690 = vadd.f32 0.0, %v5689
      %v5691 = vpop.f32.mrf.mxu0
      %5692 = vmatprep.mubr.bf16.mxu0 0
      %5693 = vmatmul.mubr.bf16.gmra.mxu0 %v5496
      %v5694 = vpop.f32.mrf.mxu0
      %v5695 = vadd.f32 0.0, %v5694
      %v5696 = vpop.f32.mrf.mxu0
      %v5697 = vpop.f32.mrf.mxu0
      %v5698 = vadd.f32 0.0, %v5697
      %v5699 = vpop.f32.mrf.mxu0
      %5700 = vmatprep.mubr.bf16.mxu0 0
      %5701 = vmatmul.mubr.bf16.gmra.mxu0 %v5499
      %v5702 = vpop.f32.mrf.mxu0
      %v5703 = vadd.f32 0.0, %v5702
      %v5704 = vpop.f32.mrf.mxu0
      %v5705 = vpop.f32.mrf.mxu0
      %v5706 = vadd.f32 0.0, %v5705
      %v5707 = vpop.f32.mrf.mxu0
      %5708 = vmatprep.mubr.bf16.mxu0 0
      %5709 = vmatmul.mubr.bf16.gmra.mxu0 %v5502
      %v5710 = vpop.f32.mrf.mxu0
      %v5711 = vadd.f32 0.0, %v5710
      %v5712 = vpop.f32.mrf.mxu0
      %v5713 = vpop.f32.mrf.mxu0
      %v5714 = vadd.f32 0.0, %v5713
      %v5715 = vpop.f32.mrf.mxu0
      %5716 = vmatprep.mubr.bf16.mxu0 0
      %5717 = vmatmul.mubr.bf16.gmra.mxu0 %v5505
      %v5718 = vpop.f32.mrf.mxu0
      %v5719 = vadd.f32 0.0, %v5718
      %v5720 = vpop.f32.mrf.mxu0
      %v5721 = vpop.f32.mrf.mxu0
      %v5722 = vadd.f32 0.0, %v5721
      %v5723 = vpop.f32.mrf.mxu0
      %5724 = vmatprep.mubr.bf16.mxu0 0
      %5725 = vmatmul.mubr.bf16.gmra.mxu0 %v5508
      %v5726 = vpop.f32.mrf.mxu0
      %v5727 = vadd.f32 0.0, %v5726
      %v5728 = vpop.f32.mrf.mxu0
      %v5729 = vpop.f32.mrf.mxu0
      %v5730 = vadd.f32 0.0, %v5729
      %v5731 = vpop.f32.mrf.mxu0
      %5732 = vmatprep.mubr.bf16.mxu0 0
      %5733 = vmatmul.mubr.bf16.gmra.mxu0 %v5511
      %v5734 = vpop.f32.mrf.mxu0
      %v5735 = vadd.f32 0.0, %v5734
      %v5736 = vpop.f32.mrf.mxu0
      %v5737 = vpop.f32.mrf.mxu0
      %v5738 = vadd.f32 0.0, %v5737
      %v5739 = vpop.f32.mrf.mxu0
      %5740 = vdwg.mxu0
      %v5741 = vadd.f32 %v5338, %v5551
      %v5742 = vadd.f32 %v5339, %v5554
      %v5743 = vadd.f32 %v5340, %v5559
      %v5744 = vadd.f32 %v5341, %v5562
      %v5745 = vadd.f32 %v5342, %v5567
      %v5746 = vadd.f32 %v5343, %v5570
      %v5747 = vadd.f32 %v5344, %v5575
      %v5748 = vadd.f32 %v5345, %v5578
      %v5749 = vadd.f32 %v5346, %v5583
      %v5750 = vadd.f32 %v5347, %v5586
      %v5751 = vadd.f32 %v5348, %v5591
      %v5752 = vadd.f32 %v5349, %v5594
      %v5753 = vadd.f32 %v5350, %v5599
      %v5754 = vadd.f32 %v5351, %v5602
      %v5755 = vadd.f32 %v5352, %v5607
      %v5756 = vadd.f32 %v5353, %v5610
      %v5757 = vadd.f32 %v5354, %v5615
      %v5758 = vadd.f32 %v5355, %v5618
      %v5759 = vadd.f32 %v5356, %v5623
      %v5760 = vadd.f32 %v5357, %v5626
      %v5761 = vadd.f32 %v5358, %v5631
      %v5762 = vadd.f32 %v5359, %v5634
      %v5763 = vadd.f32 %v5360, %v5639
      %v5764 = vadd.f32 %v5361, %v5642
      %v5765 = vadd.f32 %v5362, %v5647
      %v5766 = vadd.f32 %v5363, %v5650
      %v5767 = vadd.f32 %v5364, %v5655
      %v5768 = vadd.f32 %v5365, %v5658
      %v5769 = vadd.f32 %v5366, %v5663
      %v5770 = vadd.f32 %v5367, %v5666
      %v5771 = vadd.f32 %v5368, %v5671
      %v5772 = vadd.f32 %v5369, %v5674
      %v5773 = vadd.f32 %v5370, %v5679
      %v5774 = vadd.f32 %v5371, %v5682
      %v5775 = vadd.f32 %v5372, %v5687
      %v5776 = vadd.f32 %v5373, %v5690
      %v5777 = vadd.f32 %v5374, %v5695
      %v5778 = vadd.f32 %v5375, %v5698
      %v5779 = vadd.f32 %v5376, %v5703
      %v5780 = vadd.f32 %v5377, %v5706
      %v5781 = vadd.f32 %v5378, %v5711
      %v5782 = vadd.f32 %v5379, %v5714
      %v5783 = vadd.f32 %v5380, %v5719
      %v5784 = vadd.f32 %v5381, %v5722
      %v5785 = vadd.f32 %v5382, %v5727
      %v5786 = vadd.f32 %v5383, %v5730
      %v5787 = vadd.f32 %v5384, %v5735
      %v5788 = vadd.f32 %v5385, %v5738
      %v5789 = vld [vmem:[%s4] sm:$0x1]
      %v5790 = vlaneseq
      %v5791 = vshrl.u32 %v5790, 7
      %v5792 = vsub.s32 0, %v5791
      %v5793 = vrot.slane %v5789, %v5792
      %v5794 = vadd.f32 %v5741, %v5793
      %v5795 = vadd.f32 %v5742, %v5793
      %v5796 = vadd.f32 %v5743, %v5793
      %v5797 = vadd.f32 %v5744, %v5793
      %v5798 = vadd.f32 %v5745, %v5793
      %v5799 = vadd.f32 %v5746, %v5793
      %v5800 = vadd.f32 %v5747, %v5793
      %v5801 = vadd.f32 %v5748, %v5793
      %v5802 = vadd.f32 %v5749, %v5793
      %v5803 = vadd.f32 %v5750, %v5793
      %v5804 = vadd.f32 %v5751, %v5793
      %v5805 = vadd.f32 %v5752, %v5793
      %v5806 = vadd.f32 %v5753, %v5793
      %v5807 = vadd.f32 %v5754, %v5793
      %v5808 = vadd.f32 %v5755, %v5793
      %v5809 = vadd.f32 %v5756, %v5793
      %v5810 = vadd.f32 %v5757, %v5793
      %v5811 = vadd.f32 %v5758, %v5793
      %v5812 = vadd.f32 %v5759, %v5793
      %v5813 = vadd.f32 %v5760, %v5793
      %v5814 = vadd.f32 %v5761, %v5793
      %v5815 = vadd.f32 %v5762, %v5793
      %v5816 = vadd.f32 %v5763, %v5793
      %v5817 = vadd.f32 %v5764, %v5793
      %v5818 = vadd.f32 %v5765, %v5793
      %v5819 = vadd.f32 %v5766, %v5793
      %v5820 = vadd.f32 %v5767, %v5793
      %v5821 = vadd.f32 %v5768, %v5793
      %v5822 = vadd.f32 %v5769, %v5793
      %v5823 = vadd.f32 %v5770, %v5793
      %v5824 = vadd.f32 %v5771, %v5793
      %v5825 = vadd.f32 %v5772, %v5793
      %v5826 = vadd.f32 %v5773, %v5793
      %v5827 = vadd.f32 %v5774, %v5793
      %v5828 = vadd.f32 %v5775, %v5793
      %v5829 = vadd.f32 %v5776, %v5793
      %v5830 = vadd.f32 %v5777, %v5793
      %v5831 = vadd.f32 %v5778, %v5793
      %v5832 = vadd.f32 %v5779, %v5793
      %v5833 = vadd.f32 %v5780, %v5793
      %v5834 = vadd.f32 %v5781, %v5793
      %v5835 = vadd.f32 %v5782, %v5793
      %v5836 = vadd.f32 %v5783, %v5793
      %v5837 = vadd.f32 %v5784, %v5793
      %v5838 = vadd.f32 %v5785, %v5793
      %v5839 = vadd.f32 %v5786, %v5793
      %v5840 = vadd.f32 %v5787, %v5793
      %v5841 = vadd.f32 %v5788, %v5793
      %v5842 = vld [vmem:[%s4 + $0x1] sm:$0x1]
      %vm5843 = vcmp.gt.f32.partialorder %v5842, 0.5
      %v5844 = vmax.f32 %v5794, 0.0
      %v5845 = vmax.f32 %v5795, 0.0
      %v5846 = vmax.f32 %v5796, 0.0
      %v5847 = vmax.f32 %v5797, 0.0
      %v5848 = vmax.f32 %v5798, 0.0
      %v5849 = vmax.f32 %v5799, 0.0
      %v5850 = vmax.f32 %v5800, 0.0
      %v5851 = vmax.f32 %v5801, 0.0
      %v5852 = vmax.f32 %v5802, 0.0
      %v5853 = vmax.f32 %v5803, 0.0
      %v5854 = vmax.f32 %v5804, 0.0
      %v5855 = vmax.f32 %v5805, 0.0
      %v5856 = vmax.f32 %v5806, 0.0
      %v5857 = vmax.f32 %v5807, 0.0
      %v5858 = vmax.f32 %v5808, 0.0
      %v5859 = vmax.f32 %v5809, 0.0
      %v5860 = vmax.f32 %v5810, 0.0
      %v5861 = vmax.f32 %v5811, 0.0
      %v5862 = vmax.f32 %v5812, 0.0
      %v5863 = vmax.f32 %v5813, 0.0
      %v5864 = vmax.f32 %v5814, 0.0
      %v5865 = vmax.f32 %v5815, 0.0
      %v5866 = vmax.f32 %v5816, 0.0
      %v5867 = vmax.f32 %v5817, 0.0
      %v5868 = vmax.f32 %v5818, 0.0
      %v5869 = vmax.f32 %v5819, 0.0
      %v5870 = vmax.f32 %v5820, 0.0
      %v5871 = vmax.f32 %v5821, 0.0
      %v5872 = vmax.f32 %v5822, 0.0
      %v5873 = vmax.f32 %v5823, 0.0
      %v5874 = vmax.f32 %v5824, 0.0
      %v5875 = vmax.f32 %v5825, 0.0
      %v5876 = vmax.f32 %v5826, 0.0
      %v5877 = vmax.f32 %v5827, 0.0
      %v5878 = vmax.f32 %v5828, 0.0
      %v5879 = vmax.f32 %v5829, 0.0
      %v5880 = vmax.f32 %v5830, 0.0
      %v5881 = vmax.f32 %v5831, 0.0
      %v5882 = vmax.f32 %v5832, 0.0
      %v5883 = vmax.f32 %v5833, 0.0
      %v5884 = vmax.f32 %v5834, 0.0
      %v5885 = vmax.f32 %v5835, 0.0
      %v5886 = vmax.f32 %v5836, 0.0
      %v5887 = vmax.f32 %v5837, 0.0
      %v5888 = vmax.f32 %v5838, 0.0
      %v5889 = vmax.f32 %v5839, 0.0
      %v5890 = vmax.f32 %v5840, 0.0
      %v5891 = vmax.f32 %v5841, 0.0
      %v5892 = vsel %vm5843, 1, 0
      %v5893 = vlaneseq
      %v5894 = vshrl.u32 %v5893, 7
      %v5895 = vsub.s32 0, %v5894
      %v5896 = vrot.slane %v5892, %v5895
      %vm5897 = vcmp.eq.s32.totalorder %v5896, 1
      %v5898 = vsel %vm5897, %v5844, %v5794
      %v5899 = vsel %vm5897, %v5845, %v5795
      %v5900 = vsel %vm5897, %v5846, %v5796
      %v5901 = vsel %vm5897, %v5847, %v5797
      %v5902 = vsel %vm5897, %v5848, %v5798
      %v5903 = vsel %vm5897, %v5849, %v5799
      %v5904 = vsel %vm5897, %v5850, %v5800
      %v5905 = vsel %vm5897, %v5851, %v5801
      %v5906 = vsel %vm5897, %v5852, %v5802
      %v5907 = vsel %vm5897, %v5853, %v5803
      %v5908 = vsel %vm5897, %v5854, %v5804
      %v5909 = vsel %vm5897, %v5855, %v5805
      %v5910 = vsel %vm5897, %v5856, %v5806
      %v5911 = vsel %vm5897, %v5857, %v5807
      %v5912 = vsel %vm5897, %v5858, %v5808
      %v5913 = vsel %vm5897, %v5859, %v5809
      %v5914 = vsel %vm5897, %v5860, %v5810
      %v5915 = vsel %vm5897, %v5861, %v5811
      %v5916 = vsel %vm5897, %v5862, %v5812
      %v5917 = vsel %vm5897, %v5863, %v5813
      %v5918 = vsel %vm5897, %v5864, %v5814
      %v5919 = vsel %vm5897, %v5865, %v5815
      %v5920 = vsel %vm5897, %v5866, %v5816
      %v5921 = vsel %vm5897, %v5867, %v5817
      %v5922 = vsel %vm5897, %v5868, %v5818
      %v5923 = vsel %vm5897, %v5869, %v5819
      %v5924 = vsel %vm5897, %v5870, %v5820
      %v5925 = vsel %vm5897, %v5871, %v5821
      %v5926 = vsel %vm5897, %v5872, %v5822
      %v5927 = vsel %vm5897, %v5873, %v5823
      %v5928 = vsel %vm5897, %v5874, %v5824
      %v5929 = vsel %vm5897, %v5875, %v5825
      %v5930 = vsel %vm5897, %v5876, %v5826
      %v5931 = vsel %vm5897, %v5877, %v5827
      %v5932 = vsel %vm5897, %v5878, %v5828
      %v5933 = vsel %vm5897, %v5879, %v5829
      %v5934 = vsel %vm5897, %v5880, %v5830
      %v5935 = vsel %vm5897, %v5881, %v5831
      %v5936 = vsel %vm5897, %v5882, %v5832
      %v5937 = vsel %vm5897, %v5883, %v5833
      %v5938 = vsel %vm5897, %v5884, %v5834
      %v5939 = vsel %vm5897, %v5885, %v5835
      %v5940 = vsel %vm5897, %v5886, %v5836
      %v5941 = vsel %vm5897, %v5887, %v5837
      %v5942 = vsel %vm5897, %v5888, %v5838
      %v5943 = vsel %vm5897, %v5889, %v5839
      %v5944 = vsel %vm5897, %v5890, %v5840
      %v5945 = vsel %vm5897, %v5891, %v5841
      %v5946 = vld [vmem:[%s5] sm:$0xff]
      %v5947 = vld [vmem:[%s5 + $0x8] sm:$0xff]
      %v5948 = vld [vmem:[%s5 + $0x10] sm:$0xff]
      %v5949 = vld [vmem:[%s5 + $0x18] sm:$0xff]
      %v5950 = vld [vmem:[%s5 + $0x20] sm:$0xff]
      %v5951 = vld [vmem:[%s5 + $0x28] sm:$0xff]
      %v5952 = vld [vmem:[%s5 + $0x30] sm:$0xff]
      %v5953 = vld [vmem:[%s5 + $0x38] sm:$0xff]
      %v5954 = vld [vmem:[%s5 + $0x40] sm:$0xff]
      %v5955 = vld [vmem:[%s5 + $0x48] sm:$0xff]
      %v5956 = vld [vmem:[%s5 + $0x50] sm:$0xff]
      %v5957 = vld [vmem:[%s5 + $0x58] sm:$0xff]
      %v5958 = vld [vmem:[%s5 + $0x60] sm:$0xff]
      %v5959 = vld [vmem:[%s5 + $0x68] sm:$0xff]
      %v5960 = vld [vmem:[%s5 + $0x70] sm:$0xff]
      %v5961 = vld [vmem:[%s5 + $0x78] sm:$0xff]
      %v5962 = vld [vmem:[%s5 + $0x80] sm:$0xff]
      %v5963 = vld [vmem:[%s5 + $0x88] sm:$0xff]
      %v5964 = vld [vmem:[%s5 + $0x90] sm:$0xff]
      %v5965 = vld [vmem:[%s5 + $0x98] sm:$0xff]
      %v5966 = vld [vmem:[%s5 + $0xa0] sm:$0xff]
      %v5967 = vld [vmem:[%s5 + $0xa8] sm:$0xff]
      %v5968 = vld [vmem:[%s5 + $0xb0] sm:$0xff]
      %v5969 = vld [vmem:[%s5 + $0xb8] sm:$0xff]
      %v5970 = vld [vmem:[%s5 + $0xc0] sm:$0xff]
      %v5971 = vld [vmem:[%s5 + $0xc8] sm:$0xff]
      %v5972 = vld [vmem:[%s5 + $0xd0] sm:$0xff]
      %v5973 = vld [vmem:[%s5 + $0xd8] sm:$0xff]
      %v5974 = vld [vmem:[%s5 + $0xe0] sm:$0xff]
      %v5975 = vld [vmem:[%s5 + $0xe8] sm:$0xff]
      %v5976 = vld [vmem:[%s5 + $0xf0] sm:$0xff]
      %v5977 = vld [vmem:[%s5 + $0xf8] sm:$0xff]
      %v5978 = vld [vmem:[%s5 + $0x100] sm:$0xff]
      %v5979 = vld [vmem:[%s5 + $0x108] sm:$0xff]
      %v5980 = vld [vmem:[%s5 + $0x110] sm:$0xff]
      %v5981 = vld [vmem:[%s5 + $0x118] sm:$0xff]
      %v5982 = vld [vmem:[%s5 + $0x120] sm:$0xff]
      %v5983 = vld [vmem:[%s5 + $0x128] sm:$0xff]
      %v5984 = vld [vmem:[%s5 + $0x130] sm:$0xff]
      %v5985 = vld [vmem:[%s5 + $0x138] sm:$0xff]
      %v5986 = vld [vmem:[%s5 + $0x140] sm:$0xff]
      %v5987 = vld [vmem:[%s5 + $0x148] sm:$0xff]
      %v5988 = vld [vmem:[%s5 + $0x150] sm:$0xff]
      %v5989 = vld [vmem:[%s5 + $0x158] sm:$0xff]
      %v5990 = vld [vmem:[%s5 + $0x160] sm:$0xff]
      %v5991 = vld [vmem:[%s5 + $0x168] sm:$0xff]
      %v5992 = vld [vmem:[%s5 + $0x170] sm:$0xff]
      %v5993 = vld [vmem:[%s5 + $0x178] sm:$0xff]
      %5995 = vset.pattern.permute.xlu0 0
      %5996 = vperm.xlu0 %5995, %v5946
      %v5997 = vpop.permute.xlu0 %5996
      %6000 = vset.pattern.permute.xlu0 0
      %6001 = vperm.xlu0 %6000, %v5947
      %v6002 = vpop.permute.xlu0 %6001
      %6005 = vset.pattern.permute.xlu0 0
      %6006 = vperm.xlu0 %6005, %v5948
      %v6007 = vpop.permute.xlu0 %6006
      %6010 = vset.pattern.permute.xlu0 0
      %6011 = vperm.xlu0 %6010, %v5949
      %v6012 = vpop.permute.xlu0 %6011
      %6015 = vset.pattern.permute.xlu0 0
      %6016 = vperm.xlu0 %6015, %v5950
      %v6017 = vpop.permute.xlu0 %6016
      %6020 = vset.pattern.permute.xlu0 0
      %6021 = vperm.xlu0 %6020, %v5951
      %v6022 = vpop.permute.xlu0 %6021
      %6025 = vset.pattern.permute.xlu0 0
      %6026 = vperm.xlu0 %6025, %v5952
      %v6027 = vpop.permute.xlu0 %6026
      %6030 = vset.pattern.permute.xlu0 0
      %6031 = vperm.xlu0 %6030, %v5953
      %v6032 = vpop.permute.xlu0 %6031
      %6035 = vset.pattern.permute.xlu0 0
      %6036 = vperm.xlu0 %6035, %v5954
      %v6037 = vpop.permute.xlu0 %6036
      %6040 = vset.pattern.permute.xlu0 0
      %6041 = vperm.xlu0 %6040, %v5955
      %v6042 = vpop.permute.xlu0 %6041
      %6045 = vset.pattern.permute.xlu0 0
      %6046 = vperm.xlu0 %6045, %v5956
      %v6047 = vpop.permute.xlu0 %6046
      %6050 = vset.pattern.permute.xlu0 0
      %6051 = vperm.xlu0 %6050, %v5957
      %v6052 = vpop.permute.xlu0 %6051
      %6055 = vset.pattern.permute.xlu0 0
      %6056 = vperm.xlu0 %6055, %v5958
      %v6057 = vpop.permute.xlu0 %6056
      %6060 = vset.pattern.permute.xlu0 0
      %6061 = vperm.xlu0 %6060, %v5959
      %v6062 = vpop.permute.xlu0 %6061
      %6065 = vset.pattern.permute.xlu0 0
      %6066 = vperm.xlu0 %6065, %v5960
      %v6067 = vpop.permute.xlu0 %6066
      %6070 = vset.pattern.permute.xlu0 0
      %6071 = vperm.xlu0 %6070, %v5961
      %v6072 = vpop.permute.xlu0 %6071
      %6075 = vset.pattern.permute.xlu0 0
      %6076 = vperm.xlu0 %6075, %v5962
      %v6077 = vpop.permute.xlu0 %6076
      %6080 = vset.pattern.permute.xlu0 0
      %6081 = vperm.xlu0 %6080, %v5963
      %v6082 = vpop.permute.xlu0 %6081
      %6085 = vset.pattern.permute.xlu0 0
      %6086 = vperm.xlu0 %6085, %v5964
      %v6087 = vpop.permute.xlu0 %6086
      %6090 = vset.pattern.permute.xlu0 0
      %6091 = vperm.xlu0 %6090, %v5965
      %v6092 = vpop.permute.xlu0 %6091
      %6095 = vset.pattern.permute.xlu0 0
      %6096 = vperm.xlu0 %6095, %v5966
      %v6097 = vpop.permute.xlu0 %6096
      %6100 = vset.pattern.permute.xlu0 0
      %6101 = vperm.xlu0 %6100, %v5967
      %v6102 = vpop.permute.xlu0 %6101
      %6105 = vset.pattern.permute.xlu0 0
      %6106 = vperm.xlu0 %6105, %v5968
      %v6107 = vpop.permute.xlu0 %6106
      %6110 = vset.pattern.permute.xlu0 0
      %6111 = vperm.xlu0 %6110, %v5969
      %v6112 = vpop.permute.xlu0 %6111
      %6115 = vset.pattern.permute.xlu0 0
      %6116 = vperm.xlu0 %6115, %v5970
      %v6117 = vpop.permute.xlu0 %6116
      %6120 = vset.pattern.permute.xlu0 0
      %6121 = vperm.xlu0 %6120, %v5971
      %v6122 = vpop.permute.xlu0 %6121
      %6125 = vset.pattern.permute.xlu0 0
      %6126 = vperm.xlu0 %6125, %v5972
      %v6127 = vpop.permute.xlu0 %6126
      %6130 = vset.pattern.permute.xlu0 0
      %6131 = vperm.xlu0 %6130, %v5973
      %v6132 = vpop.permute.xlu0 %6131
      %6135 = vset.pattern.permute.xlu0 0
      %6136 = vperm.xlu0 %6135, %v5974
      %v6137 = vpop.permute.xlu0 %6136
      %6140 = vset.pattern.permute.xlu0 0
      %6141 = vperm.xlu0 %6140, %v5975
      %v6142 = vpop.permute.xlu0 %6141
      %6145 = vset.pattern.permute.xlu0 0
      %6146 = vperm.xlu0 %6145, %v5976
      %v6147 = vpop.permute.xlu0 %6146
      %6150 = vset.pattern.permute.xlu0 0
      %6151 = vperm.xlu0 %6150, %v5977
      %v6152 = vpop.permute.xlu0 %6151
      %6155 = vset.pattern.permute.xlu0 0
      %6156 = vperm.xlu0 %6155, %v5978
      %v6157 = vpop.permute.xlu0 %6156
      %6160 = vset.pattern.permute.xlu0 0
      %6161 = vperm.xlu0 %6160, %v5979
      %v6162 = vpop.permute.xlu0 %6161
      %6165 = vset.pattern.permute.xlu0 0
      %6166 = vperm.xlu0 %6165, %v5980
      %v6167 = vpop.permute.xlu0 %6166
      %6170 = vset.pattern.permute.xlu0 0
      %6171 = vperm.xlu0 %6170, %v5981
      %v6172 = vpop.permute.xlu0 %6171
      %6175 = vset.pattern.permute.xlu0 0
      %6176 = vperm.xlu0 %6175, %v5982
      %v6177 = vpop.permute.xlu0 %6176
      %6180 = vset.pattern.permute.xlu0 0
      %6181 = vperm.xlu0 %6180, %v5983
      %v6182 = vpop.permute.xlu0 %6181
      %6185 = vset.pattern.permute.xlu0 0
      %6186 = vperm.xlu0 %6185, %v5984
      %v6187 = vpop.permute.xlu0 %6186
      %6190 = vset.pattern.permute.xlu0 0
      %6191 = vperm.xlu0 %6190, %v5985
      %v6192 = vpop.permute.xlu0 %6191
      %6195 = vset.pattern.permute.xlu0 0
      %6196 = vperm.xlu0 %6195, %v5986
      %v6197 = vpop.permute.xlu0 %6196
      %6200 = vset.pattern.permute.xlu0 0
      %6201 = vperm.xlu0 %6200, %v5987
      %v6202 = vpop.permute.xlu0 %6201
      %6205 = vset.pattern.permute.xlu0 0
      %6206 = vperm.xlu0 %6205, %v5988
      %v6207 = vpop.permute.xlu0 %6206
      %6210 = vset.pattern.permute.xlu0 0
      %6211 = vperm.xlu0 %6210, %v5989
      %v6212 = vpop.permute.xlu0 %6211
      %6215 = vset.pattern.permute.xlu0 0
      %6216 = vperm.xlu0 %6215, %v5990
      %v6217 = vpop.permute.xlu0 %6216
      %6220 = vset.pattern.permute.xlu0 0
      %6221 = vperm.xlu0 %6220, %v5991
      %v6222 = vpop.permute.xlu0 %6221
      %6225 = vset.pattern.permute.xlu0 0
      %6226 = vperm.xlu0 %6225, %v5992
      %v6227 = vpop.permute.xlu0 %6226
      %6230 = vset.pattern.permute.xlu0 0
      %6231 = vperm.xlu0 %6230, %v5993
      %v6232 = vpop.permute.xlu0 %6231
      %v6234 = vmul.f32 %v5898, %v5997
      %v6235 = vmul.f32 %v5899, %v6002
      %v6236 = vmul.f32 %v5900, %v6007
      %v6237 = vmul.f32 %v5901, %v6012
      %v6238 = vmul.f32 %v5902, %v6017
      %v6239 = vmul.f32 %v5903, %v6022
      %v6240 = vmul.f32 %v5904, %v6027
      %v6241 = vmul.f32 %v5905, %v6032
      %v6242 = vmul.f32 %v5906, %v6037
      %v6243 = vmul.f32 %v5907, %v6042
      %v6244 = vmul.f32 %v5908, %v6047
      %v6245 = vmul.f32 %v5909, %v6052
      %v6246 = vmul.f32 %v5910, %v6057
      %v6247 = vmul.f32 %v5911, %v6062
      %v6248 = vmul.f32 %v5912, %v6067
      %v6249 = vmul.f32 %v5913, %v6072
      %v6250 = vmul.f32 %v5914, %v6077
      %v6251 = vmul.f32 %v5915, %v6082
      %v6252 = vmul.f32 %v5916, %v6087
      %v6253 = vmul.f32 %v5917, %v6092
      %v6254 = vmul.f32 %v5918, %v6097
      %v6255 = vmul.f32 %v5919, %v6102
      %v6256 = vmul.f32 %v5920, %v6107
      %v6257 = vmul.f32 %v5921, %v6112
      %v6258 = vmul.f32 %v5922, %v6117
      %v6259 = vmul.f32 %v5923, %v6122
      %v6260 = vmul.f32 %v5924, %v6127
      %v6261 = vmul.f32 %v5925, %v6132
      %v6262 = vmul.f32 %v5926, %v6137
      %v6263 = vmul.f32 %v5927, %v6142
      %v6264 = vmul.f32 %v5928, %v6147
      %v6265 = vmul.f32 %v5929, %v6152
      %v6266 = vmul.f32 %v5930, %v6157
      %v6267 = vmul.f32 %v5931, %v6162
      %v6268 = vmul.f32 %v5932, %v6167
      %v6269 = vmul.f32 %v5933, %v6172
      %v6270 = vmul.f32 %v5934, %v6177
      %v6271 = vmul.f32 %v5935, %v6182
      %v6272 = vmul.f32 %v5936, %v6187
      %v6273 = vmul.f32 %v5937, %v6192
      %v6274 = vmul.f32 %v5938, %v6197
      %v6275 = vmul.f32 %v5939, %v6202
      %v6276 = vmul.f32 %v5940, %v6207
      %v6277 = vmul.f32 %v5941, %v6212
      %v6278 = vmul.f32 %v5942, %v6217
      %v6279 = vmul.f32 %v5943, %v6222
      %v6280 = vmul.f32 %v5944, %v6227
      %v6281 = vmul.f32 %v5945, %v6232
      %v6282 = vpack.c.bf16 %v6235, %v6234
      %v6283 = vpack.c.bf16 %v6237, %v6236
      %v6284 = vpack.c.bf16 %v6239, %v6238
      %v6285 = vpack.c.bf16 %v6241, %v6240
      %v6286 = vpack.c.bf16 %v6243, %v6242
      %v6287 = vpack.c.bf16 %v6245, %v6244
      %v6288 = vpack.c.bf16 %v6247, %v6246
      %v6289 = vpack.c.bf16 %v6249, %v6248
      %v6290 = vpack.c.bf16 %v6251, %v6250
      %v6291 = vpack.c.bf16 %v6253, %v6252
      %v6292 = vpack.c.bf16 %v6255, %v6254
      %v6293 = vpack.c.bf16 %v6257, %v6256
      %v6294 = vpack.c.bf16 %v6259, %v6258
      %v6295 = vpack.c.bf16 %v6261, %v6260
      %v6296 = vpack.c.bf16 %v6263, %v6262
      %v6297 = vpack.c.bf16 %v6265, %v6264
      %v6298 = vpack.c.bf16 %v6267, %v6266
      %v6299 = vpack.c.bf16 %v6269, %v6268
      %v6300 = vpack.c.bf16 %v6271, %v6270
      %v6301 = vpack.c.bf16 %v6273, %v6272
      %v6302 = vpack.c.bf16 %v6275, %v6274
      %v6303 = vpack.c.bf16 %v6277, %v6276
      %v6304 = vpack.c.bf16 %v6279, %v6278
      %v6305 = vpack.c.bf16 %v6281, %v6280
      %v6330 = vunpack.c.l.b16 %v6282
      %v6331 = vunpack.c.h.b16 %v6282
      %v6332 = vunpack.c.l.b16 %v6283
      %v6333 = vunpack.c.h.b16 %v6283
      %v6334 = vunpack.c.l.b16 %v6284
      %v6335 = vunpack.c.h.b16 %v6284
      %v6336 = vunpack.c.l.b16 %v6285
      %v6337 = vunpack.c.h.b16 %v6285
      %v6338 = vunpack.c.l.b16 %v6286
      %v6339 = vunpack.c.h.b16 %v6286
      %v6340 = vunpack.c.l.b16 %v6287
      %v6341 = vunpack.c.h.b16 %v6287
      %v6342 = vunpack.c.l.b16 %v6288
      %v6343 = vunpack.c.h.b16 %v6288
      %v6344 = vunpack.c.l.b16 %v6289
      %v6345 = vunpack.c.h.b16 %v6289
      %v6346 = vunpack.c.l.b16 %v6290
      %v6347 = vunpack.c.h.b16 %v6290
      %v6348 = vunpack.c.l.b16 %v6291
      %v6349 = vunpack.c.h.b16 %v6291
      %v6350 = vunpack.c.l.b16 %v6292
      %v6351 = vunpack.c.h.b16 %v6292
      %v6352 = vunpack.c.l.b16 %v6293
      %v6353 = vunpack.c.h.b16 %v6293
      %v6354 = vunpack.c.l.b16 %v6294
      %v6355 = vunpack.c.h.b16 %v6294
      %v6356 = vunpack.c.l.b16 %v6295
      %v6357 = vunpack.c.h.b16 %v6295
      %v6358 = vunpack.c.l.b16 %v6296
      %v6359 = vunpack.c.h.b16 %v6296
      %v6360 = vunpack.c.l.b16 %v6297
      %v6361 = vunpack.c.h.b16 %v6297
      %v6362 = vunpack.c.l.b16 %v6298
      %v6363 = vunpack.c.h.b16 %v6298
      %v6364 = vunpack.c.l.b16 %v6299
      %v6365 = vunpack.c.h.b16 %v6299
      %v6366 = vunpack.c.l.b16 %v6300
      %v6367 = vunpack.c.h.b16 %v6300
      %v6368 = vunpack.c.l.b16 %v6301
      %v6369 = vunpack.c.h.b16 %v6301
      %v6370 = vunpack.c.l.b16 %v6302
      %v6371 = vunpack.c.h.b16 %v6302
      %v6372 = vunpack.c.l.b16 %v6303
      %v6373 = vunpack.c.h.b16 %v6303
      %v6374 = vunpack.c.l.b16 %v6304
      %v6375 = vunpack.c.h.b16 %v6304
      %v6376 = vunpack.c.l.b16 %v6305
      %v6377 = vunpack.c.h.b16 %v6305
      %v6378 = vpack.c.b16 %v6330, %v6330
      %v6379 = vpack.c.b16 %v6331, %v6331
      %v6380 = vpack.c.b16 %v6332, %v6332
      %v6381 = vpack.c.b16 %v6333, %v6333
      %v6382 = vpack.c.b16 %v6334, %v6334
      %v6383 = vpack.c.b16 %v6335, %v6335
      %v6384 = vpack.c.b16 %v6336, %v6336
      %v6385 = vpack.c.b16 %v6337, %v6337
      %v6386 = vpack.c.b16 %v6338, %v6338
      %v6387 = vpack.c.b16 %v6339, %v6339
      %v6388 = vpack.c.b16 %v6340, %v6340
      %v6389 = vpack.c.b16 %v6341, %v6341
      %v6390 = vpack.c.b16 %v6342, %v6342
      %v6391 = vpack.c.b16 %v6343, %v6343
      %v6392 = vpack.c.b16 %v6344, %v6344
      %v6393 = vpack.c.b16 %v6345, %v6345
      %v6394 = vpack.c.b16 %v6346, %v6346
      %v6395 = vpack.c.b16 %v6347, %v6347
      %v6396 = vpack.c.b16 %v6348, %v6348
      %v6397 = vpack.c.b16 %v6349, %v6349
      %v6398 = vpack.c.b16 %v6350, %v6350
      %v6399 = vpack.c.b16 %v6351, %v6351
      %v6400 = vpack.c.b16 %v6352, %v6352
      %v6401 = vpack.c.b16 %v6353, %v6353
      %v6402 = vpack.c.b16 %v6354, %v6354
      %v6403 = vpack.c.b16 %v6355, %v6355
      %v6404 = vpack.c.b16 %v6356, %v6356
      %v6405 = vpack.c.b16 %v6357, %v6357
      %v6406 = vpack.c.b16 %v6358, %v6358
      %v6407 = vpack.c.b16 %v6359, %v6359
      %v6408 = vpack.c.b16 %v6360, %v6360
      %v6409 = vpack.c.b16 %v6361, %v6361
      %v6410 = vpack.c.b16 %v6362, %v6362
      %v6411 = vpack.c.b16 %v6363, %v6363
      %v6412 = vpack.c.b16 %v6364, %v6364
      %v6413 = vpack.c.b16 %v6365, %v6365
      %v6414 = vpack.c.b16 %v6366, %v6366
      %v6415 = vpack.c.b16 %v6367, %v6367
      %v6416 = vpack.c.b16 %v6368, %v6368
      %v6417 = vpack.c.b16 %v6369, %v6369
      %v6418 = vpack.c.b16 %v6370, %v6370
      %v6419 = vpack.c.b16 %v6371, %v6371
      %v6420 = vpack.c.b16 %v6372, %v6372
      %v6421 = vpack.c.b16 %v6373, %v6373
      %v6422 = vpack.c.b16 %v6374, %v6374
      %v6423 = vpack.c.b16 %v6375, %v6375
      %v6424 = vpack.c.b16 %v6376, %v6376
      %v6425 = vpack.c.b16 %v6377, %v6377
      %vm6474 = vcmask 125952
      %6475 = vst.msk [vmem:[%s417] sm:$0xf] %vm6474, %v6378
      %6476 = vst.msk [vmem:[%s417 + $0x4] sm:$0xf] %vm6474, %v6379
      %6477 = vst.msk [vmem:[%s417 + $0x8] sm:$0xf] %vm6474, %v6380
      %6478 = vst.msk [vmem:[%s417 + $0xc] sm:$0xf] %vm6474, %v6381
      %6479 = vst.msk [vmem:[%s417 + $0x10] sm:$0xf] %vm6474, %v6382
      %6480 = vst.msk [vmem:[%s417 + $0x14] sm:$0xf] %vm6474, %v6383
      %6481 = vst.msk [vmem:[%s417 + $0x18] sm:$0xf] %vm6474, %v6384
      %6482 = vst.msk [vmem:[%s417 + $0x1c] sm:$0xf] %vm6474, %v6385
      %6483 = vst.msk [vmem:[%s417 + $0x20] sm:$0xf] %vm6474, %v6386
      %6484 = vst.msk [vmem:[%s417 + $0x24] sm:$0xf] %vm6474, %v6387
      %6485 = vst.msk [vmem:[%s417 + $0x28] sm:$0xf] %vm6474, %v6388
      %6486 = vst.msk [vmem:[%s417 + $0x2c] sm:$0xf] %vm6474, %v6389
      %6487 = vst.msk [vmem:[%s417 + $0x30] sm:$0xf] %vm6474, %v6390
      %6488 = vst.msk [vmem:[%s417 + $0x34] sm:$0xf] %vm6474, %v6391
      %6489 = vst.msk [vmem:[%s417 + $0x38] sm:$0xf] %vm6474, %v6392
      %6490 = vst.msk [vmem:[%s417 + $0x3c] sm:$0xf] %vm6474, %v6393
      %6491 = vst.msk [vmem:[%s417 + $0x40] sm:$0xf] %vm6474, %v6394
      %6492 = vst.msk [vmem:[%s417 + $0x44] sm:$0xf] %vm6474, %v6395
      %6493 = vst.msk [vmem:[%s417 + $0x48] sm:$0xf] %vm6474, %v6396
      %6494 = vst.msk [vmem:[%s417 + $0x4c] sm:$0xf] %vm6474, %v6397
      %6495 = vst.msk [vmem:[%s417 + $0x50] sm:$0xf] %vm6474, %v6398
      %6496 = vst.msk [vmem:[%s417 + $0x54] sm:$0xf] %vm6474, %v6399
      %6497 = vst.msk [vmem:[%s417 + $0x58] sm:$0xf] %vm6474, %v6400
      %6498 = vst.msk [vmem:[%s417 + $0x5c] sm:$0xf] %vm6474, %v6401
      %6499 = vst.msk [vmem:[%s417 + $0x60] sm:$0xf] %vm6474, %v6402
      %6500 = vst.msk [vmem:[%s417 + $0x64] sm:$0xf] %vm6474, %v6403
      %6501 = vst.msk [vmem:[%s417 + $0x68] sm:$0xf] %vm6474, %v6404
      %6502 = vst.msk [vmem:[%s417 + $0x6c] sm:$0xf] %vm6474, %v6405
      %6503 = vst.msk [vmem:[%s417 + $0x70] sm:$0xf] %vm6474, %v6406
      %6504 = vst.msk [vmem:[%s417 + $0x74] sm:$0xf] %vm6474, %v6407
      %6505 = vst.msk [vmem:[%s417 + $0x78] sm:$0xf] %vm6474, %v6408
      %6506 = vst.msk [vmem:[%s417 + $0x7c] sm:$0xf] %vm6474, %v6409
      %6507 = vst.msk [vmem:[%s417 + $0x80] sm:$0xf] %vm6474, %v6410
      %6508 = vst.msk [vmem:[%s417 + $0x84] sm:$0xf] %vm6474, %v6411
      %6509 = vst.msk [vmem:[%s417 + $0x88] sm:$0xf] %vm6474, %v6412
      %6510 = vst.msk [vmem:[%s417 + $0x8c] sm:$0xf] %vm6474, %v6413
      %6511 = vst.msk [vmem:[%s417 + $0x90] sm:$0xf] %vm6474, %v6414
      %6512 = vst.msk [vmem:[%s417 + $0x94] sm:$0xf] %vm6474, %v6415
      %6513 = vst.msk [vmem:[%s417 + $0x98] sm:$0xf] %vm6474, %v6416
      %6514 = vst.msk [vmem:[%s417 + $0x9c] sm:$0xf] %vm6474, %v6417
      %6515 = vst.msk [vmem:[%s417 + $0xa0] sm:$0xf] %vm6474, %v6418
      %6516 = vst.msk [vmem:[%s417 + $0xa4] sm:$0xf] %vm6474, %v6419
      %6517 = vst.msk [vmem:[%s417 + $0xa8] sm:$0xf] %vm6474, %v6420
      %6518 = vst.msk [vmem:[%s417 + $0xac] sm:$0xf] %vm6474, %v6421
      %6519 = vst.msk [vmem:[%s417 + $0xb0] sm:$0xf] %vm6474, %v6422
      %6520 = vst.msk [vmem:[%s417 + $0xb4] sm:$0xf] %vm6474, %v6423
      %6521 = vst.msk [vmem:[%s417 + $0xb8] sm:$0xf] %vm6474, %v6424
      %6522 = vst.msk [vmem:[%s417 + $0xbc] sm:$0xf] %vm6474, %v6425
      %s6523 = smul.u32 48, %s22
      %p6524 = scmp.lt.s32.totalorder %s21, 1
      %s6525 = scalar_select %p6524, %s21, 1
      %p6526 = scmp.lt.s32.totalorder %s6523, 47
      %s6527 = scalar_select %p6526, %s6523, 47
      %s6528 = smul.addr %s6525, 48
      %s6529 = sadd.s32 %s6527, %s6528
      %s6530 = smul.addr %s6529, 4
      %s6531 = scalar_lea.vmem %s6, %s6530
      // Predicated region
      $region49: #{tpu_custom_call.1} parent=43 // pred_check
        %p6532 = pneg %p212
      $region50: #{tpu_custom_call.1} parent=43 // pred_check_branch
        %6534 = sbr.rel (%p6532) target = $region52
      $region51: #{tpu_custom_call.1} parent=43 // pred_region
        %s6535 = smul.u32 48, %s22
      $region52: #{tpu_custom_call.1} parent=43 // pred_fallthru
        _
    $region44: #{tpu_custom_call.1} parent=5 // pred_fallthru
      _
    %p6536 = scmp.le.s32.totalorder 2, %s12
    // Predicated region
    $region53: #{tpu_custom_call.1} parent=5 // pred_check
      %p6537 = pneg %p6536
    $region54: #{tpu_custom_call.1} parent=5 // pred_check_branch
      %6539 = sbr.rel (%p6537) target = $region56
    $region55: #{tpu_custom_call.1} parent=5 // pred_region
      %s6540 = ssub.s32 %s12, 2
      // Predicated region
      $region57: #{tpu_custom_call.1} parent=55 // pred_check
        %p6541 = pneg %p218
      $region58: #{tpu_custom_call.1} parent=55 // pred_check_branch
        %6543 = sbr.rel (%p6541) target = $region60
      $region59: #{tpu_custom_call.1} parent=55 // pred_region
        %s6544 = smul.u32 48, %s24
        %p6545 = scmp.lt.s32.totalorder %s23, 1
        %s6546 = scalar_select %p6545, %s23, 1
        %p6547 = scmp.lt.s32.totalorder %s6544, 47
        %s6548 = scalar_select %p6547, %s6544, 47
        %s6549 = smul.addr %s6546, 48
        %s6550 = sadd.s32 %s6548, %s6549
        %s6551 = smul.addr %s6550, 4
        %s6552 = scalar_lea.vmem %s6, %s6551
      $region60: #{tpu_custom_call.1} parent=55 // pred_fallthru
        _
    $region56: #{tpu_custom_call.1} parent=5 // pred_fallthru
      _
  $region6: #{tpu_custom_call.1} parent=0 // loop_footer
    %s16 = sadd.s32 1, %s12
  $region7: #{tpu_custom_call.1} parent=0 // loop_footer_branch
    %11 = sbr.rel target = $region3
  $region8: #{tpu_custom_call.1} parent=0 // loop_exit
    _

</llo_original>
